<compile_context>
chip_gen: v6e
topology: v6e:2x2x1
jax: 0.10.0
libtpu: 0.0.40
codegen_flags: <defaults>
</compile_context>

<pallas_src>
import numpy as np

import jax
import jax.numpy as jnp
from jax.experimental import pallas as pl
from jax.experimental.pallas import tpu as pltpu

BITS = 4
QN = float(-(2 ** (BITS - 1)))                    # -8.0 (signed)
QP = float(2 ** (BITS - 1) - 1)                   #  7.0
SQRT_QP = float(np.sqrt(2 ** (BITS - 1) - 1))     # sqrt(7), folded at trace time

_VMEM = pl.BlockSpec(memory_space=pltpu.MemorySpace.VMEM)


# ------------------------------ fused kernel --------------------------------

def _layer_scale(total_sum, count):
    """QLayer.initialize_s: s = 2*mean(x)/sqrt(p); also return 1/s."""
    s = 2.0 * (total_sum / float(count)) / SQRT_QP
    return s, 1.0 / s


def _fake_quant(x, s, inv_s):
    """QLayer.clip: round(clip(x/s, n, p)) * s (divide folded into a multiply)."""
    return jnp.round(jnp.clip(x * inv_s, QN, QP)) * s


def lenet_kernel(x_ref, k1_ref, b1_ref, re_ref, ro_ref, c1e_ref, c1o_ref,
                 k2_ref, b2_ref, c2e_ref, c2o_ref,
                 wfc1_ref, bfc1_ref, wfc2_ref, bfc2_ref, wfc3_ref, bfc3_ref,
                 out_ref):
    B = x_ref.shape[0]
    dot = lambda a, b: jnp.dot(a, b, preferred_element_type=jnp.float32)

    # ---------- QConv2d(1, 6, 5) + ReLU : output [24, 24*6] per image --------
    xs = [x_ref[b] for b in range(B)]                           # [28, 28]
    s1, i1 = _layer_scale(sum(jnp.sum(v) for v in xs), B * 28 * 28)
    b1 = b1_ref[...]
    y1 = []
    for b in range(B):
        xq = _fake_quant(xs[b], s1, i1)
        acc = b1 + dot(xq[0:24, :], k1_ref[0])
        for i in range(1, 5):
            acc = acc + dot(xq[i:i + 24, :], k1_ref[i])
        y1.append(jnp.maximum(acc, 0.0))                        # [24, 144]

    # ---------- MaxPool2d(2) : output [12, 12*6] -----------------------------
    re, ro = re_ref[...], ro_ref[...]
    c1e, c1o = c1e_ref[...], c1o_ref[...]
    p1 = []
    for b in range(B):
        hp = jnp.maximum(dot(re, y1[b]), dot(ro, y1[b]))        # [12, 144]
        p1.append(jnp.maximum(dot(hp, c1e), dot(hp, c1o)))      # [12, 72]

    # ---------- QConv2d(6, 16, 5) + ReLU : output [8, 8*16] ------------------
    s2, i2 = _layer_scale(sum(jnp.sum(v) for v in p1), B * 6 * 12 * 12)
    b2 = b2_ref[...]
    y2 = []
    for b in range(B):
        pq = _fake_quant(p1[b], s2, i2)
        acc = b2 + dot(pq[0:8, :], k2_ref[0])
        for i in range(1, 5):
            acc = acc + dot(pq[i:i + 8, :], k2_ref[i])
        y2.append(jnp.maximum(acc, 0.0))                        # [8, 128]

    # ---------- MaxPool2d(2) : output [4, 4*16] ------------------------------
    re2, ro2 = re[:4, :8], ro[:4, :8]
    c2e, c2o = c2e_ref[...], c2o_ref[...]
    p2 = []
    for b in range(B):
        hp = jnp.maximum(dot(re2, y2[b]), dot(ro2, y2[b]))      # [4, 128]
        p2.append(jnp.maximum(dot(hp, c2e), dot(hp, c2o)))      # [4, 64]

    # ---------- QLinear(256, 120) + ReLU (lane-padded to 128) ----------------
    s3, i3 = _layer_scale(sum(jnp.sum(v) for v in p2), B * 256)
    bfc1 = bfc1_ref[...]
    a1 = []
    for b in range(B):
        pq = _fake_quant(p2[b], s3, i3)                         # [4, 64]
        acc = bfc1
        for ph in range(4):
            acc = acc + dot(pq[ph:ph + 1, :], wfc1_ref[ph])     # [1, 128]
        a1.append(jnp.maximum(acc, 0.0))

    # ---------- QLinear(120, 84) + ReLU ---------------------------------------
    s4, i4 = _layer_scale(sum(jnp.sum(v) for v in a1), B * 120)
    wfc2, bfc2 = wfc2_ref[...], bfc2_ref[...]
    a2 = [jnp.maximum(dot(_fake_quant(v, s4, i4), wfc2) + bfc2, 0.0) for v in a1]

    # ---------- QLinear(84, 10) + ReLU (forward() applies relu5) --------------
    s5, i5 = _layer_scale(sum(jnp.sum(v) for v in a2), B * 84)
    wfc3, bfc3 = wfc3_ref[...], bfc3_ref[...]
    for b in range(B):
        y = jnp.maximum(dot(_fake_quant(a2[b], s5, i5), wfc3) + bfc3, 0.0)
        out_ref[pl.ds(b, 1), :] = y                              # [1, 128]


# ------------------------ one-time weight re-layout --------------------------

def prepare_inputs(params):
    """Pre-lay-out all parameters for the fused kernel (run once, off hot path)."""
    f32 = np.float32
    w1 = params["conv1_w"]            # [6, 1, 5, 5]
    w2 = params["conv2_w"]            # [16, 6, 5, 5]

    # Banded "weight-side im2col": conv1 output lane = ow*6 + oc.
    sel1 = np.zeros((24, 5, 28), f32)
    for ow in range(24):
        for j in range(5):
            sel1[ow, j, ow + j] = 1.0
    k1 = jnp.einsum("oij,ajw->iwao", w1[:, 0], sel1).reshape(5, 28, 24 * 6)

    # conv2: input lane = w*6 + ic, output lane = ow*16 + oc.
    sel2 = np.zeros((8, 5, 12), f32)
    for ow in range(8):
        for j in range(5):
            sel2[ow, j, ow + j] = 1.0
    k2 = jnp.einsum("ocij,ajw->iwcao", w2, sel2).reshape(5, 12 * 6, 8 * 16)

    b1 = jnp.tile(params["conv1_b"], 24).reshape(1, 144)   # lane = ow*6 + oc
    b2 = jnp.tile(params["conv2_b"], 8).reshape(1, 128)    # lane = ow*16 + oc

    # 0/1 selection matrices realizing the 2x2 max-pool picks on the MXU.
    re = np.zeros((12, 24), f32)
    ro = np.zeros((12, 24), f32)
    for ph in range(12):
        re[ph, 2 * ph] = 1.0
        ro[ph, 2 * ph + 1] = 1.0
    c1e = np.zeros((144, 72), f32)
    c1o = np.zeros((144, 72), f32)
    for pw in range(12):
        for oc in range(6):
            c1e[(2 * pw) * 6 + oc, pw * 6 + oc] = 1.0
            c1o[(2 * pw + 1) * 6 + oc, pw * 6 + oc] = 1.0
    c2e = np.zeros((128, 64), f32)
    c2o = np.zeros((128, 64), f32)
    for pw in range(4):
        for oc in range(16):
            c2e[(2 * pw) * 16 + oc, pw * 16 + oc] = 1.0
            c2o[(2 * pw + 1) * 16 + oc, pw * 16 + oc] = 1.0

    # FC weights: [in, out], flatten order permuted to (ph, pw*16+oc),
    # zero-padded to 128 output lanes (padding is exact: zero rows/cols/bias).
    wfc1 = params["fc1_w"].reshape(120, 16, 4, 4)           # [n, oc, ph, pw]
    wfc1 = jnp.transpose(wfc1, (2, 3, 1, 0)).reshape(4, 64, 120)
    wfc1 = jnp.pad(wfc1, ((0, 0), (0, 0), (0, 8)))          # [4, 64, 128]
    bfc1 = jnp.pad(params["fc1_b"], (0, 8)).reshape(1, 128)

    wfc2 = jnp.pad(params["fc2_w"].T, ((0, 8), (0, 44)))    # [128, 128]
    bfc2 = jnp.pad(params["fc2_b"], (0, 44)).reshape(1, 128)

    wfc3 = jnp.pad(params["fc3_w"].T, ((0, 44), (0, 118)))  # [128, 128]
    bfc3 = jnp.pad(params["fc3_b"], (0, 118)).reshape(1, 128)

    cast = lambda a: jnp.asarray(a, jnp.float32)
    return {
        "k1": cast(k1), "b1": cast(b1), "re": cast(re), "ro": cast(ro),
        "c1e": cast(c1e), "c1o": cast(c1o),
        "k2": cast(k2), "b2": cast(b2), "c2e": cast(c2e), "c2o": cast(c2o),
        "wfc1": cast(wfc1), "bfc1": cast(bfc1),
        "wfc2": cast(wfc2), "bfc2": cast(bfc2),
        "wfc3": cast(wfc3), "bfc3": cast(bfc3),
    }


# ---------------------------------- model ------------------------------------

def model_forward(prepped, x_nchw):
    B, C, H, W = x_nchw.shape
    assert C == 1 and H == 28 and W == 28, "LeNet geometry implied by the module"
    x = x_nchw.reshape(B, H, W).astype(jnp.float32)
    out = pl.pallas_call(
        lenet_kernel,
        out_shape=jax.ShapeDtypeStruct((B, 128), jnp.float32),
        in_specs=[_VMEM] * 17,
        out_specs=_VMEM,
    )(x, prepped["k1"], prepped["b1"], prepped["re"], prepped["ro"],
      prepped["c1e"], prepped["c1o"], prepped["k2"], prepped["b2"],
      prepped["c2e"], prepped["c2o"], prepped["wfc1"], prepped["bfc1"],
      prepped["wfc2"], prepped["bfc2"], prepped["wfc3"], prepped["bfc3"])
    return out[:, :10]


def init_params(key):
    ks = jax.random.split(key, 5)

    def conv_w(k, oc, ic, ksz):
        return jax.random.normal(k, (oc, ic, ksz, ksz), jnp.float32) * 0.1

    def lin_w(k, o, i):
        return jax.random.normal(k, (o, i), jnp.float32) * 0.1

    return {
        "conv1_w": conv_w(ks[0], 6, 1, 5),   "conv1_b": jnp.full((6,),   0.05, jnp.float32),
        "conv2_w": conv_w(ks[1], 16, 6, 5),  "conv2_b": jnp.full((16,),  0.05, jnp.float32),
        "fc1_w":   lin_w(ks[2], 120, 256),   "fc1_b":   jnp.full((120,), 0.05, jnp.float32),
        "fc2_w":   lin_w(ks[3], 84, 120),    "fc2_b":   jnp.full((84,),  0.05, jnp.float32),
        "fc3_w":   lin_w(ks[4], 10, 84),     "fc3_b":   jnp.full((10,),  0.05, jnp.float32),
    }


if __name__ == "__main__":
    key = jax.random.PRNGKey(0)
    k_x, k_p = jax.random.split(key)
    # LeNet geometry implied by the module: 1x28x28 input -> 256 flattened features.
    x = jax.random.uniform(k_x, (2, 1, 28, 28), jnp.float32)
    params = init_params(k_p)

    prepped = prepare_inputs(params)      # one-time weight re-layout
    fwd = jax.jit(model_forward)
    out = fwd(prepped, x)
    jax.block_until_ready(out)
    assert out.shape == (2, 10), out.shape
    assert bool(jnp.all(jnp.isfinite(out)))
    print("KERNEL_OK")
</pallas_src>

<mosaic_0001>
module attributes {stable_mosaic.version = 11 : i64} {
  func.func @lenet_kernel(%arg0: memref<2x28x28xf32, #tpu.memory_space<vmem>>, %arg1: memref<5x28x144xf32, #tpu.memory_space<vmem>>, %arg2: memref<1x144xf32, #tpu.memory_space<vmem>>, %arg3: memref<12x24xf32, #tpu.memory_space<vmem>>, %arg4: memref<12x24xf32, #tpu.memory_space<vmem>>, %arg5: memref<144x72xf32, #tpu.memory_space<vmem>>, %arg6: memref<144x72xf32, #tpu.memory_space<vmem>>, %arg7: memref<5x72x128xf32, #tpu.memory_space<vmem>>, %arg8: memref<1x128xf32, #tpu.memory_space<vmem>>, %arg9: memref<128x64xf32, #tpu.memory_space<vmem>>, %arg10: memref<128x64xf32, #tpu.memory_space<vmem>>, %arg11: memref<4x64x128xf32, #tpu.memory_space<vmem>>, %arg12: memref<1x128xf32, #tpu.memory_space<vmem>>, %arg13: memref<128x128xf32, #tpu.memory_space<vmem>>, %arg14: memref<1x128xf32, #tpu.memory_space<vmem>>, %arg15: memref<128x128xf32, #tpu.memory_space<vmem>>, %arg16: memref<1x128xf32, #tpu.memory_space<vmem>>, %arg17: memref<2x128xf32, #tpu.memory_space<vmem>>) attributes {dimension_semantics = [], scalar_prefetch = 0 : i64, scratch_operands = 0 : i64, tpu.core_type = #tpu.core_type<tc>} {
    %c0 = arith.constant 0 : index
    %c0_0 = arith.constant 0 : index
    %c0_1 = arith.constant 0 : index
    %0 = vector.load %arg0[%c0, %c0_0, %c0_1] : memref<2x28x28xf32, #tpu.memory_space<vmem>>, vector<1x28x28xf32>
    %1 = vector.shape_cast %0 : vector<1x28x28xf32> to vector<28x28xf32>
    %c1 = arith.constant 1 : index
    %c0_2 = arith.constant 0 : index
    %c0_3 = arith.constant 0 : index
    %2 = vector.load %arg0[%c1, %c0_2, %c0_3] : memref<2x28x28xf32, #tpu.memory_space<vmem>>, vector<1x28x28xf32>
    %3 = vector.shape_cast %2 : vector<1x28x28xf32> to vector<28x28xf32>
    %4 = vector.shape_cast %1 : vector<28x28xf32> to vector<1x28x28xf32>
    %cst = arith.constant dense<0.000000e+00> : vector<1xf32>
    %5 = vector.multi_reduction <add>, %4, %cst [1, 2] : vector<1x28x28xf32> to vector<1xf32>
    %6 = vector.shape_cast %5 : vector<1xf32> to vector<1x1x1xf32>
    %7 = vector.extract %6[0, 0, 0] : f32 from vector<1x1x1xf32>
    %cst_4 = arith.constant 0.000000e+00 : f32
    %8 = arith.addf %cst_4, %7 : f32
    %9 = vector.shape_cast %3 : vector<28x28xf32> to vector<1x28x28xf32>
    %cst_5 = arith.constant dense<0.000000e+00> : vector<1xf32>
    %10 = vector.multi_reduction <add>, %9, %cst_5 [1, 2] : vector<1x28x28xf32> to vector<1xf32>
    %11 = vector.shape_cast %10 : vector<1xf32> to vector<1x1x1xf32>
    %12 = vector.extract %11[0, 0, 0] : f32 from vector<1x1x1xf32>
    %13 = arith.addf %8, %12 : f32
    %cst_6 = arith.constant 1.568000e+03 : f32
    %14 = arith.divf %13, %cst_6 : f32
    %cst_7 = arith.constant 2.000000e+00 : f32
    %15 = arith.mulf %cst_7, %14 : f32
    %cst_8 = arith.constant 2.64575124 : f32
    %16 = arith.divf %15, %cst_8 : f32
    %cst_9 = arith.constant 1.000000e+00 : f32
    %17 = arith.divf %cst_9, %16 : f32
    %c0_10 = arith.constant 0 : index
    %c0_11 = arith.constant 0 : index
    %18 = vector.load %arg2[%c0_10, %c0_11] : memref<1x144xf32, #tpu.memory_space<vmem>>, vector<1x144xf32>
    %19 = vector.broadcast %17 : f32 to vector<28x28xf32>
    %20 = arith.mulf %1, %19 : vector<28x28xf32>
    %cst_12 = arith.constant -8.000000e+00 : f32
    %cst_13 = arith.constant 7.000000e+00 : f32
    %21 = vector.broadcast %cst_12 : f32 to vector<28x28xf32>
    %22 = arith.maximumf %21, %20 : vector<28x28xf32>
    %23 = vector.broadcast %cst_13 : f32 to vector<28x28xf32>
    %24 = arith.minimumf %23, %22 : vector<28x28xf32>
    %25 = math.roundeven %24 : vector<28x28xf32>
    %26 = vector.broadcast %16 : f32 to vector<28x28xf32>
    %27 = arith.mulf %25, %26 : vector<28x28xf32>
    %28 = vector.extract_strided_slice %27 {offsets = [0, 0], sizes = [24, 28], strides = [1, 1]} : vector<28x28xf32> to vector<24x28xf32>
    %c0_14 = arith.constant 0 : index
    %c0_15 = arith.constant 0 : index
    %c0_16 = arith.constant 0 : index
    %29 = vector.load %arg1[%c0_14, %c0_15, %c0_16] : memref<5x28x144xf32, #tpu.memory_space<vmem>>, vector<1x28x144xf32>
    %30 = vector.shape_cast %29 : vector<1x28x144xf32> to vector<28x144xf32>
    %cst_17 = arith.constant dense<0.000000e+00> : vector<24x144xf32>
    %31 = tpu.matmul %28, %30, %cst_17 {dimension_numbers = #tpu.dot_dimension_numbers<[1], [0], [0], [1], [0, 0, 1, 1], [], []>} : vector<24x28xf32>, vector<28x144xf32>, vector<24x144xf32> -> vector<24x144xf32>
    %32 = vector.broadcast %18 : vector<1x144xf32> to vector<24x144xf32>
    %33 = arith.addf %32, %31 : vector<24x144xf32>
    %34 = vector.extract_strided_slice %27 {offsets = [1, 0], sizes = [24, 28], strides = [1, 1]} : vector<28x28xf32> to vector<24x28xf32>
    %c1_18 = arith.constant 1 : index
    %c0_19 = arith.constant 0 : index
    %c0_20 = arith.constant 0 : index
    %35 = vector.load %arg1[%c1_18, %c0_19, %c0_20] : memref<5x28x144xf32, #tpu.memory_space<vmem>>, vector<1x28x144xf32>
    %36 = vector.shape_cast %35 : vector<1x28x144xf32> to vector<28x144xf32>
    %cst_21 = arith.constant dense<0.000000e+00> : vector<24x144xf32>
    %37 = tpu.matmul %34, %36, %cst_21 {dimension_numbers = #tpu.dot_dimension_numbers<[1], [0], [0], [1], [0, 0, 1, 1], [], []>} : vector<24x28xf32>, vector<28x144xf32>, vector<24x144xf32> -> vector<24x144xf32>
    %38 = arith.addf %33, %37 : vector<24x144xf32>
    %39 = vector.extract_strided_slice %27 {offsets = [2, 0], sizes = [24, 28], strides = [1, 1]} : vector<28x28xf32> to vector<24x28xf32>
    %c2 = arith.constant 2 : index
    %c0_22 = arith.constant 0 : index
    %c0_23 = arith.constant 0 : index
    %40 = vector.load %arg1[%c2, %c0_22, %c0_23] : memref<5x28x144xf32, #tpu.memory_space<vmem>>, vector<1x28x144xf32>
    %41 = vector.shape_cast %40 : vector<1x28x144xf32> to vector<28x144xf32>
    %cst_24 = arith.constant dense<0.000000e+00> : vector<24x144xf32>
    %42 = tpu.matmul %39, %41, %cst_24 {dimension_numbers = #tpu.dot_dimension_numbers<[1], [0], [0], [1], [0, 0, 1, 1], [], []>} : vector<24x28xf32>, vector<28x144xf32>, vector<24x144xf32> -> vector<24x144xf32>
    %43 = arith.addf %38, %42 : vector<24x144xf32>
    %44 = vector.extract_strided_slice %27 {offsets = [3, 0], sizes = [24, 28], strides = [1, 1]} : vector<28x28xf32> to vector<24x28xf32>
    %c3 = arith.constant 3 : index
    %c0_25 = arith.constant 0 : index
    %c0_26 = arith.constant 0 : index
    %45 = vector.load %arg1[%c3, %c0_25, %c0_26] : memref<5x28x144xf32, #tpu.memory_space<vmem>>, vector<1x28x144xf32>
    %46 = vector.shape_cast %45 : vector<1x28x144xf32> to vector<28x144xf32>
    %cst_27 = arith.constant dense<0.000000e+00> : vector<24x144xf32>
    %47 = tpu.matmul %44, %46, %cst_27 {dimension_numbers = #tpu.dot_dimension_numbers<[1], [0], [0], [1], [0, 0, 1, 1], [], []>} : vector<24x28xf32>, vector<28x144xf32>, vector<24x144xf32> -> vector<24x144xf32>
    %48 = arith.addf %43, %47 : vector<24x144xf32>
    %49 = vector.extract_strided_slice %27 {offsets = [4, 0], sizes = [24, 28], strides = [1, 1]} : vector<28x28xf32> to vector<24x28xf32>
    %c4 = arith.constant 4 : index
    %c0_28 = arith.constant 0 : index
    %c0_29 = arith.constant 0 : index
    %50 = vector.load %arg1[%c4, %c0_28, %c0_29] : memref<5x28x144xf32, #tpu.memory_space<vmem>>, vector<1x28x144xf32>
    %51 = vector.shape_cast %50 : vector<1x28x144xf32> to vector<28x144xf32>
    %cst_30 = arith.constant dense<0.000000e+00> : vector<24x144xf32>
    %52 = tpu.matmul %49, %51, %cst_30 {dimension_numbers = #tpu.dot_dimension_numbers<[1], [0], [0], [1], [0, 0, 1, 1], [], []>} : vector<24x28xf32>, vector<28x144xf32>, vector<24x144xf32> -> vector<24x144xf32>
    %53 = arith.addf %48, %52 : vector<24x144xf32>
    %cst_31 = arith.constant 0.000000e+00 : f32
    %54 = vector.broadcast %cst_31 : f32 to vector<24x144xf32>
    %55 = arith.maximumf %53, %54 : vector<24x144xf32>
    %56 = vector.broadcast %17 : f32 to vector<28x28xf32>
    %57 = arith.mulf %3, %56 : vector<28x28xf32>
    %cst_32 = arith.constant -8.000000e+00 : f32
    %cst_33 = arith.constant 7.000000e+00 : f32
    %58 = vector.broadcast %cst_32 : f32 to vector<28x28xf32>
    %59 = arith.maximumf %58, %57 : vector<28x28xf32>
    %60 = vector.broadcast %cst_33 : f32 to vector<28x28xf32>
    %61 = arith.minimumf %60, %59 : vector<28x28xf32>
    %62 = math.roundeven %61 : vector<28x28xf32>
    %63 = vector.broadcast %16 : f32 to vector<28x28xf32>
    %64 = arith.mulf %62, %63 : vector<28x28xf32>
    %65 = vector.extract_strided_slice %64 {offsets = [0, 0], sizes = [24, 28], strides = [1, 1]} : vector<28x28xf32> to vector<24x28xf32>
    %c0_34 = arith.constant 0 : index
    %c0_35 = arith.constant 0 : index
    %c0_36 = arith.constant 0 : index
    %66 = vector.load %arg1[%c0_34, %c0_35, %c0_36] : memref<5x28x144xf32, #tpu.memory_space<vmem>>, vector<1x28x144xf32>
    %67 = vector.shape_cast %66 : vector<1x28x144xf32> to vector<28x144xf32>
    %cst_37 = arith.constant dense<0.000000e+00> : vector<24x144xf32>
    %68 = tpu.matmul %65, %67, %cst_37 {dimension_numbers = #tpu.dot_dimension_numbers<[1], [0], [0], [1], [0, 0, 1, 1], [], []>} : vector<24x28xf32>, vector<28x144xf32>, vector<24x144xf32> -> vector<24x144xf32>
    %69 = vector.broadcast %18 : vector<1x144xf32> to vector<24x144xf32>
    %70 = arith.addf %69, %68 : vector<24x144xf32>
    %71 = vector.extract_strided_slice %64 {offsets = [1, 0], sizes = [24, 28], strides = [1, 1]} : vector<28x28xf32> to vector<24x28xf32>
    %c1_38 = arith.constant 1 : index
    %c0_39 = arith.constant 0 : index
    %c0_40 = arith.constant 0 : index
    %72 = vector.load %arg1[%c1_38, %c0_39, %c0_40] : memref<5x28x144xf32, #tpu.memory_space<vmem>>, vector<1x28x144xf32>
    %73 = vector.shape_cast %72 : vector<1x28x144xf32> to vector<28x144xf32>
    %cst_41 = arith.constant dense<0.000000e+00> : vector<24x144xf32>
    %74 = tpu.matmul %71, %73, %cst_41 {dimension_numbers = #tpu.dot_dimension_numbers<[1], [0], [0], [1], [0, 0, 1, 1], [], []>} : vector<24x28xf32>, vector<28x144xf32>, vector<24x144xf32> -> vector<24x144xf32>
    %75 = arith.addf %70, %74 : vector<24x144xf32>
    %76 = vector.extract_strided_slice %64 {offsets = [2, 0], sizes = [24, 28], strides = [1, 1]} : vector<28x28xf32> to vector<24x28xf32>
    %c2_42 = arith.constant 2 : index
    %c0_43 = arith.constant 0 : index
    %c0_44 = arith.constant 0 : index
    %77 = vector.load %arg1[%c2_42, %c0_43, %c0_44] : memref<5x28x144xf32, #tpu.memory_space<vmem>>, vector<1x28x144xf32>
    %78 = vector.shape_cast %77 : vector<1x28x144xf32> to vector<28x144xf32>
    %cst_45 = arith.constant dense<0.000000e+00> : vector<24x144xf32>
    %79 = tpu.matmul %76, %78, %cst_45 {dimension_numbers = #tpu.dot_dimension_numbers<[1], [0], [0], [1], [0, 0, 1, 1], [], []>} : vector<24x28xf32>, vector<28x144xf32>, vector<24x144xf32> -> vector<24x144xf32>
    %80 = arith.addf %75, %79 : vector<24x144xf32>
    %81 = vector.extract_strided_slice %64 {offsets = [3, 0], sizes = [24, 28], strides = [1, 1]} : vector<28x28xf32> to vector<24x28xf32>
    %c3_46 = arith.constant 3 : index
    %c0_47 = arith.constant 0 : index
    %c0_48 = arith.constant 0 : index
    %82 = vector.load %arg1[%c3_46, %c0_47, %c0_48] : memref<5x28x144xf32, #tpu.memory_space<vmem>>, vector<1x28x144xf32>
    %83 = vector.shape_cast %82 : vector<1x28x144xf32> to vector<28x144xf32>
    %cst_49 = arith.constant dense<0.000000e+00> : vector<24x144xf32>
    %84 = tpu.matmul %81, %83, %cst_49 {dimension_numbers = #tpu.dot_dimension_numbers<[1], [0], [0], [1], [0, 0, 1, 1], [], []>} : vector<24x28xf32>, vector<28x144xf32>, vector<24x144xf32> -> vector<24x144xf32>
    %85 = arith.addf %80, %84 : vector<24x144xf32>
    %86 = vector.extract_strided_slice %64 {offsets = [4, 0], sizes = [24, 28], strides = [1, 1]} : vector<28x28xf32> to vector<24x28xf32>
    %c4_50 = arith.constant 4 : index
    %c0_51 = arith.constant 0 : index
    %c0_52 = arith.constant 0 : index
    %87 = vector.load %arg1[%c4_50, %c0_51, %c0_52] : memref<5x28x144xf32, #tpu.memory_space<vmem>>, vector<1x28x144xf32>
    %88 = vector.shape_cast %87 : vector<1x28x144xf32> to vector<28x144xf32>
    %cst_53 = arith.constant dense<0.000000e+00> : vector<24x144xf32>
    %89 = tpu.matmul %86, %88, %cst_53 {dimension_numbers = #tpu.dot_dimension_numbers<[1], [0], [0], [1], [0, 0, 1, 1], [], []>} : vector<24x28xf32>, vector<28x144xf32>, vector<24x144xf32> -> vector<24x144xf32>
    %90 = arith.addf %85, %89 : vector<24x144xf32>
    %cst_54 = arith.constant 0.000000e+00 : f32
    %91 = vector.broadcast %cst_54 : f32 to vector<24x144xf32>
    %92 = arith.maximumf %90, %91 : vector<24x144xf32>
    %c0_55 = arith.constant 0 : index
    %c0_56 = arith.constant 0 : index
    %93 = vector.load %arg3[%c0_55, %c0_56] : memref<12x24xf32, #tpu.memory_space<vmem>>, vector<12x24xf32>
    %c0_57 = arith.constant 0 : index
    %c0_58 = arith.constant 0 : index
    %94 = vector.load %arg4[%c0_57, %c0_58] : memref<12x24xf32, #tpu.memory_space<vmem>>, vector<12x24xf32>
    %c0_59 = arith.constant 0 : index
    %c0_60 = arith.constant 0 : index
    %95 = vector.load %arg5[%c0_59, %c0_60] : memref<144x72xf32, #tpu.memory_space<vmem>>, vector<144x72xf32>
    %c0_61 = arith.constant 0 : index
    %c0_62 = arith.constant 0 : index
    %96 = vector.load %arg6[%c0_61, %c0_62] : memref<144x72xf32, #tpu.memory_space<vmem>>, vector<144x72xf32>
    %cst_63 = arith.constant dense<0.000000e+00> : vector<12x144xf32>
    %97 = tpu.matmul %93, %55, %cst_63 {dimension_numbers = #tpu.dot_dimension_numbers<[1], [0], [0], [1], [0, 0, 1, 1], [], []>} : vector<12x24xf32>, vector<24x144xf32>, vector<12x144xf32> -> vector<12x144xf32>
    %cst_64 = arith.constant dense<0.000000e+00> : vector<12x144xf32>
    %98 = tpu.matmul %94, %55, %cst_64 {dimension_numbers = #tpu.dot_dimension_numbers<[1], [0], [0], [1], [0, 0, 1, 1], [], []>} : vector<12x24xf32>, vector<24x144xf32>, vector<12x144xf32> -> vector<12x144xf32>
    %99 = arith.maximumf %97, %98 : vector<12x144xf32>
    %cst_65 = arith.constant dense<0.000000e+00> : vector<12x72xf32>
    %100 = tpu.matmul %99, %95, %cst_65 {dimension_numbers = #tpu.dot_dimension_numbers<[1], [0], [0], [1], [0, 0, 1, 1], [], []>} : vector<12x144xf32>, vector<144x72xf32>, vector<12x72xf32> -> vector<12x72xf32>
    %cst_66 = arith.constant dense<0.000000e+00> : vector<12x72xf32>
    %101 = tpu.matmul %99, %96, %cst_66 {dimension_numbers = #tpu.dot_dimension_numbers<[1], [0], [0], [1], [0, 0, 1, 1], [], []>} : vector<12x144xf32>, vector<144x72xf32>, vector<12x72xf32> -> vector<12x72xf32>
    %102 = arith.maximumf %100, %101 : vector<12x72xf32>
    %cst_67 = arith.constant dense<0.000000e+00> : vector<12x144xf32>
    %103 = tpu.matmul %93, %92, %cst_67 {dimension_numbers = #tpu.dot_dimension_numbers<[1], [0], [0], [1], [0, 0, 1, 1], [], []>} : vector<12x24xf32>, vector<24x144xf32>, vector<12x144xf32> -> vector<12x144xf32>
    %cst_68 = arith.constant dense<0.000000e+00> : vector<12x144xf32>
    %104 = tpu.matmul %94, %92, %cst_68 {dimension_numbers = #tpu.dot_dimension_numbers<[1], [0], [0], [1], [0, 0, 1, 1], [], []>} : vector<12x24xf32>, vector<24x144xf32>, vector<12x144xf32> -> vector<12x144xf32>
    %105 = arith.maximumf %103, %104 : vector<12x144xf32>
    %cst_69 = arith.constant dense<0.000000e+00> : vector<12x72xf32>
    %106 = tpu.matmul %105, %95, %cst_69 {dimension_numbers = #tpu.dot_dimension_numbers<[1], [0], [0], [1], [0, 0, 1, 1], [], []>} : vector<12x144xf32>, vector<144x72xf32>, vector<12x72xf32> -> vector<12x72xf32>
    %cst_70 = arith.constant dense<0.000000e+00> : vector<12x72xf32>
    %107 = tpu.matmul %105, %96, %cst_70 {dimension_numbers = #tpu.dot_dimension_numbers<[1], [0], [0], [1], [0, 0, 1, 1], [], []>} : vector<12x144xf32>, vector<144x72xf32>, vector<12x72xf32> -> vector<12x72xf32>
    %108 = arith.maximumf %106, %107 : vector<12x72xf32>
    %109 = vector.shape_cast %102 : vector<12x72xf32> to vector<1x12x72xf32>
    %cst_71 = arith.constant dense<0.000000e+00> : vector<1xf32>
    %110 = vector.multi_reduction <add>, %109, %cst_71 [1, 2] : vector<1x12x72xf32> to vector<1xf32>
    %111 = vector.shape_cast %110 : vector<1xf32> to vector<1x1x1xf32>
    %112 = vector.extract %111[0, 0, 0] : f32 from vector<1x1x1xf32>
    %cst_72 = arith.constant 0.000000e+00 : f32
    %113 = arith.addf %cst_72, %112 : f32
    %114 = vector.shape_cast %108 : vector<12x72xf32> to vector<1x12x72xf32>
    %cst_73 = arith.constant dense<0.000000e+00> : vector<1xf32>
    %115 = vector.multi_reduction <add>, %114, %cst_73 [1, 2] : vector<1x12x72xf32> to vector<1xf32>
    %116 = vector.shape_cast %115 : vector<1xf32> to vector<1x1x1xf32>
    %117 = vector.extract %116[0, 0, 0] : f32 from vector<1x1x1xf32>
    %118 = arith.addf %113, %117 : f32
    %cst_74 = arith.constant 1.728000e+03 : f32
    %119 = arith.divf %118, %cst_74 : f32
    %cst_75 = arith.constant 2.000000e+00 : f32
    %120 = arith.mulf %cst_75, %119 : f32
    %cst_76 = arith.constant 2.64575124 : f32
    %121 = arith.divf %120, %cst_76 : f32
    %cst_77 = arith.constant 1.000000e+00 : f32
    %122 = arith.divf %cst_77, %121 : f32
    %c0_78 = arith.constant 0 : index
    %c0_79 = arith.constant 0 : index
    %123 = vector.load %arg8[%c0_78, %c0_79] : memref<1x128xf32, #tpu.memory_space<vmem>>, vector<1x128xf32>
    %124 = vector.broadcast %122 : f32 to vector<12x72xf32>
    %125 = arith.mulf %102, %124 : vector<12x72xf32>
    %cst_80 = arith.constant -8.000000e+00 : f32
    %cst_81 = arith.constant 7.000000e+00 : f32
    %126 = vector.broadcast %cst_80 : f32 to vector<12x72xf32>
    %127 = arith.maximumf %126, %125 : vector<12x72xf32>
    %128 = vector.broadcast %cst_81 : f32 to vector<12x72xf32>
    %129 = arith.minimumf %128, %127 : vector<12x72xf32>
    %130 = math.roundeven %129 : vector<12x72xf32>
    %131 = vector.broadcast %121 : f32 to vector<12x72xf32>
    %132 = arith.mulf %130, %131 : vector<12x72xf32>
    %133 = vector.extract_strided_slice %132 {offsets = [0, 0], sizes = [8, 72], strides = [1, 1]} : vector<12x72xf32> to vector<8x72xf32>
    %c0_82 = arith.constant 0 : index
    %c0_83 = arith.constant 0 : index
    %c0_84 = arith.constant 0 : index
    %134 = vector.load %arg7[%c0_82, %c0_83, %c0_84] : memref<5x72x128xf32, #tpu.memory_space<vmem>>, vector<1x72x128xf32>
    %135 = vector.shape_cast %134 : vector<1x72x128xf32> to vector<72x128xf32>
    %cst_85 = arith.constant dense<0.000000e+00> : vector<8x128xf32>
    %136 = tpu.matmul %133, %135, %cst_85 {dimension_numbers = #tpu.dot_dimension_numbers<[1], [0], [0], [1], [0, 0, 1, 1], [], []>} : vector<8x72xf32>, vector<72x128xf32>, vector<8x128xf32> -> vector<8x128xf32>
    %137 = vector.broadcast %123 : vector<1x128xf32> to vector<8x128xf32>
    %138 = arith.addf %137, %136 : vector<8x128xf32>
    %139 = vector.extract_strided_slice %132 {offsets = [1, 0], sizes = [8, 72], strides = [1, 1]} : vector<12x72xf32> to vector<8x72xf32>
    %c1_86 = arith.constant 1 : index
    %c0_87 = arith.constant 0 : index
    %c0_88 = arith.constant 0 : index
    %140 = vector.load %arg7[%c1_86, %c0_87, %c0_88] : memref<5x72x128xf32, #tpu.memory_space<vmem>>, vector<1x72x128xf32>
    %141 = vector.shape_cast %140 : vector<1x72x128xf32> to vector<72x128xf32>
    %cst_89 = arith.constant dense<0.000000e+00> : vector<8x128xf32>
    %142 = tpu.matmul %139, %141, %cst_89 {dimension_numbers = #tpu.dot_dimension_numbers<[1], [0], [0], [1], [0, 0, 1, 1], [], []>} : vector<8x72xf32>, vector<72x128xf32>, vector<8x128xf32> -> vector<8x128xf32>
    %143 = arith.addf %138, %142 : vector<8x128xf32>
    %144 = vector.extract_strided_slice %132 {offsets = [2, 0], sizes = [8, 72], strides = [1, 1]} : vector<12x72xf32> to vector<8x72xf32>
    %c2_90 = arith.constant 2 : index
    %c0_91 = arith.constant 0 : index
    %c0_92 = arith.constant 0 : index
    %145 = vector.load %arg7[%c2_90, %c0_91, %c0_92] : memref<5x72x128xf32, #tpu.memory_space<vmem>>, vector<1x72x128xf32>
    %146 = vector.shape_cast %145 : vector<1x72x128xf32> to vector<72x128xf32>
    %cst_93 = arith.constant dense<0.000000e+00> : vector<8x128xf32>
    %147 = tpu.matmul %144, %146, %cst_93 {dimension_numbers = #tpu.dot_dimension_numbers<[1], [0], [0], [1], [0, 0, 1, 1], [], []>} : vector<8x72xf32>, vector<72x128xf32>, vector<8x128xf32> -> vector<8x128xf32>
    %148 = arith.addf %143, %147 : vector<8x128xf32>
    %149 = vector.extract_strided_slice %132 {offsets = [3, 0], sizes = [8, 72], strides = [1, 1]} : vector<12x72xf32> to vector<8x72xf32>
    %c3_94 = arith.constant 3 : index
    %c0_95 = arith.constant 0 : index
    %c0_96 = arith.constant 0 : index
    %150 = vector.load %arg7[%c3_94, %c0_95, %c0_96] : memref<5x72x128xf32, #tpu.memory_space<vmem>>, vector<1x72x128xf32>
    %151 = vector.shape_cast %150 : vector<1x72x128xf32> to vector<72x128xf32>
    %cst_97 = arith.constant dense<0.000000e+00> : vector<8x128xf32>
    %152 = tpu.matmul %149, %151, %cst_97 {dimension_numbers = #tpu.dot_dimension_numbers<[1], [0], [0], [1], [0, 0, 1, 1], [], []>} : vector<8x72xf32>, vector<72x128xf32>, vector<8x128xf32> -> vector<8x128xf32>
    %153 = arith.addf %148, %152 : vector<8x128xf32>
    %154 = vector.extract_strided_slice %132 {offsets = [4, 0], sizes = [8, 72], strides = [1, 1]} : vector<12x72xf32> to vector<8x72xf32>
    %c4_98 = arith.constant 4 : index
    %c0_99 = arith.constant 0 : index
    %c0_100 = arith.constant 0 : index
    %155 = vector.load %arg7[%c4_98, %c0_99, %c0_100] : memref<5x72x128xf32, #tpu.memory_space<vmem>>, vector<1x72x128xf32>
    %156 = vector.shape_cast %155 : vector<1x72x128xf32> to vector<72x128xf32>
    %cst_101 = arith.constant dense<0.000000e+00> : vector<8x128xf32>
    %157 = tpu.matmul %154, %156, %cst_101 {dimension_numbers = #tpu.dot_dimension_numbers<[1], [0], [0], [1], [0, 0, 1, 1], [], []>} : vector<8x72xf32>, vector<72x128xf32>, vector<8x128xf32> -> vector<8x128xf32>
    %158 = arith.addf %153, %157 : vector<8x128xf32>
    %cst_102 = arith.constant 0.000000e+00 : f32
    %159 = vector.broadcast %cst_102 : f32 to vector<8x128xf32>
    %160 = arith.maximumf %158, %159 : vector<8x128xf32>
    %161 = vector.broadcast %122 : f32 to vector<12x72xf32>
    %162 = arith.mulf %108, %161 : vector<12x72xf32>
    %cst_103 = arith.constant -8.000000e+00 : f32
    %cst_104 = arith.constant 7.000000e+00 : f32
    %163 = vector.broadcast %cst_103 : f32 to vector<12x72xf32>
    %164 = arith.maximumf %163, %162 : vector<12x72xf32>
    %165 = vector.broadcast %cst_104 : f32 to vector<12x72xf32>
    %166 = arith.minimumf %165, %164 : vector<12x72xf32>
    %167 = math.roundeven %166 : vector<12x72xf32>
    %168 = vector.broadcast %121 : f32 to vector<12x72xf32>
    %169 = arith.mulf %167, %168 : vector<12x72xf32>
    %170 = vector.extract_strided_slice %169 {offsets = [0, 0], sizes = [8, 72], strides = [1, 1]} : vector<12x72xf32> to vector<8x72xf32>
    %c0_105 = arith.constant 0 : index
    %c0_106 = arith.constant 0 : index
    %c0_107 = arith.constant 0 : index
    %171 = vector.load %arg7[%c0_105, %c0_106, %c0_107] : memref<5x72x128xf32, #tpu.memory_space<vmem>>, vector<1x72x128xf32>
    %172 = vector.shape_cast %171 : vector<1x72x128xf32> to vector<72x128xf32>
    %cst_108 = arith.constant dense<0.000000e+00> : vector<8x128xf32>
    %173 = tpu.matmul %170, %172, %cst_108 {dimension_numbers = #tpu.dot_dimension_numbers<[1], [0], [0], [1], [0, 0, 1, 1], [], []>} : vector<8x72xf32>, vector<72x128xf32>, vector<8x128xf32> -> vector<8x128xf32>
    %174 = vector.broadcast %123 : vector<1x128xf32> to vector<8x128xf32>
    %175 = arith.addf %174, %173 : vector<8x128xf32>
    %176 = vector.extract_strided_slice %169 {offsets = [1, 0], sizes = [8, 72], strides = [1, 1]} : vector<12x72xf32> to vector<8x72xf32>
    %c1_109 = arith.constant 1 : index
    %c0_110 = arith.constant 0 : index
    %c0_111 = arith.constant 0 : index
    %177 = vector.load %arg7[%c1_109, %c0_110, %c0_111] : memref<5x72x128xf32, #tpu.memory_space<vmem>>, vector<1x72x128xf32>
    %178 = vector.shape_cast %177 : vector<1x72x128xf32> to vector<72x128xf32>
    %cst_112 = arith.constant dense<0.000000e+00> : vector<8x128xf32>
    %179 = tpu.matmul %176, %178, %cst_112 {dimension_numbers = #tpu.dot_dimension_numbers<[1], [0], [0], [1], [0, 0, 1, 1], [], []>} : vector<8x72xf32>, vector<72x128xf32>, vector<8x128xf32> -> vector<8x128xf32>
    %180 = arith.addf %175, %179 : vector<8x128xf32>
    %181 = vector.extract_strided_slice %169 {offsets = [2, 0], sizes = [8, 72], strides = [1, 1]} : vector<12x72xf32> to vector<8x72xf32>
    %c2_113 = arith.constant 2 : index
    %c0_114 = arith.constant 0 : index
    %c0_115 = arith.constant 0 : index
    %182 = vector.load %arg7[%c2_113, %c0_114, %c0_115] : memref<5x72x128xf32, #tpu.memory_space<vmem>>, vector<1x72x128xf32>
    %183 = vector.shape_cast %182 : vector<1x72x128xf32> to vector<72x128xf32>
    %cst_116 = arith.constant dense<0.000000e+00> : vector<8x128xf32>
    %184 = tpu.matmul %181, %183, %cst_116 {dimension_numbers = #tpu.dot_dimension_numbers<[1], [0], [0], [1], [0, 0, 1, 1], [], []>} : vector<8x72xf32>, vector<72x128xf32>, vector<8x128xf32> -> vector<8x128xf32>
    %185 = arith.addf %180, %184 : vector<8x128xf32>
    %186 = vector.extract_strided_slice %169 {offsets = [3, 0], sizes = [8, 72], strides = [1, 1]} : vector<12x72xf32> to vector<8x72xf32>
    %c3_117 = arith.constant 3 : index
    %c0_118 = arith.constant 0 : index
    %c0_119 = arith.constant 0 : index
    %187 = vector.load %arg7[%c3_117, %c0_118, %c0_119] : memref<5x72x128xf32, #tpu.memory_space<vmem>>, vector<1x72x128xf32>
    %188 = vector.shape_cast %187 : vector<1x72x128xf32> to vector<72x128xf32>
    %cst_120 = arith.constant dense<0.000000e+00> : vector<8x128xf32>
    %189 = tpu.matmul %186, %188, %cst_120 {dimension_numbers = #tpu.dot_dimension_numbers<[1], [0], [0], [1], [0, 0, 1, 1], [], []>} : vector<8x72xf32>, vector<72x128xf32>, vector<8x128xf32> -> vector<8x128xf32>
    %190 = arith.addf %185, %189 : vector<8x128xf32>
    %191 = vector.extract_strided_slice %169 {offsets = [4, 0], sizes = [8, 72], strides = [1, 1]} : vector<12x72xf32> to vector<8x72xf32>
    %c4_121 = arith.constant 4 : index
    %c0_122 = arith.constant 0 : index
    %c0_123 = arith.constant 0 : index
    %192 = vector.load %arg7[%c4_121, %c0_122, %c0_123] : memref<5x72x128xf32, #tpu.memory_space<vmem>>, vector<1x72x128xf32>
    %193 = vector.shape_cast %192 : vector<1x72x128xf32> to vector<72x128xf32>
    %cst_124 = arith.constant dense<0.000000e+00> : vector<8x128xf32>
    %194 = tpu.matmul %191, %193, %cst_124 {dimension_numbers = #tpu.dot_dimension_numbers<[1], [0], [0], [1], [0, 0, 1, 1], [], []>} : vector<8x72xf32>, vector<72x128xf32>, vector<8x128xf32> -> vector<8x128xf32>
    %195 = arith.addf %190, %194 : vector<8x128xf32>
    %cst_125 = arith.constant 0.000000e+00 : f32
    %196 = vector.broadcast %cst_125 : f32 to vector<8x128xf32>
    %197 = arith.maximumf %195, %196 : vector<8x128xf32>
    %198 = vector.extract_strided_slice %93 {offsets = [0, 0], sizes = [4, 8], strides = [1, 1]} : vector<12x24xf32> to vector<4x8xf32>
    %199 = vector.extract_strided_slice %94 {offsets = [0, 0], sizes = [4, 8], strides = [1, 1]} : vector<12x24xf32> to vector<4x8xf32>
    %c0_126 = arith.constant 0 : index
    %c0_127 = arith.constant 0 : index
    %200 = vector.load %arg9[%c0_126, %c0_127] : memref<128x64xf32, #tpu.memory_space<vmem>>, vector<128x64xf32>
    %c0_128 = arith.constant 0 : index
    %c0_129 = arith.constant 0 : index
    %201 = vector.load %arg10[%c0_128, %c0_129] : memref<128x64xf32, #tpu.memory_space<vmem>>, vector<128x64xf32>
    %cst_130 = arith.constant dense<0.000000e+00> : vector<4x128xf32>
    %202 = tpu.matmul %198, %160, %cst_130 {dimension_numbers = #tpu.dot_dimension_numbers<[1], [0], [0], [1], [0, 0, 1, 1], [], []>} : vector<4x8xf32>, vector<8x128xf32>, vector<4x128xf32> -> vector<4x128xf32>
    %cst_131 = arith.constant dense<0.000000e+00> : vector<4x128xf32>
    %203 = tpu.matmul %199, %160, %cst_131 {dimension_numbers = #tpu.dot_dimension_numbers<[1], [0], [0], [1], [0, 0, 1, 1], [], []>} : vector<4x8xf32>, vector<8x128xf32>, vector<4x128xf32> -> vector<4x128xf32>
    %204 = arith.maximumf %202, %203 : vector<4x128xf32>
    %cst_132 = arith.constant dense<0.000000e+00> : vector<4x64xf32>
    %205 = tpu.matmul %204, %200, %cst_132 {dimension_numbers = #tpu.dot_dimension_numbers<[1], [0], [0], [1], [0, 0, 1, 1], [], []>} : vector<4x128xf32>, vector<128x64xf32>, vector<4x64xf32> -> vector<4x64xf32>
    %cst_133 = arith.constant dense<0.000000e+00> : vector<4x64xf32>
    %206 = tpu.matmul %204, %201, %cst_133 {dimension_numbers = #tpu.dot_dimension_numbers<[1], [0], [0], [1], [0, 0, 1, 1], [], []>} : vector<4x128xf32>, vector<128x64xf32>, vector<4x64xf32> -> vector<4x64xf32>
    %207 = arith.maximumf %205, %206 : vector<4x64xf32>
    %cst_134 = arith.constant dense<0.000000e+00> : vector<4x128xf32>
    %208 = tpu.matmul %198, %197, %cst_134 {dimension_numbers = #tpu.dot_dimension_numbers<[1], [0], [0], [1], [0, 0, 1, 1], [], []>} : vector<4x8xf32>, vector<8x128xf32>, vector<4x128xf32> -> vector<4x128xf32>
    %cst_135 = arith.constant dense<0.000000e+00> : vector<4x128xf32>
    %209 = tpu.matmul %199, %197, %cst_135 {dimension_numbers = #tpu.dot_dimension_numbers<[1], [0], [0], [1], [0, 0, 1, 1], [], []>} : vector<4x8xf32>, vector<8x128xf32>, vector<4x128xf32> -> vector<4x128xf32>
    %210 = arith.maximumf %208, %209 : vector<4x128xf32>
    %cst_136 = arith.constant dense<0.000000e+00> : vector<4x64xf32>
    %211 = tpu.matmul %210, %200, %cst_136 {dimension_numbers = #tpu.dot_dimension_numbers<[1], [0], [0], [1], [0, 0, 1, 1], [], []>} : vector<4x128xf32>, vector<128x64xf32>, vector<4x64xf32> -> vector<4x64xf32>
    %cst_137 = arith.constant dense<0.000000e+00> : vector<4x64xf32>
    %212 = tpu.matmul %210, %201, %cst_137 {dimension_numbers = #tpu.dot_dimension_numbers<[1], [0], [0], [1], [0, 0, 1, 1], [], []>} : vector<4x128xf32>, vector<128x64xf32>, vector<4x64xf32> -> vector<4x64xf32>
    %213 = arith.maximumf %211, %212 : vector<4x64xf32>
    %214 = vector.shape_cast %207 : vector<4x64xf32> to vector<1x4x64xf32>
    %cst_138 = arith.constant dense<0.000000e+00> : vector<1xf32>
    %215 = vector.multi_reduction <add>, %214, %cst_138 [1, 2] : vector<1x4x64xf32> to vector<1xf32>
    %216 = vector.shape_cast %215 : vector<1xf32> to vector<1x1x1xf32>
    %217 = vector.extract %216[0, 0, 0] : f32 from vector<1x1x1xf32>
    %cst_139 = arith.constant 0.000000e+00 : f32
    %218 = arith.addf %cst_139, %217 : f32
    %219 = vector.shape_cast %213 : vector<4x64xf32> to vector<1x4x64xf32>
    %cst_140 = arith.constant dense<0.000000e+00> : vector<1xf32>
    %220 = vector.multi_reduction <add>, %219, %cst_140 [1, 2] : vector<1x4x64xf32> to vector<1xf32>
    %221 = vector.shape_cast %220 : vector<1xf32> to vector<1x1x1xf32>
    %222 = vector.extract %221[0, 0, 0] : f32 from vector<1x1x1xf32>
    %223 = arith.addf %218, %222 : f32
    %cst_141 = arith.constant 5.120000e+02 : f32
    %224 = arith.divf %223, %cst_141 : f32
    %cst_142 = arith.constant 2.000000e+00 : f32
    %225 = arith.mulf %cst_142, %224 : f32
    %cst_143 = arith.constant 2.64575124 : f32
    %226 = arith.divf %225, %cst_143 : f32
    %cst_144 = arith.constant 1.000000e+00 : f32
    %227 = arith.divf %cst_144, %226 : f32
    %c0_145 = arith.constant 0 : index
    %c0_146 = arith.constant 0 : index
    %228 = vector.load %arg12[%c0_145, %c0_146] : memref<1x128xf32, #tpu.memory_space<vmem>>, vector<1x128xf32>
    %229 = vector.broadcast %227 : f32 to vector<4x64xf32>
    %230 = arith.mulf %207, %229 : vector<4x64xf32>
    %cst_147 = arith.constant -8.000000e+00 : f32
    %cst_148 = arith.constant 7.000000e+00 : f32
    %231 = vector.broadcast %cst_147 : f32 to vector<4x64xf32>
    %232 = arith.maximumf %231, %230 : vector<4x64xf32>
    %233 = vector.broadcast %cst_148 : f32 to vector<4x64xf32>
    %234 = arith.minimumf %233, %232 : vector<4x64xf32>
    %235 = math.roundeven %234 : vector<4x64xf32>
    %236 = vector.broadcast %226 : f32 to vector<4x64xf32>
    %237 = arith.mulf %235, %236 : vector<4x64xf32>
    %238 = vector.extract_strided_slice %237 {offsets = [0, 0], sizes = [1, 64], strides = [1, 1]} : vector<4x64xf32> to vector<1x64xf32>
    %c0_149 = arith.constant 0 : index
    %c0_150 = arith.constant 0 : index
    %c0_151 = arith.constant 0 : index
    %239 = vector.load %arg11[%c0_149, %c0_150, %c0_151] : memref<4x64x128xf32, #tpu.memory_space<vmem>>, vector<1x64x128xf32>
    %240 = vector.shape_cast %239 : vector<1x64x128xf32> to vector<64x128xf32>
    %cst_152 = arith.constant dense<0.000000e+00> : vector<1x128xf32>
    %241 = tpu.matmul %238, %240, %cst_152 {dimension_numbers = #tpu.dot_dimension_numbers<[1], [0], [0], [1], [0, 0, 1, 1], [], []>} : vector<1x64xf32>, vector<64x128xf32>, vector<1x128xf32> -> vector<1x128xf32>
    %242 = arith.addf %228, %241 : vector<1x128xf32>
    %243 = vector.extract_strided_slice %237 {offsets = [1, 0], sizes = [1, 64], strides = [1, 1]} : vector<4x64xf32> to vector<1x64xf32>
    %c1_153 = arith.constant 1 : index
    %c0_154 = arith.constant 0 : index
    %c0_155 = arith.constant 0 : index
    %244 = vector.load %arg11[%c1_153, %c0_154, %c0_155] : memref<4x64x128xf32, #tpu.memory_space<vmem>>, vector<1x64x128xf32>
    %245 = vector.shape_cast %244 : vector<1x64x128xf32> to vector<64x128xf32>
    %cst_156 = arith.constant dense<0.000000e+00> : vector<1x128xf32>
    %246 = tpu.matmul %243, %245, %cst_156 {dimension_numbers = #tpu.dot_dimension_numbers<[1], [0], [0], [1], [0, 0, 1, 1], [], []>} : vector<1x64xf32>, vector<64x128xf32>, vector<1x128xf32> -> vector<1x128xf32>
    %247 = arith.addf %242, %246 : vector<1x128xf32>
    %248 = vector.extract_strided_slice %237 {offsets = [2, 0], sizes = [1, 64], strides = [1, 1]} : vector<4x64xf32> to vector<1x64xf32>
    %c2_157 = arith.constant 2 : index
    %c0_158 = arith.constant 0 : index
    %c0_159 = arith.constant 0 : index
    %249 = vector.load %arg11[%c2_157, %c0_158, %c0_159] : memref<4x64x128xf32, #tpu.memory_space<vmem>>, vector<1x64x128xf32>
    %250 = vector.shape_cast %249 : vector<1x64x128xf32> to vector<64x128xf32>
    %cst_160 = arith.constant dense<0.000000e+00> : vector<1x128xf32>
    %251 = tpu.matmul %248, %250, %cst_160 {dimension_numbers = #tpu.dot_dimension_numbers<[1], [0], [0], [1], [0, 0, 1, 1], [], []>} : vector<1x64xf32>, vector<64x128xf32>, vector<1x128xf32> -> vector<1x128xf32>
    %252 = arith.addf %247, %251 : vector<1x128xf32>
    %253 = vector.extract_strided_slice %237 {offsets = [3, 0], sizes = [1, 64], strides = [1, 1]} : vector<4x64xf32> to vector<1x64xf32>
    %c3_161 = arith.constant 3 : index
    %c0_162 = arith.constant 0 : index
    %c0_163 = arith.constant 0 : index
    %254 = vector.load %arg11[%c3_161, %c0_162, %c0_163] : memref<4x64x128xf32, #tpu.memory_space<vmem>>, vector<1x64x128xf32>
    %255 = vector.shape_cast %254 : vector<1x64x128xf32> to vector<64x128xf32>
    %cst_164 = arith.constant dense<0.000000e+00> : vector<1x128xf32>
    %256 = tpu.matmul %253, %255, %cst_164 {dimension_numbers = #tpu.dot_dimension_numbers<[1], [0], [0], [1], [0, 0, 1, 1], [], []>} : vector<1x64xf32>, vector<64x128xf32>, vector<1x128xf32> -> vector<1x128xf32>
    %257 = arith.addf %252, %256 : vector<1x128xf32>
    %cst_165 = arith.constant 0.000000e+00 : f32
    %258 = vector.broadcast %cst_165 : f32 to vector<1x128xf32>
    %259 = arith.maximumf %257, %258 : vector<1x128xf32>
    %260 = vector.broadcast %227 : f32 to vector<4x64xf32>
    %261 = arith.mulf %213, %260 : vector<4x64xf32>
    %cst_166 = arith.constant -8.000000e+00 : f32
    %cst_167 = arith.constant 7.000000e+00 : f32
    %262 = vector.broadcast %cst_166 : f32 to vector<4x64xf32>
    %263 = arith.maximumf %262, %261 : vector<4x64xf32>
    %264 = vector.broadcast %cst_167 : f32 to vector<4x64xf32>
    %265 = arith.minimumf %264, %263 : vector<4x64xf32>
    %266 = math.roundeven %265 : vector<4x64xf32>
    %267 = vector.broadcast %226 : f32 to vector<4x64xf32>
    %268 = arith.mulf %266, %267 : vector<4x64xf32>
    %269 = vector.extract_strided_slice %268 {offsets = [0, 0], sizes = [1, 64], strides = [1, 1]} : vector<4x64xf32> to vector<1x64xf32>
    %c0_168 = arith.constant 0 : index
    %c0_169 = arith.constant 0 : index
    %c0_170 = arith.constant 0 : index
    %270 = vector.load %arg11[%c0_168, %c0_169, %c0_170] : memref<4x64x128xf32, #tpu.memory_space<vmem>>, vector<1x64x128xf32>
    %271 = vector.shape_cast %270 : vector<1x64x128xf32> to vector<64x128xf32>
    %cst_171 = arith.constant dense<0.000000e+00> : vector<1x128xf32>
    %272 = tpu.matmul %269, %271, %cst_171 {dimension_numbers = #tpu.dot_dimension_numbers<[1], [0], [0], [1], [0, 0, 1, 1], [], []>} : vector<1x64xf32>, vector<64x128xf32>, vector<1x128xf32> -> vector<1x128xf32>
    %273 = arith.addf %228, %272 : vector<1x128xf32>
    %274 = vector.extract_strided_slice %268 {offsets = [1, 0], sizes = [1, 64], strides = [1, 1]} : vector<4x64xf32> to vector<1x64xf32>
    %c1_172 = arith.constant 1 : index
    %c0_173 = arith.constant 0 : index
    %c0_174 = arith.constant 0 : index
    %275 = vector.load %arg11[%c1_172, %c0_173, %c0_174] : memref<4x64x128xf32, #tpu.memory_space<vmem>>, vector<1x64x128xf32>
    %276 = vector.shape_cast %275 : vector<1x64x128xf32> to vector<64x128xf32>
    %cst_175 = arith.constant dense<0.000000e+00> : vector<1x128xf32>
    %277 = tpu.matmul %274, %276, %cst_175 {dimension_numbers = #tpu.dot_dimension_numbers<[1], [0], [0], [1], [0, 0, 1, 1], [], []>} : vector<1x64xf32>, vector<64x128xf32>, vector<1x128xf32> -> vector<1x128xf32>
    %278 = arith.addf %273, %277 : vector<1x128xf32>
    %279 = vector.extract_strided_slice %268 {offsets = [2, 0], sizes = [1, 64], strides = [1, 1]} : vector<4x64xf32> to vector<1x64xf32>
    %c2_176 = arith.constant 2 : index
    %c0_177 = arith.constant 0 : index
    %c0_178 = arith.constant 0 : index
    %280 = vector.load %arg11[%c2_176, %c0_177, %c0_178] : memref<4x64x128xf32, #tpu.memory_space<vmem>>, vector<1x64x128xf32>
    %281 = vector.shape_cast %280 : vector<1x64x128xf32> to vector<64x128xf32>
    %cst_179 = arith.constant dense<0.000000e+00> : vector<1x128xf32>
    %282 = tpu.matmul %279, %281, %cst_179 {dimension_numbers = #tpu.dot_dimension_numbers<[1], [0], [0], [1], [0, 0, 1, 1], [], []>} : vector<1x64xf32>, vector<64x128xf32>, vector<1x128xf32> -> vector<1x128xf32>
    %283 = arith.addf %278, %282 : vector<1x128xf32>
    %284 = vector.extract_strided_slice %268 {offsets = [3, 0], sizes = [1, 64], strides = [1, 1]} : vector<4x64xf32> to vector<1x64xf32>
    %c3_180 = arith.constant 3 : index
    %c0_181 = arith.constant 0 : index
    %c0_182 = arith.constant 0 : index
    %285 = vector.load %arg11[%c3_180, %c0_181, %c0_182] : memref<4x64x128xf32, #tpu.memory_space<vmem>>, vector<1x64x128xf32>
    %286 = vector.shape_cast %285 : vector<1x64x128xf32> to vector<64x128xf32>
    %cst_183 = arith.constant dense<0.000000e+00> : vector<1x128xf32>
    %287 = tpu.matmul %284, %286, %cst_183 {dimension_numbers = #tpu.dot_dimension_numbers<[1], [0], [0], [1], [0, 0, 1, 1], [], []>} : vector<1x64xf32>, vector<64x128xf32>, vector<1x128xf32> -> vector<1x128xf32>
    %288 = arith.addf %283, %287 : vector<1x128xf32>
    %cst_184 = arith.constant 0.000000e+00 : f32
    %289 = vector.broadcast %cst_184 : f32 to vector<1x128xf32>
    %290 = arith.maximumf %288, %289 : vector<1x128xf32>
    %291 = vector.shape_cast %259 : vector<1x128xf32> to vector<1x1x128xf32>
    %cst_185 = arith.constant dense<0.000000e+00> : vector<1xf32>
    %292 = vector.multi_reduction <add>, %291, %cst_185 [1, 2] : vector<1x1x128xf32> to vector<1xf32>
    %293 = vector.shape_cast %292 : vector<1xf32> to vector<1x1x1xf32>
    %294 = vector.extract %293[0, 0, 0] : f32 from vector<1x1x1xf32>
    %cst_186 = arith.constant 0.000000e+00 : f32
    %295 = arith.addf %cst_186, %294 : f32
    %296 = vector.shape_cast %290 : vector<1x128xf32> to vector<1x1x128xf32>
    %cst_187 = arith.constant dense<0.000000e+00> : vector<1xf32>
    %297 = vector.multi_reduction <add>, %296, %cst_187 [1, 2] : vector<1x1x128xf32> to vector<1xf32>
    %298 = vector.shape_cast %297 : vector<1xf32> to vector<1x1x1xf32>
    %299 = vector.extract %298[0, 0, 0] : f32 from vector<1x1x1xf32>
    %300 = arith.addf %295, %299 : f32
    %cst_188 = arith.constant 2.400000e+02 : f32
    %301 = arith.divf %300, %cst_188 : f32
    %cst_189 = arith.constant 2.000000e+00 : f32
    %302 = arith.mulf %cst_189, %301 : f32
    %cst_190 = arith.constant 2.64575124 : f32
    %303 = arith.divf %302, %cst_190 : f32
    %cst_191 = arith.constant 1.000000e+00 : f32
    %304 = arith.divf %cst_191, %303 : f32
    %c0_192 = arith.constant 0 : index
    %c0_193 = arith.constant 0 : index
    %305 = vector.load %arg13[%c0_192, %c0_193] : memref<128x128xf32, #tpu.memory_space<vmem>>, vector<128x128xf32>
    %c0_194 = arith.constant 0 : index
    %c0_195 = arith.constant 0 : index
    %306 = vector.load %arg14[%c0_194, %c0_195] : memref<1x128xf32, #tpu.memory_space<vmem>>, vector<1x128xf32>
    %307 = vector.broadcast %304 : f32 to vector<1x128xf32>
    %308 = arith.mulf %259, %307 : vector<1x128xf32>
    %cst_196 = arith.constant -8.000000e+00 : f32
    %cst_197 = arith.constant 7.000000e+00 : f32
    %309 = vector.broadcast %cst_196 : f32 to vector<1x128xf32>
    %310 = arith.maximumf %309, %308 : vector<1x128xf32>
    %311 = vector.broadcast %cst_197 : f32 to vector<1x128xf32>
    %312 = arith.minimumf %311, %310 : vector<1x128xf32>
    %313 = math.roundeven %312 : vector<1x128xf32>
    %314 = vector.broadcast %303 : f32 to vector<1x128xf32>
    %315 = arith.mulf %313, %314 : vector<1x128xf32>
    %cst_198 = arith.constant dense<0.000000e+00> : vector<1x128xf32>
    %316 = tpu.matmul %315, %305, %cst_198 {dimension_numbers = #tpu.dot_dimension_numbers<[1], [0], [0], [1], [0, 0, 1, 1], [], []>} : vector<1x128xf32>, vector<128x128xf32>, vector<1x128xf32> -> vector<1x128xf32>
    %317 = arith.addf %316, %306 : vector<1x128xf32>
    %cst_199 = arith.constant 0.000000e+00 : f32
    %318 = vector.broadcast %cst_199 : f32 to vector<1x128xf32>
    %319 = arith.maximumf %317, %318 : vector<1x128xf32>
    %320 = vector.broadcast %304 : f32 to vector<1x128xf32>
    %321 = arith.mulf %290, %320 : vector<1x128xf32>
    %cst_200 = arith.constant -8.000000e+00 : f32
    %cst_201 = arith.constant 7.000000e+00 : f32
    %322 = vector.broadcast %cst_200 : f32 to vector<1x128xf32>
    %323 = arith.maximumf %322, %321 : vector<1x128xf32>
    %324 = vector.broadcast %cst_201 : f32 to vector<1x128xf32>
    %325 = arith.minimumf %324, %323 : vector<1x128xf32>
    %326 = math.roundeven %325 : vector<1x128xf32>
    %327 = vector.broadcast %303 : f32 to vector<1x128xf32>
    %328 = arith.mulf %326, %327 : vector<1x128xf32>
    %cst_202 = arith.constant dense<0.000000e+00> : vector<1x128xf32>
    %329 = tpu.matmul %328, %305, %cst_202 {dimension_numbers = #tpu.dot_dimension_numbers<[1], [0], [0], [1], [0, 0, 1, 1], [], []>} : vector<1x128xf32>, vector<128x128xf32>, vector<1x128xf32> -> vector<1x128xf32>
    %330 = arith.addf %329, %306 : vector<1x128xf32>
    %cst_203 = arith.constant 0.000000e+00 : f32
    %331 = vector.broadcast %cst_203 : f32 to vector<1x128xf32>
    %332 = arith.maximumf %330, %331 : vector<1x128xf32>
    %333 = vector.shape_cast %319 : vector<1x128xf32> to vector<1x1x128xf32>
    %cst_204 = arith.constant dense<0.000000e+00> : vector<1xf32>
    %334 = vector.multi_reduction <add>, %333, %cst_204 [1, 2] : vector<1x1x128xf32> to vector<1xf32>
    %335 = vector.shape_cast %334 : vector<1xf32> to vector<1x1x1xf32>
    %336 = vector.extract %335[0, 0, 0] : f32 from vector<1x1x1xf32>
    %cst_205 = arith.constant 0.000000e+00 : f32
    %337 = arith.addf %cst_205, %336 : f32
    %338 = vector.shape_cast %332 : vector<1x128xf32> to vector<1x1x128xf32>
    %cst_206 = arith.constant dense<0.000000e+00> : vector<1xf32>
    %339 = vector.multi_reduction <add>, %338, %cst_206 [1, 2] : vector<1x1x128xf32> to vector<1xf32>
    %340 = vector.shape_cast %339 : vector<1xf32> to vector<1x1x1xf32>
    %341 = vector.extract %340[0, 0, 0] : f32 from vector<1x1x1xf32>
    %342 = arith.addf %337, %341 : f32
    %cst_207 = arith.constant 1.680000e+02 : f32
    %343 = arith.divf %342, %cst_207 : f32
    %cst_208 = arith.constant 2.000000e+00 : f32
    %344 = arith.mulf %cst_208, %343 : f32
    %cst_209 = arith.constant 2.64575124 : f32
    %345 = arith.divf %344, %cst_209 : f32
    %cst_210 = arith.constant 1.000000e+00 : f32
    %346 = arith.divf %cst_210, %345 : f32
    %c0_211 = arith.constant 0 : index
    %c0_212 = arith.constant 0 : index
    %347 = vector.load %arg15[%c0_211, %c0_212] : memref<128x128xf32, #tpu.memory_space<vmem>>, vector<128x128xf32>
    %c0_213 = arith.constant 0 : index
    %c0_214 = arith.constant 0 : index
    %348 = vector.load %arg16[%c0_213, %c0_214] : memref<1x128xf32, #tpu.memory_space<vmem>>, vector<1x128xf32>
    %349 = vector.broadcast %346 : f32 to vector<1x128xf32>
    %350 = arith.mulf %319, %349 : vector<1x128xf32>
    %cst_215 = arith.constant -8.000000e+00 : f32
    %cst_216 = arith.constant 7.000000e+00 : f32
    %351 = vector.broadcast %cst_215 : f32 to vector<1x128xf32>
    %352 = arith.maximumf %351, %350 : vector<1x128xf32>
    %353 = vector.broadcast %cst_216 : f32 to vector<1x128xf32>
    %354 = arith.minimumf %353, %352 : vector<1x128xf32>
    %355 = math.roundeven %354 : vector<1x128xf32>
    %356 = vector.broadcast %345 : f32 to vector<1x128xf32>
    %357 = arith.mulf %355, %356 : vector<1x128xf32>
    %cst_217 = arith.constant dense<0.000000e+00> : vector<1x128xf32>
    %358 = tpu.matmul %357, %347, %cst_217 {dimension_numbers = #tpu.dot_dimension_numbers<[1], [0], [0], [1], [0, 0, 1, 1], [], []>} : vector<1x128xf32>, vector<128x128xf32>, vector<1x128xf32> -> vector<1x128xf32>
    %359 = arith.addf %358, %348 : vector<1x128xf32>
    %cst_218 = arith.constant 0.000000e+00 : f32
    %360 = vector.broadcast %cst_218 : f32 to vector<1x128xf32>
    %361 = arith.maximumf %359, %360 : vector<1x128xf32>
    %c0_219 = arith.constant 0 : index
    %c0_220 = arith.constant 0 : index
    %362 = vector.load %arg17[%c0_219, %c0_220] : memref<2x128xf32, #tpu.memory_space<vmem>>, vector<1x128xf32>
    tpu.vector_store %arg17[%c0_219, %c0_220], %361 {strides = array<i32>} : memref<2x128xf32, #tpu.memory_space<vmem>>, vector<1x128xf32>,
    %363 = vector.broadcast %346 : f32 to vector<1x128xf32>
    %364 = arith.mulf %332, %363 : vector<1x128xf32>
    %cst_221 = arith.constant -8.000000e+00 : f32
    %cst_222 = arith.constant 7.000000e+00 : f32
    %365 = vector.broadcast %cst_221 : f32 to vector<1x128xf32>
    %366 = arith.maximumf %365, %364 : vector<1x128xf32>
    %367 = vector.broadcast %cst_222 : f32 to vector<1x128xf32>
    %368 = arith.minimumf %367, %366 : vector<1x128xf32>
    %369 = math.roundeven %368 : vector<1x128xf32>
    %370 = vector.broadcast %345 : f32 to vector<1x128xf32>
    %371 = arith.mulf %369, %370 : vector<1x128xf32>
    %cst_223 = arith.constant dense<0.000000e+00> : vector<1x128xf32>
    %372 = tpu.matmul %371, %347, %cst_223 {dimension_numbers = #tpu.dot_dimension_numbers<[1], [0], [0], [1], [0, 0, 1, 1], [], []>} : vector<1x128xf32>, vector<128x128xf32>, vector<1x128xf32> -> vector<1x128xf32>
    %373 = arith.addf %372, %348 : vector<1x128xf32>
    %cst_224 = arith.constant 0.000000e+00 : f32
    %374 = vector.broadcast %cst_224 : f32 to vector<1x128xf32>
    %375 = arith.maximumf %373, %374 : vector<1x128xf32>
    %c1_225 = arith.constant 1 : index
    %c0_226 = arith.constant 0 : index
    %376 = vector.load %arg17[%c1_225, %c0_226] : memref<2x128xf32, #tpu.memory_space<vmem>>, vector<1x128xf32>
    tpu.vector_store %arg17[%c1_225, %c0_226], %375 {strides = array<i32>} : memref<2x128xf32, #tpu.memory_space<vmem>>, vector<1x128xf32>,
    return
  }
}

</mosaic_0001>

<llo_original>
// kernel: model_forward.1
$region0: #{model_forward.1}
  #allocation0 [shape = 'u32[]', space=smem, size = 0x4, offset = 0x4, fixed_abs, tag = 'smem constant byte address 0x4 - core index']
  #allocation1 [shape = 'u32[144,128]{1,0:T(1,128)}', space=vmem, size = 0x12000, scoped, tag = 'internal scratch']
  %s0 = inlined_call_operand.vmem [shape: f32[2,28,28], index: 0, kind: input, shape index: {}]
  %s1 = inlined_call_operand.hbm [shape: f32[5,28,144], index: 1, kind: input, shape index: {}]
  %s2 = inlined_call_operand.vmem [shape: f32[1,144], index: 2, kind: input, shape index: {}]
  %s3 = inlined_call_operand.vmem [shape: f32[12,24], index: 3, kind: input, shape index: {}]
  %s4 = inlined_call_operand.hbm [shape: f32[12,24], index: 4, kind: input, shape index: {}]
  %s5 = inlined_call_operand.hbm [shape: f32[144,72], index: 5, kind: input, shape index: {}]
  %s6 = inlined_call_operand.hbm [shape: f32[144,72], index: 6, kind: input, shape index: {}]
  %s7 = inlined_call_operand.vmem [shape: f32[5,72,128], index: 7, kind: input, shape index: {}]
  %s8 = inlined_call_operand.hbm [shape: f32[1,128], index: 8, kind: input, shape index: {}]
  %s9 = inlined_call_operand.vmem [shape: f32[128,64], index: 9, kind: input, shape index: {}]
  %s10 = inlined_call_operand.vmem [shape: f32[128,64], index: 10, kind: input, shape index: {}]
  %s11 = inlined_call_operand.vmem [shape: f32[4,64,128], index: 11, kind: input, shape index: {}]
  %s12 = inlined_call_operand.hbm [shape: f32[1,128], index: 12, kind: input, shape index: {}]
  %s13 = inlined_call_operand.hbm [shape: f32[128,128], index: 13, kind: input, shape index: {}]
  %s14 = inlined_call_operand.hbm [shape: f32[1,128], index: 14, kind: input, shape index: {}]
  %s15 = inlined_call_operand.hbm [shape: f32[128,128], index: 15, kind: input, shape index: {}]
  %s16 = inlined_call_operand.hbm [shape: f32[1,128], index: 16, kind: input, shape index: {}]
  %s17 = inlined_call_operand.hbm [shape: f32[2,128], index: 17, kind: output, shape index: {}]
  %s18 = sld [smem:[#allocation0]]
  $region118: #{model_forward.1} parent=0
    _
  %s20 = ssub.s32 1, %s18
  %s21 = scalar_select 0, %s20, %s18
  $region1: #{model_forward.1} parent=0
    #allocation2 [shape = 'u8[163840]{0}', space=vmem, size = 0x28000, scoped, tag = 'input window, operand 1, single buffered']
    #allocation3 [shape = 's32[1]{0}', space=sflag, size = 0x4, scoped, tag = 'scoped memory for model_forward.1']
    #allocation4 [shape = 's32[1]{0}', space=sflag, size = 0x4, scoped, tag = 'scoped memory for model_forward.1']
    #allocation5 [shape = 'u8[8192]{0}', space=vmem, size = 0x2000, scoped, tag = 'input window, operand 4, single buffered']
    #allocation6 [shape = 's32[1]{0}', space=sflag, size = 0x4, scoped, tag = 'scoped memory for model_forward.1']
    #allocation7 [shape = 'u8[73728]{0}', space=vmem, size = 0x12000, scoped, tag = 'input window, operand 5, single buffered']
    #allocation8 [shape = 'u8[73728]{0}', space=vmem, size = 0x12000, scoped, tag = 'input window, operand 6, single buffered']
    #allocation9 [shape = 's32[1]{0}', space=sflag, size = 0x4, scoped, tag = 'scoped memory for model_forward.1']
    #allocation10 [shape = 'u8[512]{0}', space=vmem, size = 0x400, scoped, tag = 'input window, operand 8, single buffered']
    #allocation11 [shape = 'u8[512]{0}', space=vmem, size = 0x400, scoped, tag = 'input window, operand 12, single buffered']
    #allocation12 [shape = 's32[1]{0}', space=sflag, size = 0x4, scoped, tag = 'scoped memory for model_forward.1']
    #allocation13 [shape = 'u8[65536]{0}', space=vmem, size = 0x10000, scoped, tag = 'input window, operand 13, single buffered']
    #allocation14 [shape = 'u8[512]{0}', space=vmem, size = 0x400, scoped, tag = 'input window, operand 14, single buffered']
    #allocation15 [shape = 's32[1]{0}', space=sflag, size = 0x4, scoped, tag = 'scoped memory for model_forward.1']
    #allocation16 [shape = 'u8[65536]{0}', space=vmem, size = 0x10000, scoped, tag = 'input window, operand 15, single buffered']
    #allocation17 [shape = 'u8[512]{0}', space=vmem, size = 0x400, scoped, tag = 'input window, operand 16, single buffered']
    #allocation18 [shape = 's32[1]{0}', space=sflag, size = 0x4, scoped, tag = 'scoped memory for model_forward.1']
    #allocation19 [shape = 'u8[1024]{0}', space=vmem, size = 0x400, scoped, tag = 'output window, operand 0, single buffered']
    %22 = vsyncpa [#allocation3], 0
    %23 = vsyncpa [#allocation6], 0
    %24 = vsyncpa [#allocation9], 0
    %25 = vsyncpa [#allocation12], 0
    %26 = vsyncpa [#allocation15], 0
    %27 = vsyncpa [#allocation18], 0
    %28 = vsyncpa [#allocation4], 0
    // Predicated region
    $region2: #{model_forward.1} parent=1 // pred_check
      _
    $region3: #{model_forward.1} parent=1 // pred_check_branch
      %30 = sbr.rel (0) target = $region5
    $region4: #{model_forward.1} parent=1 // pred_region
      _
    $region5: #{model_forward.1} parent=1 // pred_fallthru
      _
    // Predicated region
    $region6: #{model_forward.1} parent=1 // pred_check
      _
    $region7: #{model_forward.1} parent=1 // pred_check_branch
      %32 = sbr.rel (0) target = $region9
    $region8: #{model_forward.1} parent=1 // pred_region
      %s34 = ssub.s32 5120, 5120
      %35 = vsyncadd [#allocation3], %s34
      %s36 = sshll.u32 [#allocation2], 4
      %s37 = int_to_ptr.vmem [resolvable:$true] %s36
      %42 = dma.hbm_to_vmem [thread:$0]  %s1, 5120, %s37, [#allocation3], 256, 256, 16
    $region9: #{model_forward.1} parent=1 // pred_fallthru
      _
    // Predicated region
    $region10: #{model_forward.1} parent=1 // pred_check
      _
    $region11: #{model_forward.1} parent=1 // pred_check_branch
      %44 = sbr.rel (0) target = $region13
    $region12: #{model_forward.1} parent=1 // pred_region
      _
    $region13: #{model_forward.1} parent=1 // pred_fallthru
      _
    // Predicated region
    $region14: #{model_forward.1} parent=1 // pred_check
      _
    $region15: #{model_forward.1} parent=1 // pred_check_branch
      %46 = sbr.rel (0) target = $region17
    $region16: #{model_forward.1} parent=1 // pred_region
      _
    $region17: #{model_forward.1} parent=1 // pred_fallthru
      _
    // Predicated region
    $region18: #{model_forward.1} parent=1 // pred_check
      _
    $region19: #{model_forward.1} parent=1 // pred_check_branch
      %48 = sbr.rel (0) target = $region21
    $region20: #{model_forward.1} parent=1 // pred_region
      %s50 = ssub.s32 256, 256
      %51 = vsyncadd [#allocation6], %s50
      %s52 = sshll.u32 [#allocation5], 4
      %s53 = int_to_ptr.vmem [resolvable:$true] %s52
      %58 = dma.hbm_to_vmem [thread:$0]  %s4, 256, %s53, [#allocation6], 128, 128, 8
    $region21: #{model_forward.1} parent=1 // pred_fallthru
      _
    // Predicated region
    $region22: #{model_forward.1} parent=1 // pred_check
      _
    $region23: #{model_forward.1} parent=1 // pred_check_branch
      %60 = sbr.rel (0) target = $region25
    $region24: #{model_forward.1} parent=1 // pred_region
      %s62 = ssub.s32 2304, 2304
      %63 = vsyncadd [#allocation6], %s62
      %s64 = sshll.u32 [#allocation7], 4
      %s65 = int_to_ptr.vmem [resolvable:$true] %s64
      %70 = dma.hbm_to_vmem [thread:$0]  %s5, 2304, %s65, [#allocation6], 128, 128, 8
    $region25: #{model_forward.1} parent=1 // pred_fallthru
      _
    // Predicated region
    $region26: #{model_forward.1} parent=1 // pred_check
      _
    $region27: #{model_forward.1} parent=1 // pred_check_branch
      %72 = sbr.rel (0) target = $region29
    $region28: #{model_forward.1} parent=1 // pred_region
      %s74 = ssub.s32 2304, 2304
      %75 = vsyncadd [#allocation9], %s74
      %s76 = sshll.u32 [#allocation8], 4
      %s77 = int_to_ptr.vmem [resolvable:$true] %s76
      %82 = dma.hbm_to_vmem [thread:$0]  %s6, 2304, %s77, [#allocation9], 128, 128, 8
    $region29: #{model_forward.1} parent=1 // pred_fallthru
      _
    // Predicated region
    $region30: #{model_forward.1} parent=1 // pred_check
      _
    $region31: #{model_forward.1} parent=1 // pred_check_branch
      %84 = sbr.rel (0) target = $region33
    $region32: #{model_forward.1} parent=1 // pred_region
      _
    $region33: #{model_forward.1} parent=1 // pred_fallthru
      _
    // Predicated region
    $region34: #{model_forward.1} parent=1 // pred_check
      _
    $region35: #{model_forward.1} parent=1 // pred_check_branch
      %86 = sbr.rel (0) target = $region37
    $region36: #{model_forward.1} parent=1 // pred_region
      %s88 = ssub.s32 16, 16
      %89 = vsyncadd [#allocation9], %s88
      %s91 = sshll.u32 [#allocation10], 4
      %s92 = int_to_ptr.vmem [resolvable:$true] %s91
      %94 = dma.hbm_to_vmem [thread:$0]  %s8, 16, %s92, [#allocation9]
    $region37: #{model_forward.1} parent=1 // pred_fallthru
      _
    // Predicated region
    $region38: #{model_forward.1} parent=1 // pred_check
      _
    $region39: #{model_forward.1} parent=1 // pred_check_branch
      %96 = sbr.rel (0) target = $region41
    $region40: #{model_forward.1} parent=1 // pred_region
      _
    $region41: #{model_forward.1} parent=1 // pred_fallthru
      _
    // Predicated region
    $region42: #{model_forward.1} parent=1 // pred_check
      _
    $region43: #{model_forward.1} parent=1 // pred_check_branch
      %98 = sbr.rel (0) target = $region45
    $region44: #{model_forward.1} parent=1 // pred_region
      _
    $region45: #{model_forward.1} parent=1 // pred_fallthru
      _
    // Predicated region
    $region46: #{model_forward.1} parent=1 // pred_check
      _
    $region47: #{model_forward.1} parent=1 // pred_check_branch
      %100 = sbr.rel (0) target = $region49
    $region48: #{model_forward.1} parent=1 // pred_region
      _
    $region49: #{model_forward.1} parent=1 // pred_fallthru
      _
    // Predicated region
    $region50: #{model_forward.1} parent=1 // pred_check
      _
    $region51: #{model_forward.1} parent=1 // pred_check_branch
      %102 = sbr.rel (0) target = $region53
    $region52: #{model_forward.1} parent=1 // pred_region
      %s104 = ssub.s32 16, 16
      %105 = vsyncadd [#allocation12], %s104
      %s107 = sshll.u32 [#allocation11], 4
      %s108 = int_to_ptr.vmem [resolvable:$true] %s107
      %110 = dma.hbm_to_vmem [thread:$0]  %s12, 16, %s108, [#allocation12]
    $region53: #{model_forward.1} parent=1 // pred_fallthru
      _
    // Predicated region
    $region54: #{model_forward.1} parent=1 // pred_check
      _
    $region55: #{model_forward.1} parent=1 // pred_check_branch
      %112 = sbr.rel (0) target = $region57
    $region56: #{model_forward.1} parent=1 // pred_region
      %s114 = ssub.s32 2048, 2048
      %115 = vsyncadd [#allocation12], %s114
      %s116 = sshll.u32 [#allocation13], 4
      %s117 = int_to_ptr.vmem [resolvable:$true] %s116
      %122 = dma.hbm_to_vmem [thread:$0]  %s13, 2048, %s117, [#allocation12], 128, 128, 8
    $region57: #{model_forward.1} parent=1 // pred_fallthru
      _
    // Predicated region
    $region58: #{model_forward.1} parent=1 // pred_check
      _
    $region59: #{model_forward.1} parent=1 // pred_check_branch
      %124 = sbr.rel (0) target = $region61
    $region60: #{model_forward.1} parent=1 // pred_region
      %s126 = ssub.s32 16, 16
      %127 = vsyncadd [#allocation15], %s126
      %s129 = sshll.u32 [#allocation14], 4
      %s130 = int_to_ptr.vmem [resolvable:$true] %s129
      %132 = dma.hbm_to_vmem [thread:$0]  %s14, 16, %s130, [#allocation15]
    $region61: #{model_forward.1} parent=1 // pred_fallthru
      _
    // Predicated region
    $region62: #{model_forward.1} parent=1 // pred_check
      _
    $region63: #{model_forward.1} parent=1 // pred_check_branch
      %134 = sbr.rel (0) target = $region65
    $region64: #{model_forward.1} parent=1 // pred_region
      %s136 = ssub.s32 2048, 2048
      %137 = vsyncadd [#allocation15], %s136
      %s138 = sshll.u32 [#allocation16], 4
      %s139 = int_to_ptr.vmem [resolvable:$true] %s138
      %144 = dma.hbm_to_vmem [thread:$0]  %s15, 2048, %s139, [#allocation15], 128, 128, 8
    $region65: #{model_forward.1} parent=1 // pred_fallthru
      _
    // Predicated region
    $region66: #{model_forward.1} parent=1 // pred_check
      _
    $region67: #{model_forward.1} parent=1 // pred_check_branch
      %146 = sbr.rel (0) target = $region69
    $region68: #{model_forward.1} parent=1 // pred_region
      %s148 = ssub.s32 16, 16
      %149 = vsyncadd [#allocation18], %s148
      %s151 = sshll.u32 [#allocation17], 4
      %s152 = int_to_ptr.vmem [resolvable:$true] %s151
      %154 = dma.hbm_to_vmem [thread:$0]  %s16, 16, %s152, [#allocation18]
    $region69: #{model_forward.1} parent=1 // pred_fallthru
      _
    // Predicated region
    $region70: #{model_forward.1} parent=1 // pred_check
      _
    $region71: #{model_forward.1} parent=1 // pred_check_branch
      %156 = sbr.rel (0) target = $region73
    $region72: #{model_forward.1} parent=1 // pred_region
      %157 = dma.done [#allocation3], 5120
    $region73: #{model_forward.1} parent=1 // pred_fallthru
      _
    // Predicated region
    $region74: #{model_forward.1} parent=1 // pred_check
      _
    $region75: #{model_forward.1} parent=1 // pred_check_branch
      %159 = sbr.rel (0) target = $region77
    $region76: #{model_forward.1} parent=1 // pred_region
      %160 = dma.done [#allocation6], 256
    $region77: #{model_forward.1} parent=1 // pred_fallthru
      _
    // Predicated region
    $region78: #{model_forward.1} parent=1 // pred_check
      _
    $region79: #{model_forward.1} parent=1 // pred_check_branch
      %162 = sbr.rel (0) target = $region81
    $region80: #{model_forward.1} parent=1 // pred_region
      %163 = dma.done [#allocation6], 2304
    $region81: #{model_forward.1} parent=1 // pred_fallthru
      _
    // Predicated region
    $region82: #{model_forward.1} parent=1 // pred_check
      _
    $region83: #{model_forward.1} parent=1 // pred_check_branch
      %165 = sbr.rel (0) target = $region85
    $region84: #{model_forward.1} parent=1 // pred_region
      %166 = dma.done [#allocation9], 2304
    $region85: #{model_forward.1} parent=1 // pred_fallthru
      _
    // Predicated region
    $region86: #{model_forward.1} parent=1 // pred_check
      _
    $region87: #{model_forward.1} parent=1 // pred_check_branch
      %168 = sbr.rel (0) target = $region89
    $region88: #{model_forward.1} parent=1 // pred_region
      %169 = dma.done [#allocation9], 16
    $region89: #{model_forward.1} parent=1 // pred_fallthru
      _
    // Predicated region
    $region90: #{model_forward.1} parent=1 // pred_check
      _
    $region91: #{model_forward.1} parent=1 // pred_check_branch
      %171 = sbr.rel (0) target = $region93
    $region92: #{model_forward.1} parent=1 // pred_region
      %172 = dma.done [#allocation12], 16
    $region93: #{model_forward.1} parent=1 // pred_fallthru
      _
    // Predicated region
    $region94: #{model_forward.1} parent=1 // pred_check
      _
    $region95: #{model_forward.1} parent=1 // pred_check_branch
      %174 = sbr.rel (0) target = $region97
    $region96: #{model_forward.1} parent=1 // pred_region
      %175 = dma.done [#allocation12], 2048
    $region97: #{model_forward.1} parent=1 // pred_fallthru
      _
    // Predicated region
    $region98: #{model_forward.1} parent=1 // pred_check
      _
    $region99: #{model_forward.1} parent=1 // pred_check_branch
      %177 = sbr.rel (0) target = $region101
    $region100: #{model_forward.1} parent=1 // pred_region
      %178 = dma.done [#allocation15], 16
    $region101: #{model_forward.1} parent=1 // pred_fallthru
      _
    // Predicated region
    $region102: #{model_forward.1} parent=1 // pred_check
      _
    $region103: #{model_forward.1} parent=1 // pred_check_branch
      %180 = sbr.rel (0) target = $region105
    $region104: #{model_forward.1} parent=1 // pred_region
      %181 = dma.done [#allocation15], 2048
    $region105: #{model_forward.1} parent=1 // pred_fallthru
      _
    // Predicated region
    $region106: #{model_forward.1} parent=1 // pred_check
      _
    $region107: #{model_forward.1} parent=1 // pred_check_branch
      %183 = sbr.rel (0) target = $region109
    $region108: #{model_forward.1} parent=1 // pred_region
      %184 = dma.done [#allocation18], 16
    $region109: #{model_forward.1} parent=1 // pred_fallthru
      _
    %v185 = vld [vmem:[%s0] sm:$0xff]
    %v186 = vld [vmem:[%s0 + $0x8] sm:$0xff]
    %v187 = vld [vmem:[%s0 + $0x10] sm:$0xff]
    %v188 = vld [vmem:[%s0 + $0x18] sm:$0xf]
    %s189 = scalar_lea.vmem %s0, 32
    %v190 = vld [vmem:[%s189] sm:$0xff]
    %v191 = vld [vmem:[%s189 + $0x8] sm:$0xff]
    %v192 = vld [vmem:[%s189 + $0x10] sm:$0xff]
    %v193 = vld [vmem:[%s189 + $0x18] sm:$0xf]
    %vm194 = vcmask 228352
    %v195 = vsel %vm194, %v185, 0.0
    %v196 = vsel %vm194, %v186, 0.0
    %v197 = vadd.f32 %v195, %v196
    %v198 = vsel %vm194, %v187, 0.0
    %v199 = vadd.f32 %v197, %v198
    %vm200 = vcmask 224256
    %v201 = vsel %vm200, %v188, 0.0
    %v202 = vadd.f32 %v199, %v201
    %203 = vadd.xlane.f32.xlu0 %v202
    %v204 = vpop.xlane.xlu0 %203
    %v205 = vrot.slane %v204, 4
    %v206 = vadd.f32 %v204, %v205
    %v207 = vrot.slane %v206, 2
    %v208 = vadd.f32 %v206, %v207
    %v209 = vrot.slane %v208, 1
    %v210 = vadd.f32 %v208, %v209
    %s211 = vtos %v210
    %s212 = sadd.f32 %s211, 0.0
    %v213 = vsel %vm194, %v190, 0.0
    %v214 = vsel %vm194, %v191, 0.0
    %v215 = vadd.f32 %v213, %v214
    %v216 = vsel %vm194, %v192, 0.0
    %v217 = vadd.f32 %v215, %v216
    %v218 = vsel %vm200, %v193, 0.0
    %v219 = vadd.f32 %v217, %v218
    %220 = vadd.xlane.f32.xlu0 %v219
    %v221 = vpop.xlane.xlu0 %220
    %v222 = vrot.slane %v221, 4
    %v223 = vadd.f32 %v221, %v222
    %v224 = vrot.slane %v223, 2
    %v225 = vadd.f32 %v223, %v224
    %v226 = vrot.slane %v225, 1
    %v227 = vadd.f32 %v225, %v226
    %s228 = vtos %v227
    %s229 = sadd.f32 %s212, %s228
    %v230 = vrcp.pop 1568.0
    %s231 = vtos %v230
    %s232 = smul.f32 %s229, %s231
    %s233 = smul.f32 %s232, 2.0
    %v234 = vrcp.pop 2.6457512
    %s235 = vtos %v234
    %s236 = smul.f32 %s233, %s235
    %v237 = vstv %s236
    %v238 = vrcp.pop %v237
    %s239 = vtos %v238
    %v240 = vld [vmem:[%s2] sm:$0x3]
    %v241 = vstv %s239
    %v242 = vmul.f32 %v185, %v241
    %v243 = vmul.f32 %v186, %v241
    %v244 = vmul.f32 %v187, %v241
    %v245 = vmul.f32 %v188, %v241
    %v246 = vmax.f32 %v242, -8.0
    %v247 = vmax.f32 %v243, -8.0
    %v248 = vmax.f32 %v244, -8.0
    %v249 = vmax.f32 %v245, -8.0
    %v250 = vmin.f32 %v246, 7.0
    %v251 = vmin.f32 %v247, 7.0
    %v252 = vmin.f32 %v248, 7.0
    %v253 = vmin.f32 %v249, 7.0
    %v254 = vround.ne.pseudo %v250
    %v255 = vround.ne.pseudo %v251
    %v256 = vround.ne.pseudo %v252
    %v257 = vround.ne.pseudo %v253
    %v258 = vstv %s236
    %v259 = vmul.f32 %v254, %v258
    %v260 = vmul.f32 %v255, %v258
    %v261 = vmul.f32 %v256, %v258
    %v262 = vmul.f32 %v257, %v258
    %v263 = vld [vmem:[#allocation2] sm:$0xff]
    %v264 = vld [vmem:[#allocation2 + $0x8] sm:$0xff]
    %v265 = vld [vmem:[#allocation2 + $0x10] sm:$0xff]
    %v266 = vld [vmem:[#allocation2 + $0x18] sm:$0xff]
    %v267 = vld [vmem:[#allocation2 + $0x20] sm:$0xff]
    %v268 = vld [vmem:[#allocation2 + $0x28] sm:$0xff]
    %v269 = vld [vmem:[#allocation2 + $0x30] sm:$0xf]
    %v270 = vld [vmem:[#allocation2 + $0x38] sm:$0xf]
    %v272 = vsel %vm194, %v259, 0
    %v275 = vsel %vm194, %v260, 0
    %v278 = vsel %vm194, %v261, 0
    %vm280 = vcmask 1043456
    %v282 = vsel %vm280, %v269, 0
    %v285 = vsel %vm280, %v270, 0
    %287 = vmatprep.subr.mxu0 0.0
    %288 = vmatpush1.msra.mxu0 0.0
    %289 = vmatprep.subr.mxu0 0.0
    %290 = vmatpush1.msra.mxu0 0.0
    %291 = vmatprep.subr.mxu0 0.0
    %292 = vmatpush1.msra.mxu0 0.0
    %293 = vmatprep.subr.mxu0 0.0
    %294 = vmatpush1.msra.mxu0 0.0
    %295 = vmatprep.subr.mxu0 0.0
    %296 = vmatpush1.msra.mxu0 0.0
    %297 = vmatprep.subr.mxu0 0.0
    %298 = vmatpush1.msra.mxu0 0.0
    %299 = vmatprep.subr.mxu0 0.0
    %300 = vmatpush1.msra.mxu0 0.0
    %301 = vmatprep.subr.mxu0 0.0
    %302 = vmatpush1.msra.mxu0 0.0
    %303 = vmatprep.subr.mxu0 0.0
    %304 = vmatpush1.msra.mxu0 0.0
    %305 = vmatprep.subr.mxu0 0.0
    %306 = vmatpush1.msra.mxu0 0.0
    %307 = vmatprep.subr.mxu0 0.0
    %308 = vmatpush1.msra.mxu0 0.0
    %309 = vmatprep.subr.mxu0 0.0
    %310 = vmatpush1.msra.mxu0 0.0
    %311 = vmatprep.subr.mxu0 %v285
    %312 = vmatpush1.msra.mxu0 %v282
    %313 = vmatprep.subr.mxu0 %v268
    %314 = vmatpush1.msra.mxu0 %v267
    %315 = vmatprep.subr.mxu0 %v266
    %316 = vmatpush1.msra.mxu0 %v265
    %317 = vmatprep.subr.mxu0 %v264
    %318 = vmatpush1.msra.mxu0 %v263
    %319 = vmatprep.subr.mxu0 0.0
    %320 = vmatpush2.msra.mxu0 0.0
    %321 = vmatprep.subr.mxu0 0.0
    %322 = vmatpush2.msra.mxu0 0.0
    %323 = vmatprep.subr.mxu0 0.0
    %324 = vmatpush2.msra.mxu0 0.0
    %325 = vmatprep.subr.mxu0 0.0
    %326 = vmatpush2.msra.mxu0 0.0
    %327 = vmatprep.subr.mxu0 0.0
    %328 = vmatpush2.msra.mxu0 0.0
    %329 = vmatprep.subr.mxu0 0.0
    %330 = vmatpush2.msra.mxu0 0.0
    %331 = vmatprep.subr.mxu0 0.0
    %332 = vmatpush2.msra.mxu0 0.0
    %333 = vmatprep.subr.mxu0 0.0
    %334 = vmatpush2.msra.mxu0 0.0
    %335 = vmatprep.subr.mxu0 0.0
    %336 = vmatpush2.msra.mxu0 0.0
    %337 = vmatprep.subr.mxu0 0.0
    %338 = vmatpush2.msra.mxu0 0.0
    %339 = vmatprep.subr.mxu0 0.0
    %340 = vmatpush2.msra.mxu0 0.0
    %341 = vmatprep.subr.mxu0 0.0
    %342 = vmatpush2.msra.mxu0 0.0
    %343 = vmatprep.subr.mxu0 0.0
    %344 = vmatpush2.msra.mxu0 0.0
    %345 = vmatprep.subr.mxu0 0.0
    %346 = vmatpush2.msra.mxu0 0.0
    %347 = vmatprep.subr.mxu0 0.0
    %348 = vmatpush2.msra.mxu0 0.0
    %349 = vmatprep.subr.mxu0 0.0
    %350 = vmatpush2.msra.mxu0 0.0
    %351 = vmatprep.mubr.f32.mxu0 0.0
    %352 = vmatmul.mubr.f32.gmra.mxu0 %v272
    %v353 = vpop.f32.mrf.mxu0
    %v354 = vadd.f32 0.0, %v353
    %v355 = vpop.f32.mrf.mxu0
    %v356 = vadd.f32 0.0, %v355
    %357 = vmatprep.mubr.f32.mxu0 0.0
    %358 = vmatmul.mubr.f32.gmra.mxu0 %v275
    %v359 = vpop.f32.mrf.mxu0
    %v360 = vadd.f32 0.0, %v359
    %v361 = vpop.f32.mrf.mxu0
    %v362 = vadd.f32 0.0, %v361
    %363 = vmatprep.mubr.f32.mxu0 0.0
    %364 = vmatmul.mubr.f32.gmra.mxu0 %v278
    %v365 = vpop.f32.mrf.mxu0
    %v366 = vadd.f32 0.0, %v365
    %v367 = vpop.f32.mrf.mxu0
    %v368 = vadd.f32 0.0, %v367
    %369 = vdwg.mxu0
    %v371 = vlaneseq
    %v372 = vshrl.u32 %v371, 7
    %v373 = vsub.s32 0, %v372
    %v374 = vrot.slane %v240, %v373
    %v375 = vlaneseq
    %v376 = vshrl.u32 %v375, 7
    %v377 = vsub.s32 1, %v376
    %v378 = vrot.slane %v240, %v377
    %v381 = vadd.f32 %v374, %v354
    %v382 = vadd.f32 %v378, %v356
    %v383 = vadd.f32 %v374, %v360
    %v384 = vadd.f32 %v378, %v362
    %v385 = vadd.f32 %v374, %v366
    %v386 = vadd.f32 %v378, %v368
    %s387 = scalar_lea.vmem [#allocation2], 64
    %v388 = vld [vmem:[%s387] sm:$0xff]
    %v389 = vld [vmem:[%s387 + $0x8] sm:$0xff]
    %v390 = vld [vmem:[%s387 + $0x10] sm:$0xff]
    %v391 = vld [vmem:[%s387 + $0x18] sm:$0xff]
    %v392 = vld [vmem:[%s387 + $0x20] sm:$0xff]
    %v393 = vld [vmem:[%s387 + $0x28] sm:$0xff]
    %v394 = vld [vmem:[%s387 + $0x30] sm:$0xf]
    %v395 = vld [vmem:[%s387 + $0x38] sm:$0xf]
    %vm397 = vcmask 1046528
    %v398 = vrot.slane %v259, 1
    %v399 = vrot.slane %v260, 1
    %v400 = vsel %vm397, %v398, %v399
    %v401 = vrot.slane %v261, 1
    %v402 = vsel %vm397, %v399, %v401
    %v403 = vrot.slane %v262, 1
    %v404 = vsel %vm397, %v401, %v403
    %v405 = vsel %vm194, %v400, 0
    %v407 = vsel %vm194, %v402, 0
    %v409 = vsel %vm194, %v404, 0
    %v412 = vsel %vm280, %v394, 0
    %v415 = vsel %vm280, %v395, 0
    %417 = vmatprep.subr.mxu0 0.0
    %418 = vmatpush1.msra.mxu0 0.0
    %419 = vmatprep.subr.mxu0 0.0
    %420 = vmatpush1.msra.mxu0 0.0
    %421 = vmatprep.subr.mxu0 0.0
    %422 = vmatpush1.msra.mxu0 0.0
    %423 = vmatprep.subr.mxu0 0.0
    %424 = vmatpush1.msra.mxu0 0.0
    %425 = vmatprep.subr.mxu0 0.0
    %426 = vmatpush1.msra.mxu0 0.0
    %427 = vmatprep.subr.mxu0 0.0
    %428 = vmatpush1.msra.mxu0 0.0
    %429 = vmatprep.subr.mxu0 0.0
    %430 = vmatpush1.msra.mxu0 0.0
    %431 = vmatprep.subr.mxu0 0.0
    %432 = vmatpush1.msra.mxu0 0.0
    %433 = vmatprep.subr.mxu0 0.0
    %434 = vmatpush1.msra.mxu0 0.0
    %435 = vmatprep.subr.mxu0 0.0
    %436 = vmatpush1.msra.mxu0 0.0
    %437 = vmatprep.subr.mxu0 0.0
    %438 = vmatpush1.msra.mxu0 0.0
    %439 = vmatprep.subr.mxu0 0.0
    %440 = vmatpush1.msra.mxu0 0.0
    %441 = vmatprep.subr.mxu0 %v415
    %442 = vmatpush1.msra.mxu0 %v412
    %443 = vmatprep.subr.mxu0 %v393
    %444 = vmatpush1.msra.mxu0 %v392
    %445 = vmatprep.subr.mxu0 %v391
    %446 = vmatpush1.msra.mxu0 %v390
    %447 = vmatprep.subr.mxu0 %v389
    %448 = vmatpush1.msra.mxu0 %v388
    %449 = vmatprep.subr.mxu0 0.0
    %450 = vmatpush2.msra.mxu0 0.0
    %451 = vmatprep.subr.mxu0 0.0
    %452 = vmatpush2.msra.mxu0 0.0
    %453 = vmatprep.subr.mxu0 0.0
    %454 = vmatpush2.msra.mxu0 0.0
    %455 = vmatprep.subr.mxu0 0.0
    %456 = vmatpush2.msra.mxu0 0.0
    %457 = vmatprep.subr.mxu0 0.0
    %458 = vmatpush2.msra.mxu0 0.0
    %459 = vmatprep.subr.mxu0 0.0
    %460 = vmatpush2.msra.mxu0 0.0
    %461 = vmatprep.subr.mxu0 0.0
    %462 = vmatpush2.msra.mxu0 0.0
    %463 = vmatprep.subr.mxu0 0.0
    %464 = vmatpush2.msra.mxu0 0.0
    %465 = vmatprep.subr.mxu0 0.0
    %466 = vmatpush2.msra.mxu0 0.0
    %467 = vmatprep.subr.mxu0 0.0
    %468 = vmatpush2.msra.mxu0 0.0
    %469 = vmatprep.subr.mxu0 0.0
    %470 = vmatpush2.msra.mxu0 0.0
    %471 = vmatprep.subr.mxu0 0.0
    %472 = vmatpush2.msra.mxu0 0.0
    %473 = vmatprep.subr.mxu0 0.0
    %474 = vmatpush2.msra.mxu0 0.0
    %475 = vmatprep.subr.mxu0 0.0
    %476 = vmatpush2.msra.mxu0 0.0
    %477 = vmatprep.subr.mxu0 0.0
    %478 = vmatpush2.msra.mxu0 0.0
    %479 = vmatprep.subr.mxu0 0.0
    %480 = vmatpush2.msra.mxu0 0.0
    %481 = vmatprep.mubr.f32.mxu0 0.0
    %482 = vmatmul.mubr.f32.gmra.mxu0 %v405
    %v483 = vpop.f32.mrf.mxu0
    %v484 = vadd.f32 0.0, %v483
    %v485 = vpop.f32.mrf.mxu0
    %v486 = vadd.f32 0.0, %v485
    %487 = vmatprep.mubr.f32.mxu0 0.0
    %488 = vmatmul.mubr.f32.gmra.mxu0 %v407
    %v489 = vpop.f32.mrf.mxu0
    %v490 = vadd.f32 0.0, %v489
    %v491 = vpop.f32.mrf.mxu0
    %v492 = vadd.f32 0.0, %v491
    %493 = vmatprep.mubr.f32.mxu0 0.0
    %494 = vmatmul.mubr.f32.gmra.mxu0 %v409
    %v495 = vpop.f32.mrf.mxu0
    %v496 = vadd.f32 0.0, %v495
    %v497 = vpop.f32.mrf.mxu0
    %v498 = vadd.f32 0.0, %v497
    %499 = vdwg.mxu0
    %v500 = vadd.f32 %v381, %v484
    %v501 = vadd.f32 %v382, %v486
    %v502 = vadd.f32 %v383, %v490
    %v503 = vadd.f32 %v384, %v492
    %v504 = vadd.f32 %v385, %v496
    %v505 = vadd.f32 %v386, %v498
    %s506 = scalar_lea.vmem [#allocation2], 128
    %v507 = vld [vmem:[%s506] sm:$0xff]
    %v508 = vld [vmem:[%s506 + $0x8] sm:$0xff]
    %v509 = vld [vmem:[%s506 + $0x10] sm:$0xff]
    %v510 = vld [vmem:[%s506 + $0x18] sm:$0xff]
    %v511 = vld [vmem:[%s506 + $0x20] sm:$0xff]
    %v512 = vld [vmem:[%s506 + $0x28] sm:$0xff]
    %v513 = vld [vmem:[%s506 + $0x30] sm:$0xf]
    %v514 = vld [vmem:[%s506 + $0x38] sm:$0xf]
    %vm515 = vcmask 1045504
    %v516 = vrot.slane %v259, 2
    %v517 = vrot.slane %v260, 2
    %v518 = vsel %vm515, %v516, %v517
    %v519 = vrot.slane %v261, 2
    %v520 = vsel %vm515, %v517, %v519
    %v521 = vrot.slane %v262, 2
    %v522 = vsel %vm515, %v519, %v521
    %v523 = vsel %vm194, %v518, 0
    %v525 = vsel %vm194, %v520, 0
    %v527 = vsel %vm194, %v522, 0
    %v530 = vsel %vm280, %v513, 0
    %v533 = vsel %vm280, %v514, 0
    %535 = vmatprep.subr.mxu0 0.0
    %536 = vmatpush1.msra.mxu0 0.0
    %537 = vmatprep.subr.mxu0 0.0
    %538 = vmatpush1.msra.mxu0 0.0
    %539 = vmatprep.subr.mxu0 0.0
    %540 = vmatpush1.msra.mxu0 0.0
    %541 = vmatprep.subr.mxu0 0.0
    %542 = vmatpush1.msra.mxu0 0.0
    %543 = vmatprep.subr.mxu0 0.0
    %544 = vmatpush1.msra.mxu0 0.0
    %545 = vmatprep.subr.mxu0 0.0
    %546 = vmatpush1.msra.mxu0 0.0
    %547 = vmatprep.subr.mxu0 0.0
    %548 = vmatpush1.msra.mxu0 0.0
    %549 = vmatprep.subr.mxu0 0.0
    %550 = vmatpush1.msra.mxu0 0.0
    %551 = vmatprep.subr.mxu0 0.0
    %552 = vmatpush1.msra.mxu0 0.0
    %553 = vmatprep.subr.mxu0 0.0
    %554 = vmatpush1.msra.mxu0 0.0
    %555 = vmatprep.subr.mxu0 0.0
    %556 = vmatpush1.msra.mxu0 0.0
    %557 = vmatprep.subr.mxu0 0.0
    %558 = vmatpush1.msra.mxu0 0.0
    %559 = vmatprep.subr.mxu0 %v533
    %560 = vmatpush1.msra.mxu0 %v530
    %561 = vmatprep.subr.mxu0 %v512
    %562 = vmatpush1.msra.mxu0 %v511
    %563 = vmatprep.subr.mxu0 %v510
    %564 = vmatpush1.msra.mxu0 %v509
    %565 = vmatprep.subr.mxu0 %v508
    %566 = vmatpush1.msra.mxu0 %v507
    %567 = vmatprep.subr.mxu0 0.0
    %568 = vmatpush2.msra.mxu0 0.0
    %569 = vmatprep.subr.mxu0 0.0
    %570 = vmatpush2.msra.mxu0 0.0
    %571 = vmatprep.subr.mxu0 0.0
    %572 = vmatpush2.msra.mxu0 0.0
    %573 = vmatprep.subr.mxu0 0.0
    %574 = vmatpush2.msra.mxu0 0.0
    %575 = vmatprep.subr.mxu0 0.0
    %576 = vmatpush2.msra.mxu0 0.0
    %577 = vmatprep.subr.mxu0 0.0
    %578 = vmatpush2.msra.mxu0 0.0
    %579 = vmatprep.subr.mxu0 0.0
    %580 = vmatpush2.msra.mxu0 0.0
    %581 = vmatprep.subr.mxu0 0.0
    %582 = vmatpush2.msra.mxu0 0.0
    %583 = vmatprep.subr.mxu0 0.0
    %584 = vmatpush2.msra.mxu0 0.0
    %585 = vmatprep.subr.mxu0 0.0
    %586 = vmatpush2.msra.mxu0 0.0
    %587 = vmatprep.subr.mxu0 0.0
    %588 = vmatpush2.msra.mxu0 0.0
    %589 = vmatprep.subr.mxu0 0.0
    %590 = vmatpush2.msra.mxu0 0.0
    %591 = vmatprep.subr.mxu0 0.0
    %592 = vmatpush2.msra.mxu0 0.0
    %593 = vmatprep.subr.mxu0 0.0
    %594 = vmatpush2.msra.mxu0 0.0
    %595 = vmatprep.subr.mxu0 0.0
    %596 = vmatpush2.msra.mxu0 0.0
    %597 = vmatprep.subr.mxu0 0.0
    %598 = vmatpush2.msra.mxu0 0.0
    %599 = vmatprep.mubr.f32.mxu0 0.0
    %600 = vmatmul.mubr.f32.gmra.mxu0 %v523
    %v601 = vpop.f32.mrf.mxu0
    %v602 = vadd.f32 0.0, %v601
    %v603 = vpop.f32.mrf.mxu0
    %v604 = vadd.f32 0.0, %v603
    %605 = vmatprep.mubr.f32.mxu0 0.0
    %606 = vmatmul.mubr.f32.gmra.mxu0 %v525
    %v607 = vpop.f32.mrf.mxu0
    %v608 = vadd.f32 0.0, %v607
    %v609 = vpop.f32.mrf.mxu0
    %v610 = vadd.f32 0.0, %v609
    %611 = vmatprep.mubr.f32.mxu0 0.0
    %612 = vmatmul.mubr.f32.gmra.mxu0 %v527
    %v613 = vpop.f32.mrf.mxu0
    %v614 = vadd.f32 0.0, %v613
    %v615 = vpop.f32.mrf.mxu0
    %v616 = vadd.f32 0.0, %v615
    %617 = vdwg.mxu0
    %v618 = vadd.f32 %v500, %v602
    %v619 = vadd.f32 %v501, %v604
    %v620 = vadd.f32 %v502, %v608
    %v621 = vadd.f32 %v503, %v610
    %v622 = vadd.f32 %v504, %v614
    %v623 = vadd.f32 %v505, %v616
    %s624 = scalar_lea.vmem [#allocation2], 192
    %v625 = vld [vmem:[%s624] sm:$0xff]
    %v626 = vld [vmem:[%s624 + $0x8] sm:$0xff]
    %v627 = vld [vmem:[%s624 + $0x10] sm:$0xff]
    %v628 = vld [vmem:[%s624 + $0x18] sm:$0xff]
    %v629 = vld [vmem:[%s624 + $0x20] sm:$0xff]
    %v630 = vld [vmem:[%s624 + $0x28] sm:$0xff]
    %v631 = vld [vmem:[%s624 + $0x30] sm:$0xf]
    %v632 = vld [vmem:[%s624 + $0x38] sm:$0xf]
    %vm633 = vcmask 1044480
    %v634 = vrot.slane %v259, 3
    %v635 = vrot.slane %v260, 3
    %v636 = vsel %vm633, %v634, %v635
    %v637 = vrot.slane %v261, 3
    %v638 = vsel %vm633, %v635, %v637
    %v639 = vrot.slane %v262, 3
    %v640 = vsel %vm633, %v637, %v639
    %v641 = vsel %vm194, %v636, 0
    %v643 = vsel %vm194, %v638, 0
    %v645 = vsel %vm194, %v640, 0
    %v648 = vsel %vm280, %v631, 0
    %v651 = vsel %vm280, %v632, 0
    %653 = vmatprep.subr.mxu0 0.0
    %654 = vmatpush1.msra.mxu0 0.0
    %655 = vmatprep.subr.mxu0 0.0
    %656 = vmatpush1.msra.mxu0 0.0
    %657 = vmatprep.subr.mxu0 0.0
    %658 = vmatpush1.msra.mxu0 0.0
    %659 = vmatprep.subr.mxu0 0.0
    %660 = vmatpush1.msra.mxu0 0.0
    %661 = vmatprep.subr.mxu0 0.0
    %662 = vmatpush1.msra.mxu0 0.0
    %663 = vmatprep.subr.mxu0 0.0
    %664 = vmatpush1.msra.mxu0 0.0
    %665 = vmatprep.subr.mxu0 0.0
    %666 = vmatpush1.msra.mxu0 0.0
    %667 = vmatprep.subr.mxu0 0.0
    %668 = vmatpush1.msra.mxu0 0.0
    %669 = vmatprep.subr.mxu0 0.0
    %670 = vmatpush1.msra.mxu0 0.0
    %671 = vmatprep.subr.mxu0 0.0
    %672 = vmatpush1.msra.mxu0 0.0
    %673 = vmatprep.subr.mxu0 0.0
    %674 = vmatpush1.msra.mxu0 0.0
    %675 = vmatprep.subr.mxu0 0.0
    %676 = vmatpush1.msra.mxu0 0.0
    %677 = vmatprep.subr.mxu0 %v651
    %678 = vmatpush1.msra.mxu0 %v648
    %679 = vmatprep.subr.mxu0 %v630
    %680 = vmatpush1.msra.mxu0 %v629
    %681 = vmatprep.subr.mxu0 %v628
    %682 = vmatpush1.msra.mxu0 %v627
    %683 = vmatprep.subr.mxu0 %v626
    %684 = vmatpush1.msra.mxu0 %v625
    %685 = vmatprep.subr.mxu0 0.0
    %686 = vmatpush2.msra.mxu0 0.0
    %687 = vmatprep.subr.mxu0 0.0
    %688 = vmatpush2.msra.mxu0 0.0
    %689 = vmatprep.subr.mxu0 0.0
    %690 = vmatpush2.msra.mxu0 0.0
    %691 = vmatprep.subr.mxu0 0.0
    %692 = vmatpush2.msra.mxu0 0.0
    %693 = vmatprep.subr.mxu0 0.0
    %694 = vmatpush2.msra.mxu0 0.0
    %695 = vmatprep.subr.mxu0 0.0
    %696 = vmatpush2.msra.mxu0 0.0
    %697 = vmatprep.subr.mxu0 0.0
    %698 = vmatpush2.msra.mxu0 0.0
    %699 = vmatprep.subr.mxu0 0.0
    %700 = vmatpush2.msra.mxu0 0.0
    %701 = vmatprep.subr.mxu0 0.0
    %702 = vmatpush2.msra.mxu0 0.0
    %703 = vmatprep.subr.mxu0 0.0
    %704 = vmatpush2.msra.mxu0 0.0
    %705 = vmatprep.subr.mxu0 0.0
    %706 = vmatpush2.msra.mxu0 0.0
    %707 = vmatprep.subr.mxu0 0.0
    %708 = vmatpush2.msra.mxu0 0.0
    %709 = vmatprep.subr.mxu0 0.0
    %710 = vmatpush2.msra.mxu0 0.0
    %711 = vmatprep.subr.mxu0 0.0
    %712 = vmatpush2.msra.mxu0 0.0
    %713 = vmatprep.subr.mxu0 0.0
    %714 = vmatpush2.msra.mxu0 0.0
    %715 = vmatprep.subr.mxu0 0.0
    %716 = vmatpush2.msra.mxu0 0.0
    %717 = vmatprep.mubr.f32.mxu0 0.0
    %718 = vmatmul.mubr.f32.gmra.mxu0 %v641
    %v719 = vpop.f32.mrf.mxu0
    %v720 = vadd.f32 0.0, %v719
    %v721 = vpop.f32.mrf.mxu0
    %v722 = vadd.f32 0.0, %v721
    %723 = vmatprep.mubr.f32.mxu0 0.0
    %724 = vmatmul.mubr.f32.gmra.mxu0 %v643
    %v725 = vpop.f32.mrf.mxu0
    %v726 = vadd.f32 0.0, %v725
    %v727 = vpop.f32.mrf.mxu0
    %v728 = vadd.f32 0.0, %v727
    %729 = vmatprep.mubr.f32.mxu0 0.0
    %730 = vmatmul.mubr.f32.gmra.mxu0 %v645
    %v731 = vpop.f32.mrf.mxu0
    %v732 = vadd.f32 0.0, %v731
    %v733 = vpop.f32.mrf.mxu0
    %v734 = vadd.f32 0.0, %v733
    %735 = vdwg.mxu0
    %v736 = vadd.f32 %v618, %v720
    %v737 = vadd.f32 %v619, %v722
    %v738 = vadd.f32 %v620, %v726
    %v739 = vadd.f32 %v621, %v728
    %v740 = vadd.f32 %v622, %v732
    %v741 = vadd.f32 %v623, %v734
    %s742 = scalar_lea.vmem [#allocation2], 256
    %v743 = vld [vmem:[%s742] sm:$0xff]
    %v744 = vld [vmem:[%s742 + $0x8] sm:$0xff]
    %v745 = vld [vmem:[%s742 + $0x10] sm:$0xff]
    %v746 = vld [vmem:[%s742 + $0x18] sm:$0xff]
    %v747 = vld [vmem:[%s742 + $0x20] sm:$0xff]
    %v748 = vld [vmem:[%s742 + $0x28] sm:$0xff]
    %v749 = vld [vmem:[%s742 + $0x30] sm:$0xf]
    %v750 = vld [vmem:[%s742 + $0x38] sm:$0xf]
    %v751 = vrot.slane %v259, 4
    %v752 = vrot.slane %v260, 4
    %v753 = vsel %vm280, %v751, %v752
    %v754 = vrot.slane %v261, 4
    %v755 = vsel %vm280, %v752, %v754
    %v756 = vrot.slane %v262, 4
    %v757 = vsel %vm280, %v754, %v756
    %v758 = vsel %vm194, %v753, 0
    %v760 = vsel %vm194, %v755, 0
    %v762 = vsel %vm194, %v757, 0
    %v765 = vsel %vm280, %v749, 0
    %v768 = vsel %vm280, %v750, 0
    %770 = vmatprep.subr.mxu0 0.0
    %771 = vmatpush1.msra.mxu0 0.0
    %772 = vmatprep.subr.mxu0 0.0
    %773 = vmatpush1.msra.mxu0 0.0
    %774 = vmatprep.subr.mxu0 0.0
    %775 = vmatpush1.msra.mxu0 0.0
    %776 = vmatprep.subr.mxu0 0.0
    %777 = vmatpush1.msra.mxu0 0.0
    %778 = vmatprep.subr.mxu0 0.0
    %779 = vmatpush1.msra.mxu0 0.0
    %780 = vmatprep.subr.mxu0 0.0
    %781 = vmatpush1.msra.mxu0 0.0
    %782 = vmatprep.subr.mxu0 0.0
    %783 = vmatpush1.msra.mxu0 0.0
    %784 = vmatprep.subr.mxu0 0.0
    %785 = vmatpush1.msra.mxu0 0.0
    %786 = vmatprep.subr.mxu0 0.0
    %787 = vmatpush1.msra.mxu0 0.0
    %788 = vmatprep.subr.mxu0 0.0
    %789 = vmatpush1.msra.mxu0 0.0
    %790 = vmatprep.subr.mxu0 0.0
    %791 = vmatpush1.msra.mxu0 0.0
    %792 = vmatprep.subr.mxu0 0.0
    %793 = vmatpush1.msra.mxu0 0.0
    %794 = vmatprep.subr.mxu0 %v768
    %795 = vmatpush1.msra.mxu0 %v765
    %796 = vmatprep.subr.mxu0 %v748
    %797 = vmatpush1.msra.mxu0 %v747
    %798 = vmatprep.subr.mxu0 %v746
    %799 = vmatpush1.msra.mxu0 %v745
    %800 = vmatprep.subr.mxu0 %v744
    %801 = vmatpush1.msra.mxu0 %v743
    %802 = vmatprep.subr.mxu0 0.0
    %803 = vmatpush2.msra.mxu0 0.0
    %804 = vmatprep.subr.mxu0 0.0
    %805 = vmatpush2.msra.mxu0 0.0
    %806 = vmatprep.subr.mxu0 0.0
    %807 = vmatpush2.msra.mxu0 0.0
    %808 = vmatprep.subr.mxu0 0.0
    %809 = vmatpush2.msra.mxu0 0.0
    %810 = vmatprep.subr.mxu0 0.0
    %811 = vmatpush2.msra.mxu0 0.0
    %812 = vmatprep.subr.mxu0 0.0
    %813 = vmatpush2.msra.mxu0 0.0
    %814 = vmatprep.subr.mxu0 0.0
    %815 = vmatpush2.msra.mxu0 0.0
    %816 = vmatprep.subr.mxu0 0.0
    %817 = vmatpush2.msra.mxu0 0.0
    %818 = vmatprep.subr.mxu0 0.0
    %819 = vmatpush2.msra.mxu0 0.0
    %820 = vmatprep.subr.mxu0 0.0
    %821 = vmatpush2.msra.mxu0 0.0
    %822 = vmatprep.subr.mxu0 0.0
    %823 = vmatpush2.msra.mxu0 0.0
    %824 = vmatprep.subr.mxu0 0.0
    %825 = vmatpush2.msra.mxu0 0.0
    %826 = vmatprep.subr.mxu0 0.0
    %827 = vmatpush2.msra.mxu0 0.0
    %828 = vmatprep.subr.mxu0 0.0
    %829 = vmatpush2.msra.mxu0 0.0
    %830 = vmatprep.subr.mxu0 0.0
    %831 = vmatpush2.msra.mxu0 0.0
    %832 = vmatprep.subr.mxu0 0.0
    %833 = vmatpush2.msra.mxu0 0.0
    %834 = vmatprep.mubr.f32.mxu0 0.0
    %835 = vmatmul.mubr.f32.gmra.mxu0 %v758
    %v836 = vpop.f32.mrf.mxu0
    %v837 = vadd.f32 0.0, %v836
    %v838 = vpop.f32.mrf.mxu0
    %v839 = vadd.f32 0.0, %v838
    %840 = vmatprep.mubr.f32.mxu0 0.0
    %841 = vmatmul.mubr.f32.gmra.mxu0 %v760
    %v842 = vpop.f32.mrf.mxu0
    %v843 = vadd.f32 0.0, %v842
    %v844 = vpop.f32.mrf.mxu0
    %v845 = vadd.f32 0.0, %v844
    %846 = vmatprep.mubr.f32.mxu0 0.0
    %847 = vmatmul.mubr.f32.gmra.mxu0 %v762
    %v848 = vpop.f32.mrf.mxu0
    %v849 = vadd.f32 0.0, %v848
    %v850 = vpop.f32.mrf.mxu0
    %v851 = vadd.f32 0.0, %v850
    %852 = vdwg.mxu0
    %v853 = vadd.f32 %v736, %v837
    %v854 = vadd.f32 %v737, %v839
    %v855 = vadd.f32 %v738, %v843
    %v856 = vadd.f32 %v739, %v845
    %v857 = vadd.f32 %v740, %v849
    %v858 = vadd.f32 %v741, %v851
    %v859 = vmax.f32 %v853, 0.0
    %v860 = vmax.f32 %v854, 0.0
    %v861 = vmax.f32 %v855, 0.0
    %v862 = vmax.f32 %v856, 0.0
    %v863 = vmax.f32 %v857, 0.0
    %v864 = vmax.f32 %v858, 0.0
    %v865 = vmul.f32 %v190, %v241
    %v866 = vmul.f32 %v191, %v241
    %v867 = vmul.f32 %v192, %v241
    %v868 = vmul.f32 %v193, %v241
    %v869 = vmax.f32 %v865, -8.0
    %v870 = vmax.f32 %v866, -8.0
    %v871 = vmax.f32 %v867, -8.0
    %v872 = vmax.f32 %v868, -8.0
    %v873 = vmin.f32 %v869, 7.0
    %v874 = vmin.f32 %v870, 7.0
    %v875 = vmin.f32 %v871, 7.0
    %v876 = vmin.f32 %v872, 7.0
    %v877 = vround.ne.pseudo %v873
    %v878 = vround.ne.pseudo %v874
    %v879 = vround.ne.pseudo %v875
    %v880 = vround.ne.pseudo %v876
    %v881 = vmul.f32 %v877, %v258
    %v882 = vmul.f32 %v878, %v258
    %v883 = vmul.f32 %v879, %v258
    %v884 = vmul.f32 %v880, %v258
    %v886 = vsel %vm194, %v881, 0
    %v889 = vsel %vm194, %v882, 0
    %v892 = vsel %vm194, %v883, 0
    %894 = vmatprep.subr.mxu0 0.0
    %895 = vmatpush1.msra.mxu0 0.0
    %896 = vmatprep.subr.mxu0 0.0
    %897 = vmatpush1.msra.mxu0 0.0
    %898 = vmatprep.subr.mxu0 0.0
    %899 = vmatpush1.msra.mxu0 0.0
    %900 = vmatprep.subr.mxu0 0.0
    %901 = vmatpush1.msra.mxu0 0.0
    %902 = vmatprep.subr.mxu0 0.0
    %903 = vmatpush1.msra.mxu0 0.0
    %904 = vmatprep.subr.mxu0 0.0
    %905 = vmatpush1.msra.mxu0 0.0
    %906 = vmatprep.subr.mxu0 0.0
    %907 = vmatpush1.msra.mxu0 0.0
    %908 = vmatprep.subr.mxu0 0.0
    %909 = vmatpush1.msra.mxu0 0.0
    %910 = vmatprep.subr.mxu0 0.0
    %911 = vmatpush1.msra.mxu0 0.0
    %912 = vmatprep.subr.mxu0 0.0
    %913 = vmatpush1.msra.mxu0 0.0
    %914 = vmatprep.subr.mxu0 0.0
    %915 = vmatpush1.msra.mxu0 0.0
    %916 = vmatprep.subr.mxu0 0.0
    %917 = vmatpush1.msra.mxu0 0.0
    %918 = vmatprep.subr.mxu0 %v285
    %919 = vmatpush1.msra.mxu0 %v282
    %920 = vmatprep.subr.mxu0 %v268
    %921 = vmatpush1.msra.mxu0 %v267
    %922 = vmatprep.subr.mxu0 %v266
    %923 = vmatpush1.msra.mxu0 %v265
    %924 = vmatprep.subr.mxu0 %v264
    %925 = vmatpush1.msra.mxu0 %v263
    %926 = vmatprep.subr.mxu0 0.0
    %927 = vmatpush2.msra.mxu0 0.0
    %928 = vmatprep.subr.mxu0 0.0
    %929 = vmatpush2.msra.mxu0 0.0
    %930 = vmatprep.subr.mxu0 0.0
    %931 = vmatpush2.msra.mxu0 0.0
    %932 = vmatprep.subr.mxu0 0.0
    %933 = vmatpush2.msra.mxu0 0.0
    %934 = vmatprep.subr.mxu0 0.0
    %935 = vmatpush2.msra.mxu0 0.0
    %936 = vmatprep.subr.mxu0 0.0
    %937 = vmatpush2.msra.mxu0 0.0
    %938 = vmatprep.subr.mxu0 0.0
    %939 = vmatpush2.msra.mxu0 0.0
    %940 = vmatprep.subr.mxu0 0.0
    %941 = vmatpush2.msra.mxu0 0.0
    %942 = vmatprep.subr.mxu0 0.0
    %943 = vmatpush2.msra.mxu0 0.0
    %944 = vmatprep.subr.mxu0 0.0
    %945 = vmatpush2.msra.mxu0 0.0
    %946 = vmatprep.subr.mxu0 0.0
    %947 = vmatpush2.msra.mxu0 0.0
    %948 = vmatprep.subr.mxu0 0.0
    %949 = vmatpush2.msra.mxu0 0.0
    %950 = vmatprep.subr.mxu0 0.0
    %951 = vmatpush2.msra.mxu0 0.0
    %952 = vmatprep.subr.mxu0 0.0
    %953 = vmatpush2.msra.mxu0 0.0
    %954 = vmatprep.subr.mxu0 0.0
    %955 = vmatpush2.msra.mxu0 0.0
    %956 = vmatprep.subr.mxu0 0.0
    %957 = vmatpush2.msra.mxu0 0.0
    %958 = vmatprep.mubr.f32.mxu0 0.0
    %959 = vmatmul.mubr.f32.gmra.mxu0 %v886
    %v960 = vpop.f32.mrf.mxu0
    %v961 = vadd.f32 0.0, %v960
    %v962 = vpop.f32.mrf.mxu0
    %v963 = vadd.f32 0.0, %v962
    %964 = vmatprep.mubr.f32.mxu0 0.0
    %965 = vmatmul.mubr.f32.gmra.mxu0 %v889
    %v966 = vpop.f32.mrf.mxu0
    %v967 = vadd.f32 0.0, %v966
    %v968 = vpop.f32.mrf.mxu0
    %v969 = vadd.f32 0.0, %v968
    %970 = vmatprep.mubr.f32.mxu0 0.0
    %971 = vmatmul.mubr.f32.gmra.mxu0 %v892
    %v972 = vpop.f32.mrf.mxu0
    %v973 = vadd.f32 0.0, %v972
    %v974 = vpop.f32.mrf.mxu0
    %v975 = vadd.f32 0.0, %v974
    %976 = vdwg.mxu0
    %v977 = vadd.f32 %v374, %v961
    %v978 = vadd.f32 %v378, %v963
    %v979 = vadd.f32 %v374, %v967
    %v980 = vadd.f32 %v378, %v969
    %v981 = vadd.f32 %v374, %v973
    %v982 = vadd.f32 %v378, %v975
    %v984 = vrot.slane %v881, 1
    %v985 = vrot.slane %v882, 1
    %v986 = vsel %vm397, %v984, %v985
    %v987 = vrot.slane %v883, 1
    %v988 = vsel %vm397, %v985, %v987
    %v989 = vrot.slane %v884, 1
    %v990 = vsel %vm397, %v987, %v989
    %v991 = vsel %vm194, %v986, 0
    %v993 = vsel %vm194, %v988, 0
    %v995 = vsel %vm194, %v990, 0
    %997 = vmatprep.subr.mxu0 0.0
    %998 = vmatpush1.msra.mxu0 0.0
    %999 = vmatprep.subr.mxu0 0.0
    %1000 = vmatpush1.msra.mxu0 0.0
    %1001 = vmatprep.subr.mxu0 0.0
    %1002 = vmatpush1.msra.mxu0 0.0
    %1003 = vmatprep.subr.mxu0 0.0
    %1004 = vmatpush1.msra.mxu0 0.0
    %1005 = vmatprep.subr.mxu0 0.0
    %1006 = vmatpush1.msra.mxu0 0.0
    %1007 = vmatprep.subr.mxu0 0.0
    %1008 = vmatpush1.msra.mxu0 0.0
    %1009 = vmatprep.subr.mxu0 0.0
    %1010 = vmatpush1.msra.mxu0 0.0
    %1011 = vmatprep.subr.mxu0 0.0
    %1012 = vmatpush1.msra.mxu0 0.0
    %1013 = vmatprep.subr.mxu0 0.0
    %1014 = vmatpush1.msra.mxu0 0.0
    %1015 = vmatprep.subr.mxu0 0.0
    %1016 = vmatpush1.msra.mxu0 0.0
    %1017 = vmatprep.subr.mxu0 0.0
    %1018 = vmatpush1.msra.mxu0 0.0
    %1019 = vmatprep.subr.mxu0 0.0
    %1020 = vmatpush1.msra.mxu0 0.0
    %1021 = vmatprep.subr.mxu0 %v415
    %1022 = vmatpush1.msra.mxu0 %v412
    %1023 = vmatprep.subr.mxu0 %v393
    %1024 = vmatpush1.msra.mxu0 %v392
    %1025 = vmatprep.subr.mxu0 %v391
    %1026 = vmatpush1.msra.mxu0 %v390
    %1027 = vmatprep.subr.mxu0 %v389
    %1028 = vmatpush1.msra.mxu0 %v388
    %1029 = vmatprep.subr.mxu0 0.0
    %1030 = vmatpush2.msra.mxu0 0.0
    %1031 = vmatprep.subr.mxu0 0.0
    %1032 = vmatpush2.msra.mxu0 0.0
    %1033 = vmatprep.subr.mxu0 0.0
    %1034 = vmatpush2.msra.mxu0 0.0
    %1035 = vmatprep.subr.mxu0 0.0
    %1036 = vmatpush2.msra.mxu0 0.0
    %1037 = vmatprep.subr.mxu0 0.0
    %1038 = vmatpush2.msra.mxu0 0.0
    %1039 = vmatprep.subr.mxu0 0.0
    %1040 = vmatpush2.msra.mxu0 0.0
    %1041 = vmatprep.subr.mxu0 0.0
    %1042 = vmatpush2.msra.mxu0 0.0
    %1043 = vmatprep.subr.mxu0 0.0
    %1044 = vmatpush2.msra.mxu0 0.0
    %1045 = vmatprep.subr.mxu0 0.0
    %1046 = vmatpush2.msra.mxu0 0.0
    %1047 = vmatprep.subr.mxu0 0.0
    %1048 = vmatpush2.msra.mxu0 0.0
    %1049 = vmatprep.subr.mxu0 0.0
    %1050 = vmatpush2.msra.mxu0 0.0
    %1051 = vmatprep.subr.mxu0 0.0
    %1052 = vmatpush2.msra.mxu0 0.0
    %1053 = vmatprep.subr.mxu0 0.0
    %1054 = vmatpush2.msra.mxu0 0.0
    %1055 = vmatprep.subr.mxu0 0.0
    %1056 = vmatpush2.msra.mxu0 0.0
    %1057 = vmatprep.subr.mxu0 0.0
    %1058 = vmatpush2.msra.mxu0 0.0
    %1059 = vmatprep.subr.mxu0 0.0
    %1060 = vmatpush2.msra.mxu0 0.0
    %1061 = vmatprep.mubr.f32.mxu0 0.0
    %1062 = vmatmul.mubr.f32.gmra.mxu0 %v991
    %v1063 = vpop.f32.mrf.mxu0
    %v1064 = vadd.f32 0.0, %v1063
    %v1065 = vpop.f32.mrf.mxu0
    %v1066 = vadd.f32 0.0, %v1065
    %1067 = vmatprep.mubr.f32.mxu0 0.0
    %1068 = vmatmul.mubr.f32.gmra.mxu0 %v993
    %v1069 = vpop.f32.mrf.mxu0
    %v1070 = vadd.f32 0.0, %v1069
    %v1071 = vpop.f32.mrf.mxu0
    %v1072 = vadd.f32 0.0, %v1071
    %1073 = vmatprep.mubr.f32.mxu0 0.0
    %1074 = vmatmul.mubr.f32.gmra.mxu0 %v995
    %v1075 = vpop.f32.mrf.mxu0
    %v1076 = vadd.f32 0.0, %v1075
    %v1077 = vpop.f32.mrf.mxu0
    %v1078 = vadd.f32 0.0, %v1077
    %1079 = vdwg.mxu0
    %v1080 = vadd.f32 %v977, %v1064
    %v1081 = vadd.f32 %v978, %v1066
    %v1082 = vadd.f32 %v979, %v1070
    %v1083 = vadd.f32 %v980, %v1072
    %v1084 = vadd.f32 %v981, %v1076
    %v1085 = vadd.f32 %v982, %v1078
    %v1086 = vrot.slane %v881, 2
    %v1087 = vrot.slane %v882, 2
    %v1088 = vsel %vm515, %v1086, %v1087
    %v1089 = vrot.slane %v883, 2
    %v1090 = vsel %vm515, %v1087, %v1089
    %v1091 = vrot.slane %v884, 2
    %v1092 = vsel %vm515, %v1089, %v1091
    %v1093 = vsel %vm194, %v1088, 0
    %v1095 = vsel %vm194, %v1090, 0
    %v1097 = vsel %vm194, %v1092, 0
    %1099 = vmatprep.subr.mxu0 0.0
    %1100 = vmatpush1.msra.mxu0 0.0
    %1101 = vmatprep.subr.mxu0 0.0
    %1102 = vmatpush1.msra.mxu0 0.0
    %1103 = vmatprep.subr.mxu0 0.0
    %1104 = vmatpush1.msra.mxu0 0.0
    %1105 = vmatprep.subr.mxu0 0.0
    %1106 = vmatpush1.msra.mxu0 0.0
    %1107 = vmatprep.subr.mxu0 0.0
    %1108 = vmatpush1.msra.mxu0 0.0
    %1109 = vmatprep.subr.mxu0 0.0
    %1110 = vmatpush1.msra.mxu0 0.0
    %1111 = vmatprep.subr.mxu0 0.0
    %1112 = vmatpush1.msra.mxu0 0.0
    %1113 = vmatprep.subr.mxu0 0.0
    %1114 = vmatpush1.msra.mxu0 0.0
    %1115 = vmatprep.subr.mxu0 0.0
    %1116 = vmatpush1.msra.mxu0 0.0
    %1117 = vmatprep.subr.mxu0 0.0
    %1118 = vmatpush1.msra.mxu0 0.0
    %1119 = vmatprep.subr.mxu0 0.0
    %1120 = vmatpush1.msra.mxu0 0.0
    %1121 = vmatprep.subr.mxu0 0.0
    %1122 = vmatpush1.msra.mxu0 0.0
    %1123 = vmatprep.subr.mxu0 %v533
    %1124 = vmatpush1.msra.mxu0 %v530
    %1125 = vmatprep.subr.mxu0 %v512
    %1126 = vmatpush1.msra.mxu0 %v511
    %1127 = vmatprep.subr.mxu0 %v510
    %1128 = vmatpush1.msra.mxu0 %v509
    %1129 = vmatprep.subr.mxu0 %v508
    %1130 = vmatpush1.msra.mxu0 %v507
    %1131 = vmatprep.subr.mxu0 0.0
    %1132 = vmatpush2.msra.mxu0 0.0
    %1133 = vmatprep.subr.mxu0 0.0
    %1134 = vmatpush2.msra.mxu0 0.0
    %1135 = vmatprep.subr.mxu0 0.0
    %1136 = vmatpush2.msra.mxu0 0.0
    %1137 = vmatprep.subr.mxu0 0.0
    %1138 = vmatpush2.msra.mxu0 0.0
    %1139 = vmatprep.subr.mxu0 0.0
    %1140 = vmatpush2.msra.mxu0 0.0
    %1141 = vmatprep.subr.mxu0 0.0
    %1142 = vmatpush2.msra.mxu0 0.0
    %1143 = vmatprep.subr.mxu0 0.0
    %1144 = vmatpush2.msra.mxu0 0.0
    %1145 = vmatprep.subr.mxu0 0.0
    %1146 = vmatpush2.msra.mxu0 0.0
    %1147 = vmatprep.subr.mxu0 0.0
    %1148 = vmatpush2.msra.mxu0 0.0
    %1149 = vmatprep.subr.mxu0 0.0
    %1150 = vmatpush2.msra.mxu0 0.0
    %1151 = vmatprep.subr.mxu0 0.0
    %1152 = vmatpush2.msra.mxu0 0.0
    %1153 = vmatprep.subr.mxu0 0.0
    %1154 = vmatpush2.msra.mxu0 0.0
    %1155 = vmatprep.subr.mxu0 0.0
    %1156 = vmatpush2.msra.mxu0 0.0
    %1157 = vmatprep.subr.mxu0 0.0
    %1158 = vmatpush2.msra.mxu0 0.0
    %1159 = vmatprep.subr.mxu0 0.0
    %1160 = vmatpush2.msra.mxu0 0.0
    %1161 = vmatprep.subr.mxu0 0.0
    %1162 = vmatpush2.msra.mxu0 0.0
    %1163 = vmatprep.mubr.f32.mxu0 0.0
    %1164 = vmatmul.mubr.f32.gmra.mxu0 %v1093
    %v1165 = vpop.f32.mrf.mxu0
    %v1166 = vadd.f32 0.0, %v1165
    %v1167 = vpop.f32.mrf.mxu0
    %v1168 = vadd.f32 0.0, %v1167
    %1169 = vmatprep.mubr.f32.mxu0 0.0
    %1170 = vmatmul.mubr.f32.gmra.mxu0 %v1095
    %v1171 = vpop.f32.mrf.mxu0
    %v1172 = vadd.f32 0.0, %v1171
    %v1173 = vpop.f32.mrf.mxu0
    %v1174 = vadd.f32 0.0, %v1173
    %1175 = vmatprep.mubr.f32.mxu0 0.0
    %1176 = vmatmul.mubr.f32.gmra.mxu0 %v1097
    %v1177 = vpop.f32.mrf.mxu0
    %v1178 = vadd.f32 0.0, %v1177
    %v1179 = vpop.f32.mrf.mxu0
    %v1180 = vadd.f32 0.0, %v1179
    %1181 = vdwg.mxu0
    %v1182 = vadd.f32 %v1080, %v1166
    %v1183 = vadd.f32 %v1081, %v1168
    %v1184 = vadd.f32 %v1082, %v1172
    %v1185 = vadd.f32 %v1083, %v1174
    %v1186 = vadd.f32 %v1084, %v1178
    %v1187 = vadd.f32 %v1085, %v1180
    %v1188 = vrot.slane %v881, 3
    %v1189 = vrot.slane %v882, 3
    %v1190 = vsel %vm633, %v1188, %v1189
    %v1191 = vrot.slane %v883, 3
    %v1192 = vsel %vm633, %v1189, %v1191
    %v1193 = vrot.slane %v884, 3
    %v1194 = vsel %vm633, %v1191, %v1193
    %v1195 = vsel %vm194, %v1190, 0
    %v1197 = vsel %vm194, %v1192, 0
    %v1199 = vsel %vm194, %v1194, 0
    %1201 = vmatprep.subr.mxu0 0.0
    %1202 = vmatpush1.msra.mxu0 0.0
    %1203 = vmatprep.subr.mxu0 0.0
    %1204 = vmatpush1.msra.mxu0 0.0
    %1205 = vmatprep.subr.mxu0 0.0
    %1206 = vmatpush1.msra.mxu0 0.0
    %1207 = vmatprep.subr.mxu0 0.0
    %1208 = vmatpush1.msra.mxu0 0.0
    %1209 = vmatprep.subr.mxu0 0.0
    %1210 = vmatpush1.msra.mxu0 0.0
    %1211 = vmatprep.subr.mxu0 0.0
    %1212 = vmatpush1.msra.mxu0 0.0
    %1213 = vmatprep.subr.mxu0 0.0
    %1214 = vmatpush1.msra.mxu0 0.0
    %1215 = vmatprep.subr.mxu0 0.0
    %1216 = vmatpush1.msra.mxu0 0.0
    %1217 = vmatprep.subr.mxu0 0.0
    %1218 = vmatpush1.msra.mxu0 0.0
    %1219 = vmatprep.subr.mxu0 0.0
    %1220 = vmatpush1.msra.mxu0 0.0
    %1221 = vmatprep.subr.mxu0 0.0
    %1222 = vmatpush1.msra.mxu0 0.0
    %1223 = vmatprep.subr.mxu0 0.0
    %1224 = vmatpush1.msra.mxu0 0.0
    %1225 = vmatprep.subr.mxu0 %v651
    %1226 = vmatpush1.msra.mxu0 %v648
    %1227 = vmatprep.subr.mxu0 %v630
    %1228 = vmatpush1.msra.mxu0 %v629
    %1229 = vmatprep.subr.mxu0 %v628
    %1230 = vmatpush1.msra.mxu0 %v627
    %1231 = vmatprep.subr.mxu0 %v626
    %1232 = vmatpush1.msra.mxu0 %v625
    %1233 = vmatprep.subr.mxu0 0.0
    %1234 = vmatpush2.msra.mxu0 0.0
    %1235 = vmatprep.subr.mxu0 0.0
    %1236 = vmatpush2.msra.mxu0 0.0
    %1237 = vmatprep.subr.mxu0 0.0
    %1238 = vmatpush2.msra.mxu0 0.0
    %1239 = vmatprep.subr.mxu0 0.0
    %1240 = vmatpush2.msra.mxu0 0.0
    %1241 = vmatprep.subr.mxu0 0.0
    %1242 = vmatpush2.msra.mxu0 0.0
    %1243 = vmatprep.subr.mxu0 0.0
    %1244 = vmatpush2.msra.mxu0 0.0
    %1245 = vmatprep.subr.mxu0 0.0
    %1246 = vmatpush2.msra.mxu0 0.0
    %1247 = vmatprep.subr.mxu0 0.0
    %1248 = vmatpush2.msra.mxu0 0.0
    %1249 = vmatprep.subr.mxu0 0.0
    %1250 = vmatpush2.msra.mxu0 0.0
    %1251 = vmatprep.subr.mxu0 0.0
    %1252 = vmatpush2.msra.mxu0 0.0
    %1253 = vmatprep.subr.mxu0 0.0
    %1254 = vmatpush2.msra.mxu0 0.0
    %1255 = vmatprep.subr.mxu0 0.0
    %1256 = vmatpush2.msra.mxu0 0.0
    %1257 = vmatprep.subr.mxu0 0.0
    %1258 = vmatpush2.msra.mxu0 0.0
    %1259 = vmatprep.subr.mxu0 0.0
    %1260 = vmatpush2.msra.mxu0 0.0
    %1261 = vmatprep.subr.mxu0 0.0
    %1262 = vmatpush2.msra.mxu0 0.0
    %1263 = vmatprep.subr.mxu0 0.0
    %1264 = vmatpush2.msra.mxu0 0.0
    %1265 = vmatprep.mubr.f32.mxu0 0.0
    %1266 = vmatmul.mubr.f32.gmra.mxu0 %v1195
    %v1267 = vpop.f32.mrf.mxu0
    %v1268 = vadd.f32 0.0, %v1267
    %v1269 = vpop.f32.mrf.mxu0
    %v1270 = vadd.f32 0.0, %v1269
    %1271 = vmatprep.mubr.f32.mxu0 0.0
    %1272 = vmatmul.mubr.f32.gmra.mxu0 %v1197
    %v1273 = vpop.f32.mrf.mxu0
    %v1274 = vadd.f32 0.0, %v1273
    %v1275 = vpop.f32.mrf.mxu0
    %v1276 = vadd.f32 0.0, %v1275
    %1277 = vmatprep.mubr.f32.mxu0 0.0
    %1278 = vmatmul.mubr.f32.gmra.mxu0 %v1199
    %v1279 = vpop.f32.mrf.mxu0
    %v1280 = vadd.f32 0.0, %v1279
    %v1281 = vpop.f32.mrf.mxu0
    %v1282 = vadd.f32 0.0, %v1281
    %1283 = vdwg.mxu0
    %v1284 = vadd.f32 %v1182, %v1268
    %v1285 = vadd.f32 %v1183, %v1270
    %v1286 = vadd.f32 %v1184, %v1274
    %v1287 = vadd.f32 %v1185, %v1276
    %v1288 = vadd.f32 %v1186, %v1280
    %v1289 = vadd.f32 %v1187, %v1282
    %v1290 = vrot.slane %v881, 4
    %v1291 = vrot.slane %v882, 4
    %v1292 = vsel %vm280, %v1290, %v1291
    %v1293 = vrot.slane %v883, 4
    %v1294 = vsel %vm280, %v1291, %v1293
    %v1295 = vrot.slane %v884, 4
    %v1296 = vsel %vm280, %v1293, %v1295
    %v1297 = vsel %vm194, %v1292, 0
    %v1299 = vsel %vm194, %v1294, 0
    %v1301 = vsel %vm194, %v1296, 0
    %1303 = vmatprep.subr.mxu0 0.0
    %1304 = vmatpush1.msra.mxu0 0.0
    %1305 = vmatprep.subr.mxu0 0.0
    %1306 = vmatpush1.msra.mxu0 0.0
    %1307 = vmatprep.subr.mxu0 0.0
    %1308 = vmatpush1.msra.mxu0 0.0
    %1309 = vmatprep.subr.mxu0 0.0
    %1310 = vmatpush1.msra.mxu0 0.0
    %1311 = vmatprep.subr.mxu0 0.0
    %1312 = vmatpush1.msra.mxu0 0.0
    %1313 = vmatprep.subr.mxu0 0.0
    %1314 = vmatpush1.msra.mxu0 0.0
    %1315 = vmatprep.subr.mxu0 0.0
    %1316 = vmatpush1.msra.mxu0 0.0
    %1317 = vmatprep.subr.mxu0 0.0
    %1318 = vmatpush1.msra.mxu0 0.0
    %1319 = vmatprep.subr.mxu0 0.0
    %1320 = vmatpush1.msra.mxu0 0.0
    %1321 = vmatprep.subr.mxu0 0.0
    %1322 = vmatpush1.msra.mxu0 0.0
    %1323 = vmatprep.subr.mxu0 0.0
    %1324 = vmatpush1.msra.mxu0 0.0
    %1325 = vmatprep.subr.mxu0 0.0
    %1326 = vmatpush1.msra.mxu0 0.0
    %1327 = vmatprep.subr.mxu0 %v768
    %1328 = vmatpush1.msra.mxu0 %v765
    %1329 = vmatprep.subr.mxu0 %v748
    %1330 = vmatpush1.msra.mxu0 %v747
    %1331 = vmatprep.subr.mxu0 %v746
    %1332 = vmatpush1.msra.mxu0 %v745
    %1333 = vmatprep.subr.mxu0 %v744
    %1334 = vmatpush1.msra.mxu0 %v743
    %1335 = vmatprep.subr.mxu0 0.0
    %1336 = vmatpush2.msra.mxu0 0.0
    %1337 = vmatprep.subr.mxu0 0.0
    %1338 = vmatpush2.msra.mxu0 0.0
    %1339 = vmatprep.subr.mxu0 0.0
    %1340 = vmatpush2.msra.mxu0 0.0
    %1341 = vmatprep.subr.mxu0 0.0
    %1342 = vmatpush2.msra.mxu0 0.0
    %1343 = vmatprep.subr.mxu0 0.0
    %1344 = vmatpush2.msra.mxu0 0.0
    %1345 = vmatprep.subr.mxu0 0.0
    %1346 = vmatpush2.msra.mxu0 0.0
    %1347 = vmatprep.subr.mxu0 0.0
    %1348 = vmatpush2.msra.mxu0 0.0
    %1349 = vmatprep.subr.mxu0 0.0
    %1350 = vmatpush2.msra.mxu0 0.0
    %1351 = vmatprep.subr.mxu0 0.0
    %1352 = vmatpush2.msra.mxu0 0.0
    %1353 = vmatprep.subr.mxu0 0.0
    %1354 = vmatpush2.msra.mxu0 0.0
    %1355 = vmatprep.subr.mxu0 0.0
    %1356 = vmatpush2.msra.mxu0 0.0
    %1357 = vmatprep.subr.mxu0 0.0
    %1358 = vmatpush2.msra.mxu0 0.0
    %1359 = vmatprep.subr.mxu0 0.0
    %1360 = vmatpush2.msra.mxu0 0.0
    %1361 = vmatprep.subr.mxu0 0.0
    %1362 = vmatpush2.msra.mxu0 0.0
    %1363 = vmatprep.subr.mxu0 0.0
    %1364 = vmatpush2.msra.mxu0 0.0
    %1365 = vmatprep.subr.mxu0 0.0
    %1366 = vmatpush2.msra.mxu0 0.0
    %1367 = vmatprep.mubr.f32.mxu0 0.0
    %1368 = vmatmul.mubr.f32.gmra.mxu0 %v1297
    %v1369 = vpop.f32.mrf.mxu0
    %v1370 = vadd.f32 0.0, %v1369
    %v1371 = vpop.f32.mrf.mxu0
    %v1372 = vadd.f32 0.0, %v1371
    %1373 = vmatprep.mubr.f32.mxu0 0.0
    %1374 = vmatmul.mubr.f32.gmra.mxu0 %v1299
    %v1375 = vpop.f32.mrf.mxu0
    %v1376 = vadd.f32 0.0, %v1375
    %v1377 = vpop.f32.mrf.mxu0
    %v1378 = vadd.f32 0.0, %v1377
    %1379 = vmatprep.mubr.f32.mxu0 0.0
    %1380 = vmatmul.mubr.f32.gmra.mxu0 %v1301
    %v1381 = vpop.f32.mrf.mxu0
    %v1382 = vadd.f32 0.0, %v1381
    %v1383 = vpop.f32.mrf.mxu0
    %v1384 = vadd.f32 0.0, %v1383
    %1385 = vdwg.mxu0
    %v1386 = vadd.f32 %v1284, %v1370
    %v1387 = vadd.f32 %v1285, %v1372
    %v1388 = vadd.f32 %v1286, %v1376
    %v1389 = vadd.f32 %v1287, %v1378
    %v1390 = vadd.f32 %v1288, %v1382
    %v1391 = vadd.f32 %v1289, %v1384
    %v1392 = vmax.f32 %v1386, 0.0
    %v1393 = vmax.f32 %v1387, 0.0
    %v1394 = vmax.f32 %v1388, 0.0
    %v1395 = vmax.f32 %v1389, 0.0
    %v1396 = vmax.f32 %v1390, 0.0
    %v1397 = vmax.f32 %v1391, 0.0
    %v1398 = vld [vmem:[%s3] sm:$0xff]
    %v1399 = vld [vmem:[%s3 + $0x8] sm:$0xf]
    %v1400 = vld [vmem:[#allocation5] sm:$0xff]
    %v1401 = vld [vmem:[#allocation5 + $0x8] sm:$0xf]
    %v1402 = vld [vmem:[#allocation7] sm:$0xff]
    %v1403 = vld [vmem:[#allocation7 + $0x8] sm:$0xff]
    %v1404 = vld [vmem:[#allocation7 + $0x10] sm:$0xff]
    %v1405 = vld [vmem:[#allocation7 + $0x18] sm:$0xff]
    %v1406 = vld [vmem:[#allocation7 + $0x20] sm:$0xff]
    %v1407 = vld [vmem:[#allocation7 + $0x28] sm:$0xff]
    %v1408 = vld [vmem:[#allocation7 + $0x30] sm:$0xff]
    %v1409 = vld [vmem:[#allocation7 + $0x38] sm:$0xff]
    %v1410 = vld [vmem:[#allocation7 + $0x40] sm:$0xff]
    %v1411 = vld [vmem:[#allocation7 + $0x48] sm:$0xff]
    %v1412 = vld [vmem:[#allocation7 + $0x50] sm:$0xff]
    %v1413 = vld [vmem:[#allocation7 + $0x58] sm:$0xff]
    %v1414 = vld [vmem:[#allocation7 + $0x60] sm:$0xff]
    %v1415 = vld [vmem:[#allocation7 + $0x68] sm:$0xff]
    %v1416 = vld [vmem:[#allocation7 + $0x70] sm:$0xff]
    %v1417 = vld [vmem:[#allocation7 + $0x78] sm:$0xff]
    %v1418 = vld [vmem:[#allocation7 + $0x80] sm:$0xff]
    %v1419 = vld [vmem:[#allocation7 + $0x88] sm:$0xff]
    %v1420 = vld [vmem:[#allocation8] sm:$0xff]
    %v1421 = vld [vmem:[#allocation8 + $0x8] sm:$0xff]
    %v1422 = vld [vmem:[#allocation8 + $0x10] sm:$0xff]
    %v1423 = vld [vmem:[#allocation8 + $0x18] sm:$0xff]
    %v1424 = vld [vmem:[#allocation8 + $0x20] sm:$0xff]
    %v1425 = vld [vmem:[#allocation8 + $0x28] sm:$0xff]
    %v1426 = vld [vmem:[#allocation8 + $0x30] sm:$0xff]
    %v1427 = vld [vmem:[#allocation8 + $0x38] sm:$0xff]
    %v1428 = vld [vmem:[#allocation8 + $0x40] sm:$0xff]
    %v1429 = vld [vmem:[#allocation8 + $0x48] sm:$0xff]
    %v1430 = vld [vmem:[#allocation8 + $0x50] sm:$0xff]
    %v1431 = vld [vmem:[#allocation8 + $0x58] sm:$0xff]
    %v1432 = vld [vmem:[#allocation8 + $0x60] sm:$0xff]
    %v1433 = vld [vmem:[#allocation8 + $0x68] sm:$0xff]
    %v1434 = vld [vmem:[#allocation8 + $0x70] sm:$0xff]
    %v1435 = vld [vmem:[#allocation8 + $0x78] sm:$0xff]
    %v1436 = vld [vmem:[#allocation8 + $0x80] sm:$0xff]
    %v1437 = vld [vmem:[#allocation8 + $0x88] sm:$0xff]
    %vm1438 = vcmask 195584
    %v1440 = vsel %vm1438, %v1398, 0
    %v1443 = vsel %vm1438, %v1399, 0
    %1445 = vmatprep.subr.mxu0 0.0
    %1446 = vmatpush1.msra.mxu0 0.0
    %1447 = vmatprep.subr.mxu0 0.0
    %1448 = vmatpush1.msra.mxu0 0.0
    %1449 = vmatprep.subr.mxu0 0.0
    %1450 = vmatpush1.msra.mxu0 0.0
    %1451 = vmatprep.subr.mxu0 0.0
    %1452 = vmatpush1.msra.mxu0 0.0
    %1453 = vmatprep.subr.mxu0 0.0
    %1454 = vmatpush1.msra.mxu0 0.0
    %1455 = vmatprep.subr.mxu0 0.0
    %1456 = vmatpush1.msra.mxu0 0.0
    %1457 = vmatprep.subr.mxu0 0.0
    %1458 = vmatpush1.msra.mxu0 0.0
    %1459 = vmatprep.subr.mxu0 0.0
    %1460 = vmatpush1.msra.mxu0 0.0
    %1461 = vmatprep.subr.mxu0 0.0
    %1462 = vmatpush1.msra.mxu0 0.0
    %1463 = vmatprep.subr.mxu0 0.0
    %1464 = vmatpush1.msra.mxu0 0.0
    %1465 = vmatprep.subr.mxu0 0.0
    %1466 = vmatpush1.msra.mxu0 0.0
    %1467 = vmatprep.subr.mxu0 0.0
    %1468 = vmatpush1.msra.mxu0 0.0
    %1469 = vmatprep.subr.mxu0 0.0
    %1470 = vmatpush1.msra.mxu0 0.0
    %1471 = vmatprep.subr.mxu0 %v864
    %1472 = vmatpush1.msra.mxu0 %v863
    %1473 = vmatprep.subr.mxu0 %v862
    %1474 = vmatpush1.msra.mxu0 %v861
    %1475 = vmatprep.subr.mxu0 %v860
    %1476 = vmatpush1.msra.mxu0 %v859
    %1477 = vmatprep.subr.mxu0 0.0
    %1478 = vmatpush2.msra.mxu0 0.0
    %1479 = vmatprep.subr.mxu0 0.0
    %1480 = vmatpush2.msra.mxu0 0.0
    %1481 = vmatprep.subr.mxu0 0.0
    %1482 = vmatpush2.msra.mxu0 0.0
    %1483 = vmatprep.subr.mxu0 0.0
    %1484 = vmatpush2.msra.mxu0 0.0
    %1485 = vmatprep.subr.mxu0 0.0
    %1486 = vmatpush2.msra.mxu0 0.0
    %1487 = vmatprep.subr.mxu0 0.0
    %1488 = vmatpush2.msra.mxu0 0.0
    %1489 = vmatprep.subr.mxu0 0.0
    %1490 = vmatpush2.msra.mxu0 0.0
    %1491 = vmatprep.subr.mxu0 0.0
    %1492 = vmatpush2.msra.mxu0 0.0
    %1493 = vmatprep.subr.mxu0 0.0
    %1494 = vmatpush2.msra.mxu0 0.0
    %1495 = vmatprep.subr.mxu0 0.0
    %1496 = vmatpush2.msra.mxu0 0.0
    %1497 = vmatprep.subr.mxu0 0.0
    %1498 = vmatpush2.msra.mxu0 0.0
    %1499 = vmatprep.subr.mxu0 0.0
    %1500 = vmatpush2.msra.mxu0 0.0
    %1501 = vmatprep.subr.mxu0 0.0
    %1502 = vmatpush2.msra.mxu0 0.0
    %1503 = vmatprep.subr.mxu0 0.0
    %1504 = vmatpush2.msra.mxu0 0.0
    %1505 = vmatprep.subr.mxu0 0.0
    %1506 = vmatpush2.msra.mxu0 0.0
    %1507 = vmatprep.subr.mxu0 0.0
    %1508 = vmatpush2.msra.mxu0 0.0
    %1509 = vmatprep.mubr.f32.mxu0 0.0
    %1510 = vmatmul.mubr.f32.gmra.mxu0 %v1440
    %v1511 = vpop.f32.mrf.mxu0
    %v1512 = vadd.f32 0.0, %v1511
    %v1513 = vpop.f32.mrf.mxu0
    %v1514 = vadd.f32 0.0, %v1513
    %1515 = vmatprep.mubr.f32.mxu0 0.0
    %1516 = vmatmul.mubr.f32.gmra.mxu0 %v1443
    %v1517 = vpop.f32.mrf.mxu0
    %v1518 = vadd.f32 0.0, %v1517
    %v1519 = vpop.f32.mrf.mxu0
    %v1520 = vadd.f32 0.0, %v1519
    %1521 = vdwg.mxu0
    %v1523 = vsel %vm1438, %v1400, 0
    %v1526 = vsel %vm1438, %v1401, 0
    %1528 = vmatprep.subr.mxu0 0.0
    %1529 = vmatpush1.msra.mxu0 0.0
    %1530 = vmatprep.subr.mxu0 0.0
    %1531 = vmatpush1.msra.mxu0 0.0
    %1532 = vmatprep.subr.mxu0 0.0
    %1533 = vmatpush1.msra.mxu0 0.0
    %1534 = vmatprep.subr.mxu0 0.0
    %1535 = vmatpush1.msra.mxu0 0.0
    %1536 = vmatprep.subr.mxu0 0.0
    %1537 = vmatpush1.msra.mxu0 0.0
    %1538 = vmatprep.subr.mxu0 0.0
    %1539 = vmatpush1.msra.mxu0 0.0
    %1540 = vmatprep.subr.mxu0 0.0
    %1541 = vmatpush1.msra.mxu0 0.0
    %1542 = vmatprep.subr.mxu0 0.0
    %1543 = vmatpush1.msra.mxu0 0.0
    %1544 = vmatprep.subr.mxu0 0.0
    %1545 = vmatpush1.msra.mxu0 0.0
    %1546 = vmatprep.subr.mxu0 0.0
    %1547 = vmatpush1.msra.mxu0 0.0
    %1548 = vmatprep.subr.mxu0 0.0
    %1549 = vmatpush1.msra.mxu0 0.0
    %1550 = vmatprep.subr.mxu0 0.0
    %1551 = vmatpush1.msra.mxu0 0.0
    %1552 = vmatprep.subr.mxu0 0.0
    %1553 = vmatpush1.msra.mxu0 0.0
    %1554 = vmatprep.subr.mxu0 %v864
    %1555 = vmatpush1.msra.mxu0 %v863
    %1556 = vmatprep.subr.mxu0 %v862
    %1557 = vmatpush1.msra.mxu0 %v861
    %1558 = vmatprep.subr.mxu0 %v860
    %1559 = vmatpush1.msra.mxu0 %v859
    %1560 = vmatprep.subr.mxu0 0.0
    %1561 = vmatpush2.msra.mxu0 0.0
    %1562 = vmatprep.subr.mxu0 0.0
    %1563 = vmatpush2.msra.mxu0 0.0
    %1564 = vmatprep.subr.mxu0 0.0
    %1565 = vmatpush2.msra.mxu0 0.0
    %1566 = vmatprep.subr.mxu0 0.0
    %1567 = vmatpush2.msra.mxu0 0.0
    %1568 = vmatprep.subr.mxu0 0.0
    %1569 = vmatpush2.msra.mxu0 0.0
    %1570 = vmatprep.subr.mxu0 0.0
    %1571 = vmatpush2.msra.mxu0 0.0
    %1572 = vmatprep.subr.mxu0 0.0
    %1573 = vmatpush2.msra.mxu0 0.0
    %1574 = vmatprep.subr.mxu0 0.0
    %1575 = vmatpush2.msra.mxu0 0.0
    %1576 = vmatprep.subr.mxu0 0.0
    %1577 = vmatpush2.msra.mxu0 0.0
    %1578 = vmatprep.subr.mxu0 0.0
    %1579 = vmatpush2.msra.mxu0 0.0
    %1580 = vmatprep.subr.mxu0 0.0
    %1581 = vmatpush2.msra.mxu0 0.0
    %1582 = vmatprep.subr.mxu0 0.0
    %1583 = vmatpush2.msra.mxu0 0.0
    %1584 = vmatprep.subr.mxu0 0.0
    %1585 = vmatpush2.msra.mxu0 0.0
    %1586 = vmatprep.subr.mxu0 0.0
    %1587 = vmatpush2.msra.mxu0 0.0
    %1588 = vmatprep.subr.mxu0 0.0
    %1589 = vmatpush2.msra.mxu0 0.0
    %1590 = vmatprep.subr.mxu0 0.0
    %1591 = vmatpush2.msra.mxu0 0.0
    %1592 = vmatprep.mubr.f32.mxu0 0.0
    %1593 = vmatmul.mubr.f32.gmra.mxu0 %v1523
    %v1594 = vpop.f32.mrf.mxu0
    %v1595 = vadd.f32 0.0, %v1594
    %v1596 = vpop.f32.mrf.mxu0
    %v1597 = vadd.f32 0.0, %v1596
    %1598 = vmatprep.mubr.f32.mxu0 0.0
    %1599 = vmatmul.mubr.f32.gmra.mxu0 %v1526
    %v1600 = vpop.f32.mrf.mxu0
    %v1601 = vadd.f32 0.0, %v1600
    %v1602 = vpop.f32.mrf.mxu0
    %v1603 = vadd.f32 0.0, %v1602
    %1604 = vdwg.mxu0
    %v1605 = vmax.f32 %v1512, %v1595
    %v1606 = vmax.f32 %v1514, %v1597
    %v1607 = vmax.f32 %v1518, %v1601
    %v1608 = vmax.f32 %v1520, %v1603
    %vm1609 = vcmask 130048
    %v1611 = vsel %vm1609, %v1606, 0
    %v1614 = vsel %vm1609, %v1608, 0
    %1616 = vmatprep.subr.mxu0 0.0
    %1617 = vmatpush1.msra.mxu0 %v1417
    %1618 = vmatprep.subr.mxu0 0.0
    %1619 = vmatpush1.msra.mxu0 %v1416
    %1620 = vmatprep.subr.mxu0 0.0
    %1621 = vmatpush1.msra.mxu0 %v1415
    %1622 = vmatprep.subr.mxu0 0.0
    %1623 = vmatpush1.msra.mxu0 %v1414
    %1624 = vmatprep.subr.mxu0 0.0
    %1625 = vmatpush1.msra.mxu0 %v1413
    %1626 = vmatprep.subr.mxu0 0.0
    %1627 = vmatpush1.msra.mxu0 %v1412
    %1628 = vmatprep.subr.mxu0 0.0
    %1629 = vmatpush1.msra.mxu0 %v1411
    %1630 = vmatprep.subr.mxu0 0.0
    %1631 = vmatpush1.msra.mxu0 %v1410
    %1632 = vmatprep.subr.mxu0 0.0
    %1633 = vmatpush1.msra.mxu0 %v1409
    %1634 = vmatprep.subr.mxu0 0.0
    %1635 = vmatpush1.msra.mxu0 %v1408
    %1636 = vmatprep.subr.mxu0 0.0
    %1637 = vmatpush1.msra.mxu0 %v1407
    %1638 = vmatprep.subr.mxu0 0.0
    %1639 = vmatpush1.msra.mxu0 %v1406
    %1640 = vmatprep.subr.mxu0 0.0
    %1641 = vmatpush1.msra.mxu0 %v1405
    %1642 = vmatprep.subr.mxu0 0.0
    %1643 = vmatpush1.msra.mxu0 %v1404
    %1644 = vmatprep.subr.mxu0 0.0
    %1645 = vmatpush1.msra.mxu0 %v1403
    %1646 = vmatprep.subr.mxu0 0.0
    %1647 = vmatpush1.msra.mxu0 %v1402
    %1648 = vmatprep.subr.mxu0 0.0
    %1649 = vmatpush2.msra.mxu0 0.0
    %1650 = vmatprep.subr.mxu0 0.0
    %1651 = vmatpush2.msra.mxu0 0.0
    %1652 = vmatprep.subr.mxu0 0.0
    %1653 = vmatpush2.msra.mxu0 0.0
    %1654 = vmatprep.subr.mxu0 0.0
    %1655 = vmatpush2.msra.mxu0 0.0
    %1656 = vmatprep.subr.mxu0 0.0
    %1657 = vmatpush2.msra.mxu0 0.0
    %1658 = vmatprep.subr.mxu0 0.0
    %1659 = vmatpush2.msra.mxu0 0.0
    %1660 = vmatprep.subr.mxu0 0.0
    %1661 = vmatpush2.msra.mxu0 0.0
    %1662 = vmatprep.subr.mxu0 0.0
    %1663 = vmatpush2.msra.mxu0 0.0
    %1664 = vmatprep.subr.mxu0 0.0
    %1665 = vmatpush2.msra.mxu0 0.0
    %1666 = vmatprep.subr.mxu0 0.0
    %1667 = vmatpush2.msra.mxu0 0.0
    %1668 = vmatprep.subr.mxu0 0.0
    %1669 = vmatpush2.msra.mxu0 0.0
    %1670 = vmatprep.subr.mxu0 0.0
    %1671 = vmatpush2.msra.mxu0 0.0
    %1672 = vmatprep.subr.mxu0 0.0
    %1673 = vmatpush2.msra.mxu0 0.0
    %1674 = vmatprep.subr.mxu0 0.0
    %1675 = vmatpush2.msra.mxu0 0.0
    %1676 = vmatprep.subr.mxu0 0.0
    %1677 = vmatpush2.msra.mxu0 %v1419
    %1678 = vmatprep.subr.mxu0 0.0
    %1679 = vmatpush2.msra.mxu0 %v1418
    %1680 = vmatprep.mubr.f32.mxu0 %v1611
    %1681 = vmatmul.mubr.f32.gmra.mxu0 %v1605
    %v1682 = vpop.f32.mrf.mxu0
    %v1683 = vadd.f32 0.0, %v1682
    %v1684 = vpop.f32.mrf.mxu0
    %1685 = vmatprep.mubr.f32.mxu0 %v1614
    %1686 = vmatmul.mubr.f32.gmra.mxu0 %v1607
    %v1687 = vpop.f32.mrf.mxu0
    %v1688 = vadd.f32 0.0, %v1687
    %v1689 = vpop.f32.mrf.mxu0
    %1690 = vdwg.mxu0
    %1691 = vmatprep.subr.mxu0 0.0
    %1692 = vmatpush1.msra.mxu0 %v1435
    %1693 = vmatprep.subr.mxu0 0.0
    %1694 = vmatpush1.msra.mxu0 %v1434
    %1695 = vmatprep.subr.mxu0 0.0
    %1696 = vmatpush1.msra.mxu0 %v1433
    %1697 = vmatprep.subr.mxu0 0.0
    %1698 = vmatpush1.msra.mxu0 %v1432
    %1699 = vmatprep.subr.mxu0 0.0
    %1700 = vmatpush1.msra.mxu0 %v1431
    %1701 = vmatprep.subr.mxu0 0.0
    %1702 = vmatpush1.msra.mxu0 %v1430
    %1703 = vmatprep.subr.mxu0 0.0
    %1704 = vmatpush1.msra.mxu0 %v1429
    %1705 = vmatprep.subr.mxu0 0.0
    %1706 = vmatpush1.msra.mxu0 %v1428
    %1707 = vmatprep.subr.mxu0 0.0
    %1708 = vmatpush1.msra.mxu0 %v1427
    %1709 = vmatprep.subr.mxu0 0.0
    %1710 = vmatpush1.msra.mxu0 %v1426
    %1711 = vmatprep.subr.mxu0 0.0
    %1712 = vmatpush1.msra.mxu0 %v1425
    %1713 = vmatprep.subr.mxu0 0.0
    %1714 = vmatpush1.msra.mxu0 %v1424
    %1715 = vmatprep.subr.mxu0 0.0
    %1716 = vmatpush1.msra.mxu0 %v1423
    %1717 = vmatprep.subr.mxu0 0.0
    %1718 = vmatpush1.msra.mxu0 %v1422
    %1719 = vmatprep.subr.mxu0 0.0
    %1720 = vmatpush1.msra.mxu0 %v1421
    %1721 = vmatprep.subr.mxu0 0.0
    %1722 = vmatpush1.msra.mxu0 %v1420
    %1723 = vmatprep.subr.mxu0 0.0
    %1724 = vmatpush2.msra.mxu0 0.0
    %1725 = vmatprep.subr.mxu0 0.0
    %1726 = vmatpush2.msra.mxu0 0.0
    %1727 = vmatprep.subr.mxu0 0.0
    %1728 = vmatpush2.msra.mxu0 0.0
    %1729 = vmatprep.subr.mxu0 0.0
    %1730 = vmatpush2.msra.mxu0 0.0
    %1731 = vmatprep.subr.mxu0 0.0
    %1732 = vmatpush2.msra.mxu0 0.0
    %1733 = vmatprep.subr.mxu0 0.0
    %1734 = vmatpush2.msra.mxu0 0.0
    %1735 = vmatprep.subr.mxu0 0.0
    %1736 = vmatpush2.msra.mxu0 0.0
    %1737 = vmatprep.subr.mxu0 0.0
    %1738 = vmatpush2.msra.mxu0 0.0
    %1739 = vmatprep.subr.mxu0 0.0
    %1740 = vmatpush2.msra.mxu0 0.0
    %1741 = vmatprep.subr.mxu0 0.0
    %1742 = vmatpush2.msra.mxu0 0.0
    %1743 = vmatprep.subr.mxu0 0.0
    %1744 = vmatpush2.msra.mxu0 0.0
    %1745 = vmatprep.subr.mxu0 0.0
    %1746 = vmatpush2.msra.mxu0 0.0
    %1747 = vmatprep.subr.mxu0 0.0
    %1748 = vmatpush2.msra.mxu0 0.0
    %1749 = vmatprep.subr.mxu0 0.0
    %1750 = vmatpush2.msra.mxu0 0.0
    %1751 = vmatprep.subr.mxu0 0.0
    %1752 = vmatpush2.msra.mxu0 %v1437
    %1753 = vmatprep.subr.mxu0 0.0
    %1754 = vmatpush2.msra.mxu0 %v1436
    %1755 = vmatprep.mubr.f32.mxu0 %v1611
    %1756 = vmatmul.mubr.f32.gmra.mxu0 %v1605
    %v1757 = vpop.f32.mrf.mxu0
    %v1758 = vadd.f32 0.0, %v1757
    %v1759 = vpop.f32.mrf.mxu0
    %1760 = vmatprep.mubr.f32.mxu0 %v1614
    %1761 = vmatmul.mubr.f32.gmra.mxu0 %v1607
    %v1762 = vpop.f32.mrf.mxu0
    %v1763 = vadd.f32 0.0, %v1762
    %v1764 = vpop.f32.mrf.mxu0
    %1765 = vdwg.mxu0
    %v1766 = vmax.f32 %v1683, %v1758
    %v1767 = vmax.f32 %v1688, %v1763
    %1768 = vmatprep.subr.mxu0 0.0
    %1769 = vmatpush1.msra.mxu0 0.0
    %1770 = vmatprep.subr.mxu0 0.0
    %1771 = vmatpush1.msra.mxu0 0.0
    %1772 = vmatprep.subr.mxu0 0.0
    %1773 = vmatpush1.msra.mxu0 0.0
    %1774 = vmatprep.subr.mxu0 0.0
    %1775 = vmatpush1.msra.mxu0 0.0
    %1776 = vmatprep.subr.mxu0 0.0
    %1777 = vmatpush1.msra.mxu0 0.0
    %1778 = vmatprep.subr.mxu0 0.0
    %1779 = vmatpush1.msra.mxu0 0.0
    %1780 = vmatprep.subr.mxu0 0.0
    %1781 = vmatpush1.msra.mxu0 0.0
    %1782 = vmatprep.subr.mxu0 0.0
    %1783 = vmatpush1.msra.mxu0 0.0
    %1784 = vmatprep.subr.mxu0 0.0
    %1785 = vmatpush1.msra.mxu0 0.0
    %1786 = vmatprep.subr.mxu0 0.0
    %1787 = vmatpush1.msra.mxu0 0.0
    %1788 = vmatprep.subr.mxu0 0.0
    %1789 = vmatpush1.msra.mxu0 0.0
    %1790 = vmatprep.subr.mxu0 0.0
    %1791 = vmatpush1.msra.mxu0 0.0
    %1792 = vmatprep.subr.mxu0 0.0
    %1793 = vmatpush1.msra.mxu0 0.0
    %1794 = vmatprep.subr.mxu0 %v1397
    %1795 = vmatpush1.msra.mxu0 %v1396
    %1796 = vmatprep.subr.mxu0 %v1395
    %1797 = vmatpush1.msra.mxu0 %v1394
    %1798 = vmatprep.subr.mxu0 %v1393
    %1799 = vmatpush1.msra.mxu0 %v1392
    %1800 = vmatprep.subr.mxu0 0.0
    %1801 = vmatpush2.msra.mxu0 0.0
    %1802 = vmatprep.subr.mxu0 0.0
    %1803 = vmatpush2.msra.mxu0 0.0
    %1804 = vmatprep.subr.mxu0 0.0
    %1805 = vmatpush2.msra.mxu0 0.0
    %1806 = vmatprep.subr.mxu0 0.0
    %1807 = vmatpush2.msra.mxu0 0.0
    %1808 = vmatprep.subr.mxu0 0.0
    %1809 = vmatpush2.msra.mxu0 0.0
    %1810 = vmatprep.subr.mxu0 0.0
    %1811 = vmatpush2.msra.mxu0 0.0
    %1812 = vmatprep.subr.mxu0 0.0
    %1813 = vmatpush2.msra.mxu0 0.0
    %1814 = vmatprep.subr.mxu0 0.0
    %1815 = vmatpush2.msra.mxu0 0.0
    %1816 = vmatprep.subr.mxu0 0.0
    %1817 = vmatpush2.msra.mxu0 0.0
    %1818 = vmatprep.subr.mxu0 0.0
    %1819 = vmatpush2.msra.mxu0 0.0
    %1820 = vmatprep.subr.mxu0 0.0
    %1821 = vmatpush2.msra.mxu0 0.0
    %1822 = vmatprep.subr.mxu0 0.0
    %1823 = vmatpush2.msra.mxu0 0.0
    %1824 = vmatprep.subr.mxu0 0.0
    %1825 = vmatpush2.msra.mxu0 0.0
    %1826 = vmatprep.subr.mxu0 0.0
    %1827 = vmatpush2.msra.mxu0 0.0
    %1828 = vmatprep.subr.mxu0 0.0
    %1829 = vmatpush2.msra.mxu0 0.0
    %1830 = vmatprep.subr.mxu0 0.0
    %1831 = vmatpush2.msra.mxu0 0.0
    %1832 = vmatprep.mubr.f32.mxu0 0.0
    %1833 = vmatmul.mubr.f32.gmra.mxu0 %v1440
    %v1834 = vpop.f32.mrf.mxu0
    %v1835 = vadd.f32 0.0, %v1834
    %v1836 = vpop.f32.mrf.mxu0
    %v1837 = vadd.f32 0.0, %v1836
    %1838 = vmatprep.mubr.f32.mxu0 0.0
    %1839 = vmatmul.mubr.f32.gmra.mxu0 %v1443
    %v1840 = vpop.f32.mrf.mxu0
    %v1841 = vadd.f32 0.0, %v1840
    %v1842 = vpop.f32.mrf.mxu0
    %v1843 = vadd.f32 0.0, %v1842
    %1844 = vdwg.mxu0
    %1845 = vmatprep.subr.mxu0 0.0
    %1846 = vmatpush1.msra.mxu0 0.0
    %1847 = vmatprep.subr.mxu0 0.0
    %1848 = vmatpush1.msra.mxu0 0.0
    %1849 = vmatprep.subr.mxu0 0.0
    %1850 = vmatpush1.msra.mxu0 0.0
    %1851 = vmatprep.subr.mxu0 0.0
    %1852 = vmatpush1.msra.mxu0 0.0
    %1853 = vmatprep.subr.mxu0 0.0
    %1854 = vmatpush1.msra.mxu0 0.0
    %1855 = vmatprep.subr.mxu0 0.0
    %1856 = vmatpush1.msra.mxu0 0.0
    %1857 = vmatprep.subr.mxu0 0.0
    %1858 = vmatpush1.msra.mxu0 0.0
    %1859 = vmatprep.subr.mxu0 0.0
    %1860 = vmatpush1.msra.mxu0 0.0
    %1861 = vmatprep.subr.mxu0 0.0
    %1862 = vmatpush1.msra.mxu0 0.0
    %1863 = vmatprep.subr.mxu0 0.0
    %1864 = vmatpush1.msra.mxu0 0.0
    %1865 = vmatprep.subr.mxu0 0.0
    %1866 = vmatpush1.msra.mxu0 0.0
    %1867 = vmatprep.subr.mxu0 0.0
    %1868 = vmatpush1.msra.mxu0 0.0
    %1869 = vmatprep.subr.mxu0 0.0
    %1870 = vmatpush1.msra.mxu0 0.0
    %1871 = vmatprep.subr.mxu0 %v1397
    %1872 = vmatpush1.msra.mxu0 %v1396
    %1873 = vmatprep.subr.mxu0 %v1395
    %1874 = vmatpush1.msra.mxu0 %v1394
    %1875 = vmatprep.subr.mxu0 %v1393
    %1876 = vmatpush1.msra.mxu0 %v1392
    %1877 = vmatprep.subr.mxu0 0.0
    %1878 = vmatpush2.msra.mxu0 0.0
    %1879 = vmatprep.subr.mxu0 0.0
    %1880 = vmatpush2.msra.mxu0 0.0
    %1881 = vmatprep.subr.mxu0 0.0
    %1882 = vmatpush2.msra.mxu0 0.0
    %1883 = vmatprep.subr.mxu0 0.0
    %1884 = vmatpush2.msra.mxu0 0.0
    %1885 = vmatprep.subr.mxu0 0.0
    %1886 = vmatpush2.msra.mxu0 0.0
    %1887 = vmatprep.subr.mxu0 0.0
    %1888 = vmatpush2.msra.mxu0 0.0
    %1889 = vmatprep.subr.mxu0 0.0
    %1890 = vmatpush2.msra.mxu0 0.0
    %1891 = vmatprep.subr.mxu0 0.0
    %1892 = vmatpush2.msra.mxu0 0.0
    %1893 = vmatprep.subr.mxu0 0.0
    %1894 = vmatpush2.msra.mxu0 0.0
    %1895 = vmatprep.subr.mxu0 0.0
    %1896 = vmatpush2.msra.mxu0 0.0
    %1897 = vmatprep.subr.mxu0 0.0
    %1898 = vmatpush2.msra.mxu0 0.0
    %1899 = vmatprep.subr.mxu0 0.0
    %1900 = vmatpush2.msra.mxu0 0.0
    %1901 = vmatprep.subr.mxu0 0.0
    %1902 = vmatpush2.msra.mxu0 0.0
    %1903 = vmatprep.subr.mxu0 0.0
    %1904 = vmatpush2.msra.mxu0 0.0
    %1905 = vmatprep.subr.mxu0 0.0
    %1906 = vmatpush2.msra.mxu0 0.0
    %1907 = vmatprep.subr.mxu0 0.0
    %1908 = vmatpush2.msra.mxu0 0.0
    %1909 = vmatprep.mubr.f32.mxu0 0.0
    %1910 = vmatmul.mubr.f32.gmra.mxu0 %v1523
    %v1911 = vpop.f32.mrf.mxu0
    %v1912 = vadd.f32 0.0, %v1911
    %v1913 = vpop.f32.mrf.mxu0
    %v1914 = vadd.f32 0.0, %v1913
    %1915 = vmatprep.mubr.f32.mxu0 0.0
    %1916 = vmatmul.mubr.f32.gmra.mxu0 %v1526
    %v1917 = vpop.f32.mrf.mxu0
    %v1918 = vadd.f32 0.0, %v1917
    %v1919 = vpop.f32.mrf.mxu0
    %v1920 = vadd.f32 0.0, %v1919
    %1921 = vdwg.mxu0
    %v1922 = vmax.f32 %v1835, %v1912
    %v1923 = vmax.f32 %v1837, %v1914
    %v1924 = vmax.f32 %v1841, %v1918
    %v1925 = vmax.f32 %v1843, %v1920
    %v1927 = vsel %vm1609, %v1923, 0
    %v1930 = vsel %vm1609, %v1925, 0
    %1932 = vmatprep.subr.mxu0 0.0
    %1933 = vmatpush1.msra.mxu0 %v1417
    %1934 = vmatprep.subr.mxu0 0.0
    %1935 = vmatpush1.msra.mxu0 %v1416
    %1936 = vmatprep.subr.mxu0 0.0
    %1937 = vmatpush1.msra.mxu0 %v1415
    %1938 = vmatprep.subr.mxu0 0.0
    %1939 = vmatpush1.msra.mxu0 %v1414
    %1940 = vmatprep.subr.mxu0 0.0
    %1941 = vmatpush1.msra.mxu0 %v1413
    %1942 = vmatprep.subr.mxu0 0.0
    %1943 = vmatpush1.msra.mxu0 %v1412
    %1944 = vmatprep.subr.mxu0 0.0
    %1945 = vmatpush1.msra.mxu0 %v1411
    %1946 = vmatprep.subr.mxu0 0.0
    %1947 = vmatpush1.msra.mxu0 %v1410
    %1948 = vmatprep.subr.mxu0 0.0
    %1949 = vmatpush1.msra.mxu0 %v1409
    %1950 = vmatprep.subr.mxu0 0.0
    %1951 = vmatpush1.msra.mxu0 %v1408
    %1952 = vmatprep.subr.mxu0 0.0
    %1953 = vmatpush1.msra.mxu0 %v1407
    %1954 = vmatprep.subr.mxu0 0.0
    %1955 = vmatpush1.msra.mxu0 %v1406
    %1956 = vmatprep.subr.mxu0 0.0
    %1957 = vmatpush1.msra.mxu0 %v1405
    %1958 = vmatprep.subr.mxu0 0.0
    %1959 = vmatpush1.msra.mxu0 %v1404
    %1960 = vmatprep.subr.mxu0 0.0
    %1961 = vmatpush1.msra.mxu0 %v1403
    %1962 = vmatprep.subr.mxu0 0.0
    %1963 = vmatpush1.msra.mxu0 %v1402
    %1964 = vmatprep.subr.mxu0 0.0
    %1965 = vmatpush2.msra.mxu0 0.0
    %1966 = vmatprep.subr.mxu0 0.0
    %1967 = vmatpush2.msra.mxu0 0.0
    %1968 = vmatprep.subr.mxu0 0.0
    %1969 = vmatpush2.msra.mxu0 0.0
    %1970 = vmatprep.subr.mxu0 0.0
    %1971 = vmatpush2.msra.mxu0 0.0
    %1972 = vmatprep.subr.mxu0 0.0
    %1973 = vmatpush2.msra.mxu0 0.0
    %1974 = vmatprep.subr.mxu0 0.0
    %1975 = vmatpush2.msra.mxu0 0.0
    %1976 = vmatprep.subr.mxu0 0.0
    %1977 = vmatpush2.msra.mxu0 0.0
    %1978 = vmatprep.subr.mxu0 0.0
    %1979 = vmatpush2.msra.mxu0 0.0
    %1980 = vmatprep.subr.mxu0 0.0
    %1981 = vmatpush2.msra.mxu0 0.0
    %1982 = vmatprep.subr.mxu0 0.0
    %1983 = vmatpush2.msra.mxu0 0.0
    %1984 = vmatprep.subr.mxu0 0.0
    %1985 = vmatpush2.msra.mxu0 0.0
    %1986 = vmatprep.subr.mxu0 0.0
    %1987 = vmatpush2.msra.mxu0 0.0
    %1988 = vmatprep.subr.mxu0 0.0
    %1989 = vmatpush2.msra.mxu0 0.0
    %1990 = vmatprep.subr.mxu0 0.0
    %1991 = vmatpush2.msra.mxu0 0.0
    %1992 = vmatprep.subr.mxu0 0.0
    %1993 = vmatpush2.msra.mxu0 %v1419
    %1994 = vmatprep.subr.mxu0 0.0
    %1995 = vmatpush2.msra.mxu0 %v1418
    %1996 = vmatprep.mubr.f32.mxu0 %v1927
    %1997 = vmatmul.mubr.f32.gmra.mxu0 %v1922
    %v1998 = vpop.f32.mrf.mxu0
    %v1999 = vadd.f32 0.0, %v1998
    %v2000 = vpop.f32.mrf.mxu0
    %2001 = vmatprep.mubr.f32.mxu0 %v1930
    %2002 = vmatmul.mubr.f32.gmra.mxu0 %v1924
    %v2003 = vpop.f32.mrf.mxu0
    %v2004 = vadd.f32 0.0, %v2003
    %v2005 = vpop.f32.mrf.mxu0
    %2006 = vdwg.mxu0
    %2007 = vmatprep.subr.mxu0 0.0
    %2008 = vmatpush1.msra.mxu0 %v1435
    %2009 = vmatprep.subr.mxu0 0.0
    %2010 = vmatpush1.msra.mxu0 %v1434
    %2011 = vmatprep.subr.mxu0 0.0
    %2012 = vmatpush1.msra.mxu0 %v1433
    %2013 = vmatprep.subr.mxu0 0.0
    %2014 = vmatpush1.msra.mxu0 %v1432
    %2015 = vmatprep.subr.mxu0 0.0
    %2016 = vmatpush1.msra.mxu0 %v1431
    %2017 = vmatprep.subr.mxu0 0.0
    %2018 = vmatpush1.msra.mxu0 %v1430
    %2019 = vmatprep.subr.mxu0 0.0
    %2020 = vmatpush1.msra.mxu0 %v1429
    %2021 = vmatprep.subr.mxu0 0.0
    %2022 = vmatpush1.msra.mxu0 %v1428
    %2023 = vmatprep.subr.mxu0 0.0
    %2024 = vmatpush1.msra.mxu0 %v1427
    %2025 = vmatprep.subr.mxu0 0.0
    %2026 = vmatpush1.msra.mxu0 %v1426
    %2027 = vmatprep.subr.mxu0 0.0
    %2028 = vmatpush1.msra.mxu0 %v1425
    %2029 = vmatprep.subr.mxu0 0.0
    %2030 = vmatpush1.msra.mxu0 %v1424
    %2031 = vmatprep.subr.mxu0 0.0
    %2032 = vmatpush1.msra.mxu0 %v1423
    %2033 = vmatprep.subr.mxu0 0.0
    %2034 = vmatpush1.msra.mxu0 %v1422
    %2035 = vmatprep.subr.mxu0 0.0
    %2036 = vmatpush1.msra.mxu0 %v1421
    %2037 = vmatprep.subr.mxu0 0.0
    %2038 = vmatpush1.msra.mxu0 %v1420
    %2039 = vmatprep.subr.mxu0 0.0
    %2040 = vmatpush2.msra.mxu0 0.0
    %2041 = vmatprep.subr.mxu0 0.0
    %2042 = vmatpush2.msra.mxu0 0.0
    %2043 = vmatprep.subr.mxu0 0.0
    %2044 = vmatpush2.msra.mxu0 0.0
    %2045 = vmatprep.subr.mxu0 0.0
    %2046 = vmatpush2.msra.mxu0 0.0
    %2047 = vmatprep.subr.mxu0 0.0
    %2048 = vmatpush2.msra.mxu0 0.0
    %2049 = vmatprep.subr.mxu0 0.0
    %2050 = vmatpush2.msra.mxu0 0.0
    %2051 = vmatprep.subr.mxu0 0.0
    %2052 = vmatpush2.msra.mxu0 0.0
    %2053 = vmatprep.subr.mxu0 0.0
    %2054 = vmatpush2.msra.mxu0 0.0
    %2055 = vmatprep.subr.mxu0 0.0
    %2056 = vmatpush2.msra.mxu0 0.0
    %2057 = vmatprep.subr.mxu0 0.0
    %2058 = vmatpush2.msra.mxu0 0.0
    %2059 = vmatprep.subr.mxu0 0.0
    %2060 = vmatpush2.msra.mxu0 0.0
    %2061 = vmatprep.subr.mxu0 0.0
    %2062 = vmatpush2.msra.mxu0 0.0
    %2063 = vmatprep.subr.mxu0 0.0
    %2064 = vmatpush2.msra.mxu0 0.0
    %2065 = vmatprep.subr.mxu0 0.0
    %2066 = vmatpush2.msra.mxu0 0.0
    %2067 = vmatprep.subr.mxu0 0.0
    %2068 = vmatpush2.msra.mxu0 %v1437
    %2069 = vmatprep.subr.mxu0 0.0
    %2070 = vmatpush2.msra.mxu0 %v1436
    %2071 = vmatprep.mubr.f32.mxu0 %v1927
    %2072 = vmatmul.mubr.f32.gmra.mxu0 %v1922
    %v2073 = vpop.f32.mrf.mxu0
    %v2074 = vadd.f32 0.0, %v2073
    %v2075 = vpop.f32.mrf.mxu0
    %2076 = vmatprep.mubr.f32.mxu0 %v1930
    %2077 = vmatmul.mubr.f32.gmra.mxu0 %v1924
    %v2078 = vpop.f32.mrf.mxu0
    %v2079 = vadd.f32 0.0, %v2078
    %v2080 = vpop.f32.mrf.mxu0
    %2081 = vdwg.mxu0
    %v2082 = vmax.f32 %v1999, %v2074
    %v2083 = vmax.f32 %v2004, %v2079
    %vm2084 = vcmask 588800
    %v2085 = vsel %vm2084, %v1766, 0.0
    %vm2086 = vcmask 584704
    %v2087 = vsel %vm2086, %v1767, 0.0
    %v2088 = vadd.f32 %v2085, %v2087
    %2089 = vadd.xlane.f32.xlu0 %v2088
    %v2090 = vpop.xlane.xlu0 %2089
    %v2091 = vrot.slane %v2090, 4
    %v2092 = vadd.f32 %v2090, %v2091
    %v2093 = vrot.slane %v2092, 2
    %v2094 = vadd.f32 %v2092, %v2093
    %v2095 = vrot.slane %v2094, 1
    %v2096 = vadd.f32 %v2094, %v2095
    %s2097 = vtos %v2096
    %s2098 = sadd.f32 %s2097, 0.0
    %v2099 = vsel %vm2084, %v2082, 0.0
    %v2100 = vsel %vm2086, %v2083, 0.0
    %v2101 = vadd.f32 %v2099, %v2100
    %2102 = vadd.xlane.f32.xlu0 %v2101
    %v2103 = vpop.xlane.xlu0 %2102
    %v2104 = vrot.slane %v2103, 4
    %v2105 = vadd.f32 %v2103, %v2104
    %v2106 = vrot.slane %v2105, 2
    %v2107 = vadd.f32 %v2105, %v2106
    %v2108 = vrot.slane %v2107, 1
    %v2109 = vadd.f32 %v2107, %v2108
    %s2110 = vtos %v2109
    %s2111 = sadd.f32 %s2098, %s2110
    %v2112 = vrcp.pop 1728.0
    %s2113 = vtos %v2112
    %s2114 = smul.f32 %s2111, %s2113
    %s2115 = smul.f32 %s2114, 2.0
    %v2116 = vrcp.pop 2.6457512
    %s2117 = vtos %v2116
    %s2118 = smul.f32 %s2115, %s2117
    %v2119 = vstv %s2118
    %v2120 = vrcp.pop %v2119
    %s2121 = vtos %v2120
    %v2122 = vld [vmem:[#allocation10] sm:$0x1]
    %v2123 = vstv %s2121
    %v2124 = vmul.f32 %v1766, %v2123
    %v2125 = vmul.f32 %v1767, %v2123
    %v2126 = vmax.f32 %v2124, -8.0
    %v2127 = vmax.f32 %v2125, -8.0
    %v2128 = vmin.f32 %v2126, 7.0
    %v2129 = vmin.f32 %v2127, 7.0
    %v2130 = vround.ne.pseudo %v2128
    %v2131 = vround.ne.pseudo %v2129
    %v2132 = vstv %s2118
    %v2133 = vmul.f32 %v2130, %v2132
    %v2134 = vmul.f32 %v2131, %v2132
    %v2135 = vld [vmem:[%s7] sm:$0xff]
    %v2136 = vld [vmem:[%s7 + $0x8] sm:$0xff]
    %v2137 = vld [vmem:[%s7 + $0x10] sm:$0xff]
    %v2138 = vld [vmem:[%s7 + $0x18] sm:$0xff]
    %v2139 = vld [vmem:[%s7 + $0x20] sm:$0xff]
    %v2140 = vld [vmem:[%s7 + $0x28] sm:$0xff]
    %v2141 = vld [vmem:[%s7 + $0x30] sm:$0xff]
    %v2142 = vld [vmem:[%s7 + $0x38] sm:$0xff]
    %v2143 = vld [vmem:[%s7 + $0x40] sm:$0xff]
    %v2145 = vsel %vm2084, %v2133, 0
    %2147 = vmatprep.subr.mxu0 0.0
    %2148 = vmatpush1.msra.mxu0 0.0
    %2149 = vmatprep.subr.mxu0 0.0
    %2150 = vmatpush1.msra.mxu0 0.0
    %2151 = vmatprep.subr.mxu0 0.0
    %2152 = vmatpush1.msra.mxu0 0.0
    %2153 = vmatprep.subr.mxu0 0.0
    %2154 = vmatpush1.msra.mxu0 0.0
    %2155 = vmatprep.subr.mxu0 0.0
    %2156 = vmatpush1.msra.mxu0 0.0
    %2157 = vmatprep.subr.mxu0 0.0
    %2158 = vmatpush1.msra.mxu0 0.0
    %2159 = vmatprep.subr.mxu0 0.0
    %2160 = vmatpush1.msra.mxu0 0.0
    %2161 = vmatprep.subr.mxu0 0.0
    %2162 = vmatpush1.msra.mxu0 %v2143
    %2163 = vmatprep.subr.mxu0 0.0
    %2164 = vmatpush1.msra.mxu0 %v2142
    %2165 = vmatprep.subr.mxu0 0.0
    %2166 = vmatpush1.msra.mxu0 %v2141
    %2167 = vmatprep.subr.mxu0 0.0
    %2168 = vmatpush1.msra.mxu0 %v2140
    %2169 = vmatprep.subr.mxu0 0.0
    %2170 = vmatpush1.msra.mxu0 %v2139
    %2171 = vmatprep.subr.mxu0 0.0
    %2172 = vmatpush1.msra.mxu0 %v2138
    %2173 = vmatprep.subr.mxu0 0.0
    %2174 = vmatpush1.msra.mxu0 %v2137
    %2175 = vmatprep.subr.mxu0 0.0
    %2176 = vmatpush1.msra.mxu0 %v2136
    %2177 = vmatprep.subr.mxu0 0.0
    %2178 = vmatpush1.msra.mxu0 %v2135
    %2179 = vmatprep.subr.mxu0 0.0
    %2180 = vmatpush2.msra.mxu0 0.0
    %2181 = vmatprep.subr.mxu0 0.0
    %2182 = vmatpush2.msra.mxu0 0.0
    %2183 = vmatprep.subr.mxu0 0.0
    %2184 = vmatpush2.msra.mxu0 0.0
    %2185 = vmatprep.subr.mxu0 0.0
    %2186 = vmatpush2.msra.mxu0 0.0
    %2187 = vmatprep.subr.mxu0 0.0
    %2188 = vmatpush2.msra.mxu0 0.0
    %2189 = vmatprep.subr.mxu0 0.0
    %2190 = vmatpush2.msra.mxu0 0.0
    %2191 = vmatprep.subr.mxu0 0.0
    %2192 = vmatpush2.msra.mxu0 0.0
    %2193 = vmatprep.subr.mxu0 0.0
    %2194 = vmatpush2.msra.mxu0 0.0
    %2195 = vmatprep.subr.mxu0 0.0
    %2196 = vmatpush2.msra.mxu0 0.0
    %2197 = vmatprep.subr.mxu0 0.0
    %2198 = vmatpush2.msra.mxu0 0.0
    %2199 = vmatprep.subr.mxu0 0.0
    %2200 = vmatpush2.msra.mxu0 0.0
    %2201 = vmatprep.subr.mxu0 0.0
    %2202 = vmatpush2.msra.mxu0 0.0
    %2203 = vmatprep.subr.mxu0 0.0
    %2204 = vmatpush2.msra.mxu0 0.0
    %2205 = vmatprep.subr.mxu0 0.0
    %2206 = vmatpush2.msra.mxu0 0.0
    %2207 = vmatprep.subr.mxu0 0.0
    %2208 = vmatpush2.msra.mxu0 0.0
    %2209 = vmatprep.subr.mxu0 0.0
    %2210 = vmatpush2.msra.mxu0 0.0
    %2211 = vmatprep.mubr.f32.mxu0 0.0
    %2212 = vmatmul.mubr.f32.gmra.mxu0 %v2145
    %v2213 = vpop.f32.mrf.mxu0
    %v2214 = vadd.f32 0.0, %v2213
    %v2215 = vpop.f32.mrf.mxu0
    %2216 = vdwg.mxu0
    %v2218 = vlaneseq
    %v2219 = vshrl.u32 %v2218, 7
    %v2220 = vsub.s32 0, %v2219
    %v2221 = vrot.slane %v2122, %v2220
    %v2223 = vadd.f32 %v2221, %v2214
    %s2224 = scalar_lea.vmem %s7, 72
    %v2225 = vld [vmem:[%s2224] sm:$0xff]
    %v2226 = vld [vmem:[%s2224 + $0x8] sm:$0xff]
    %v2227 = vld [vmem:[%s2224 + $0x10] sm:$0xff]
    %v2228 = vld [vmem:[%s2224 + $0x18] sm:$0xff]
    %v2229 = vld [vmem:[%s2224 + $0x20] sm:$0xff]
    %v2230 = vld [vmem:[%s2224 + $0x28] sm:$0xff]
    %v2231 = vld [vmem:[%s2224 + $0x30] sm:$0xff]
    %v2232 = vld [vmem:[%s2224 + $0x38] sm:$0xff]
    %v2233 = vld [vmem:[%s2224 + $0x40] sm:$0xff]
    %v2235 = vrot.slane %v2133, 1
    %v2236 = vrot.slane %v2134, 1
    %v2237 = vsel %vm397, %v2235, %v2236
    %v2238 = vsel %vm2084, %v2237, 0
    %2240 = vmatprep.subr.mxu0 0.0
    %2241 = vmatpush1.msra.mxu0 0.0
    %2242 = vmatprep.subr.mxu0 0.0
    %2243 = vmatpush1.msra.mxu0 0.0
    %2244 = vmatprep.subr.mxu0 0.0
    %2245 = vmatpush1.msra.mxu0 0.0
    %2246 = vmatprep.subr.mxu0 0.0
    %2247 = vmatpush1.msra.mxu0 0.0
    %2248 = vmatprep.subr.mxu0 0.0
    %2249 = vmatpush1.msra.mxu0 0.0
    %2250 = vmatprep.subr.mxu0 0.0
    %2251 = vmatpush1.msra.mxu0 0.0
    %2252 = vmatprep.subr.mxu0 0.0
    %2253 = vmatpush1.msra.mxu0 0.0
    %2254 = vmatprep.subr.mxu0 0.0
    %2255 = vmatpush1.msra.mxu0 %v2233
    %2256 = vmatprep.subr.mxu0 0.0
    %2257 = vmatpush1.msra.mxu0 %v2232
    %2258 = vmatprep.subr.mxu0 0.0
    %2259 = vmatpush1.msra.mxu0 %v2231
    %2260 = vmatprep.subr.mxu0 0.0
    %2261 = vmatpush1.msra.mxu0 %v2230
    %2262 = vmatprep.subr.mxu0 0.0
    %2263 = vmatpush1.msra.mxu0 %v2229
    %2264 = vmatprep.subr.mxu0 0.0
    %2265 = vmatpush1.msra.mxu0 %v2228
    %2266 = vmatprep.subr.mxu0 0.0
    %2267 = vmatpush1.msra.mxu0 %v2227
    %2268 = vmatprep.subr.mxu0 0.0
    %2269 = vmatpush1.msra.mxu0 %v2226
    %2270 = vmatprep.subr.mxu0 0.0
    %2271 = vmatpush1.msra.mxu0 %v2225
    %2272 = vmatprep.subr.mxu0 0.0
    %2273 = vmatpush2.msra.mxu0 0.0
    %2274 = vmatprep.subr.mxu0 0.0
    %2275 = vmatpush2.msra.mxu0 0.0
    %2276 = vmatprep.subr.mxu0 0.0
    %2277 = vmatpush2.msra.mxu0 0.0
    %2278 = vmatprep.subr.mxu0 0.0
    %2279 = vmatpush2.msra.mxu0 0.0
    %2280 = vmatprep.subr.mxu0 0.0
    %2281 = vmatpush2.msra.mxu0 0.0
    %2282 = vmatprep.subr.mxu0 0.0
    %2283 = vmatpush2.msra.mxu0 0.0
    %2284 = vmatprep.subr.mxu0 0.0
    %2285 = vmatpush2.msra.mxu0 0.0
    %2286 = vmatprep.subr.mxu0 0.0
    %2287 = vmatpush2.msra.mxu0 0.0
    %2288 = vmatprep.subr.mxu0 0.0
    %2289 = vmatpush2.msra.mxu0 0.0
    %2290 = vmatprep.subr.mxu0 0.0
    %2291 = vmatpush2.msra.mxu0 0.0
    %2292 = vmatprep.subr.mxu0 0.0
    %2293 = vmatpush2.msra.mxu0 0.0
    %2294 = vmatprep.subr.mxu0 0.0
    %2295 = vmatpush2.msra.mxu0 0.0
    %2296 = vmatprep.subr.mxu0 0.0
    %2297 = vmatpush2.msra.mxu0 0.0
    %2298 = vmatprep.subr.mxu0 0.0
    %2299 = vmatpush2.msra.mxu0 0.0
    %2300 = vmatprep.subr.mxu0 0.0
    %2301 = vmatpush2.msra.mxu0 0.0
    %2302 = vmatprep.subr.mxu0 0.0
    %2303 = vmatpush2.msra.mxu0 0.0
    %2304 = vmatprep.mubr.f32.mxu0 0.0
    %2305 = vmatmul.mubr.f32.gmra.mxu0 %v2238
    %v2306 = vpop.f32.mrf.mxu0
    %v2307 = vadd.f32 0.0, %v2306
    %v2308 = vpop.f32.mrf.mxu0
    %2309 = vdwg.mxu0
    %v2310 = vadd.f32 %v2223, %v2307
    %s2311 = scalar_lea.vmem %s7, 144
    %v2312 = vld [vmem:[%s2311] sm:$0xff]
    %v2313 = vld [vmem:[%s2311 + $0x8] sm:$0xff]
    %v2314 = vld [vmem:[%s2311 + $0x10] sm:$0xff]
    %v2315 = vld [vmem:[%s2311 + $0x18] sm:$0xff]
    %v2316 = vld [vmem:[%s2311 + $0x20] sm:$0xff]
    %v2317 = vld [vmem:[%s2311 + $0x28] sm:$0xff]
    %v2318 = vld [vmem:[%s2311 + $0x30] sm:$0xff]
    %v2319 = vld [vmem:[%s2311 + $0x38] sm:$0xff]
    %v2320 = vld [vmem:[%s2311 + $0x40] sm:$0xff]
    %v2321 = vrot.slane %v2133, 2
    %v2322 = vrot.slane %v2134, 2
    %v2323 = vsel %vm515, %v2321, %v2322
    %v2324 = vsel %vm2084, %v2323, 0
    %2326 = vmatprep.subr.mxu0 0.0
    %2327 = vmatpush1.msra.mxu0 0.0
    %2328 = vmatprep.subr.mxu0 0.0
    %2329 = vmatpush1.msra.mxu0 0.0
    %2330 = vmatprep.subr.mxu0 0.0
    %2331 = vmatpush1.msra.mxu0 0.0
    %2332 = vmatprep.subr.mxu0 0.0
    %2333 = vmatpush1.msra.mxu0 0.0
    %2334 = vmatprep.subr.mxu0 0.0
    %2335 = vmatpush1.msra.mxu0 0.0
    %2336 = vmatprep.subr.mxu0 0.0
    %2337 = vmatpush1.msra.mxu0 0.0
    %2338 = vmatprep.subr.mxu0 0.0
    %2339 = vmatpush1.msra.mxu0 0.0
    %2340 = vmatprep.subr.mxu0 0.0
    %2341 = vmatpush1.msra.mxu0 %v2320
    %2342 = vmatprep.subr.mxu0 0.0
    %2343 = vmatpush1.msra.mxu0 %v2319
    %2344 = vmatprep.subr.mxu0 0.0
    %2345 = vmatpush1.msra.mxu0 %v2318
    %2346 = vmatprep.subr.mxu0 0.0
    %2347 = vmatpush1.msra.mxu0 %v2317
    %2348 = vmatprep.subr.mxu0 0.0
    %2349 = vmatpush1.msra.mxu0 %v2316
    %2350 = vmatprep.subr.mxu0 0.0
    %2351 = vmatpush1.msra.mxu0 %v2315
    %2352 = vmatprep.subr.mxu0 0.0
    %2353 = vmatpush1.msra.mxu0 %v2314
    %2354 = vmatprep.subr.mxu0 0.0
    %2355 = vmatpush1.msra.mxu0 %v2313
    %2356 = vmatprep.subr.mxu0 0.0
    %2357 = vmatpush1.msra.mxu0 %v2312
    %2358 = vmatprep.subr.mxu0 0.0
    %2359 = vmatpush2.msra.mxu0 0.0
    %2360 = vmatprep.subr.mxu0 0.0
    %2361 = vmatpush2.msra.mxu0 0.0
    %2362 = vmatprep.subr.mxu0 0.0
    %2363 = vmatpush2.msra.mxu0 0.0
    %2364 = vmatprep.subr.mxu0 0.0
    %2365 = vmatpush2.msra.mxu0 0.0
    %2366 = vmatprep.subr.mxu0 0.0
    %2367 = vmatpush2.msra.mxu0 0.0
    %2368 = vmatprep.subr.mxu0 0.0
    %2369 = vmatpush2.msra.mxu0 0.0
    %2370 = vmatprep.subr.mxu0 0.0
    %2371 = vmatpush2.msra.mxu0 0.0
    %2372 = vmatprep.subr.mxu0 0.0
    %2373 = vmatpush2.msra.mxu0 0.0
    %2374 = vmatprep.subr.mxu0 0.0
    %2375 = vmatpush2.msra.mxu0 0.0
    %2376 = vmatprep.subr.mxu0 0.0
    %2377 = vmatpush2.msra.mxu0 0.0
    %2378 = vmatprep.subr.mxu0 0.0
    %2379 = vmatpush2.msra.mxu0 0.0
    %2380 = vmatprep.subr.mxu0 0.0
    %2381 = vmatpush2.msra.mxu0 0.0
    %2382 = vmatprep.subr.mxu0 0.0
    %2383 = vmatpush2.msra.mxu0 0.0
    %2384 = vmatprep.subr.mxu0 0.0
    %2385 = vmatpush2.msra.mxu0 0.0
    %2386 = vmatprep.subr.mxu0 0.0
    %2387 = vmatpush2.msra.mxu0 0.0
    %2388 = vmatprep.subr.mxu0 0.0
    %2389 = vmatpush2.msra.mxu0 0.0
    %2390 = vmatprep.mubr.f32.mxu0 0.0
    %2391 = vmatmul.mubr.f32.gmra.mxu0 %v2324
    %v2392 = vpop.f32.mrf.mxu0
    %v2393 = vadd.f32 0.0, %v2392
    %v2394 = vpop.f32.mrf.mxu0
    %2395 = vdwg.mxu0
    %v2396 = vadd.f32 %v2310, %v2393
    %s2397 = scalar_lea.vmem %s7, 216
    %v2398 = vld [vmem:[%s2397] sm:$0xff]
    %v2399 = vld [vmem:[%s2397 + $0x8] sm:$0xff]
    %v2400 = vld [vmem:[%s2397 + $0x10] sm:$0xff]
    %v2401 = vld [vmem:[%s2397 + $0x18] sm:$0xff]
    %v2402 = vld [vmem:[%s2397 + $0x20] sm:$0xff]
    %v2403 = vld [vmem:[%s2397 + $0x28] sm:$0xff]
    %v2404 = vld [vmem:[%s2397 + $0x30] sm:$0xff]
    %v2405 = vld [vmem:[%s2397 + $0x38] sm:$0xff]
    %v2406 = vld [vmem:[%s2397 + $0x40] sm:$0xff]
    %v2407 = vrot.slane %v2133, 3
    %v2408 = vrot.slane %v2134, 3
    %v2409 = vsel %vm633, %v2407, %v2408
    %v2410 = vsel %vm2084, %v2409, 0
    %2412 = vmatprep.subr.mxu0 0.0
    %2413 = vmatpush1.msra.mxu0 0.0
    %2414 = vmatprep.subr.mxu0 0.0
    %2415 = vmatpush1.msra.mxu0 0.0
    %2416 = vmatprep.subr.mxu0 0.0
    %2417 = vmatpush1.msra.mxu0 0.0
    %2418 = vmatprep.subr.mxu0 0.0
    %2419 = vmatpush1.msra.mxu0 0.0
    %2420 = vmatprep.subr.mxu0 0.0
    %2421 = vmatpush1.msra.mxu0 0.0
    %2422 = vmatprep.subr.mxu0 0.0
    %2423 = vmatpush1.msra.mxu0 0.0
    %2424 = vmatprep.subr.mxu0 0.0
    %2425 = vmatpush1.msra.mxu0 0.0
    %2426 = vmatprep.subr.mxu0 0.0
    %2427 = vmatpush1.msra.mxu0 %v2406
    %2428 = vmatprep.subr.mxu0 0.0
    %2429 = vmatpush1.msra.mxu0 %v2405
    %2430 = vmatprep.subr.mxu0 0.0
    %2431 = vmatpush1.msra.mxu0 %v2404
    %2432 = vmatprep.subr.mxu0 0.0
    %2433 = vmatpush1.msra.mxu0 %v2403
    %2434 = vmatprep.subr.mxu0 0.0
    %2435 = vmatpush1.msra.mxu0 %v2402
    %2436 = vmatprep.subr.mxu0 0.0
    %2437 = vmatpush1.msra.mxu0 %v2401
    %2438 = vmatprep.subr.mxu0 0.0
    %2439 = vmatpush1.msra.mxu0 %v2400
    %2440 = vmatprep.subr.mxu0 0.0
    %2441 = vmatpush1.msra.mxu0 %v2399
    %2442 = vmatprep.subr.mxu0 0.0
    %2443 = vmatpush1.msra.mxu0 %v2398
    %2444 = vmatprep.subr.mxu0 0.0
    %2445 = vmatpush2.msra.mxu0 0.0
    %2446 = vmatprep.subr.mxu0 0.0
    %2447 = vmatpush2.msra.mxu0 0.0
    %2448 = vmatprep.subr.mxu0 0.0
    %2449 = vmatpush2.msra.mxu0 0.0
    %2450 = vmatprep.subr.mxu0 0.0
    %2451 = vmatpush2.msra.mxu0 0.0
    %2452 = vmatprep.subr.mxu0 0.0
    %2453 = vmatpush2.msra.mxu0 0.0
    %2454 = vmatprep.subr.mxu0 0.0
    %2455 = vmatpush2.msra.mxu0 0.0
    %2456 = vmatprep.subr.mxu0 0.0
    %2457 = vmatpush2.msra.mxu0 0.0
    %2458 = vmatprep.subr.mxu0 0.0
    %2459 = vmatpush2.msra.mxu0 0.0
    %2460 = vmatprep.subr.mxu0 0.0
    %2461 = vmatpush2.msra.mxu0 0.0
    %2462 = vmatprep.subr.mxu0 0.0
    %2463 = vmatpush2.msra.mxu0 0.0
    %2464 = vmatprep.subr.mxu0 0.0
    %2465 = vmatpush2.msra.mxu0 0.0
    %2466 = vmatprep.subr.mxu0 0.0
    %2467 = vmatpush2.msra.mxu0 0.0
    %2468 = vmatprep.subr.mxu0 0.0
    %2469 = vmatpush2.msra.mxu0 0.0
    %2470 = vmatprep.subr.mxu0 0.0
    %2471 = vmatpush2.msra.mxu0 0.0
    %2472 = vmatprep.subr.mxu0 0.0
    %2473 = vmatpush2.msra.mxu0 0.0
    %2474 = vmatprep.subr.mxu0 0.0
    %2475 = vmatpush2.msra.mxu0 0.0
    %2476 = vmatprep.mubr.f32.mxu0 0.0
    %2477 = vmatmul.mubr.f32.gmra.mxu0 %v2410
    %v2478 = vpop.f32.mrf.mxu0
    %v2479 = vadd.f32 0.0, %v2478
    %v2480 = vpop.f32.mrf.mxu0
    %2481 = vdwg.mxu0
    %v2482 = vadd.f32 %v2396, %v2479
    %s2483 = scalar_lea.vmem %s7, 288
    %v2484 = vld [vmem:[%s2483] sm:$0xff]
    %v2485 = vld [vmem:[%s2483 + $0x8] sm:$0xff]
    %v2486 = vld [vmem:[%s2483 + $0x10] sm:$0xff]
    %v2487 = vld [vmem:[%s2483 + $0x18] sm:$0xff]
    %v2488 = vld [vmem:[%s2483 + $0x20] sm:$0xff]
    %v2489 = vld [vmem:[%s2483 + $0x28] sm:$0xff]
    %v2490 = vld [vmem:[%s2483 + $0x30] sm:$0xff]
    %v2491 = vld [vmem:[%s2483 + $0x38] sm:$0xff]
    %v2492 = vld [vmem:[%s2483 + $0x40] sm:$0xff]
    %v2493 = vrot.slane %v2133, 4
    %v2494 = vrot.slane %v2134, 4
    %v2495 = vsel %vm280, %v2493, %v2494
    %v2496 = vsel %vm2084, %v2495, 0
    %2498 = vmatprep.subr.mxu0 0.0
    %2499 = vmatpush1.msra.mxu0 0.0
    %2500 = vmatprep.subr.mxu0 0.0
    %2501 = vmatpush1.msra.mxu0 0.0
    %2502 = vmatprep.subr.mxu0 0.0
    %2503 = vmatpush1.msra.mxu0 0.0
    %2504 = vmatprep.subr.mxu0 0.0
    %2505 = vmatpush1.msra.mxu0 0.0
    %2506 = vmatprep.subr.mxu0 0.0
    %2507 = vmatpush1.msra.mxu0 0.0
    %2508 = vmatprep.subr.mxu0 0.0
    %2509 = vmatpush1.msra.mxu0 0.0
    %2510 = vmatprep.subr.mxu0 0.0
    %2511 = vmatpush1.msra.mxu0 0.0
    %2512 = vmatprep.subr.mxu0 0.0
    %2513 = vmatpush1.msra.mxu0 %v2492
    %2514 = vmatprep.subr.mxu0 0.0
    %2515 = vmatpush1.msra.mxu0 %v2491
    %2516 = vmatprep.subr.mxu0 0.0
    %2517 = vmatpush1.msra.mxu0 %v2490
    %2518 = vmatprep.subr.mxu0 0.0
    %2519 = vmatpush1.msra.mxu0 %v2489
    %2520 = vmatprep.subr.mxu0 0.0
    %2521 = vmatpush1.msra.mxu0 %v2488
    %2522 = vmatprep.subr.mxu0 0.0
    %2523 = vmatpush1.msra.mxu0 %v2487
    %2524 = vmatprep.subr.mxu0 0.0
    %2525 = vmatpush1.msra.mxu0 %v2486
    %2526 = vmatprep.subr.mxu0 0.0
    %2527 = vmatpush1.msra.mxu0 %v2485
    %2528 = vmatprep.subr.mxu0 0.0
    %2529 = vmatpush1.msra.mxu0 %v2484
    %2530 = vmatprep.subr.mxu0 0.0
    %2531 = vmatpush2.msra.mxu0 0.0
    %2532 = vmatprep.subr.mxu0 0.0
    %2533 = vmatpush2.msra.mxu0 0.0
    %2534 = vmatprep.subr.mxu0 0.0
    %2535 = vmatpush2.msra.mxu0 0.0
    %2536 = vmatprep.subr.mxu0 0.0
    %2537 = vmatpush2.msra.mxu0 0.0
    %2538 = vmatprep.subr.mxu0 0.0
    %2539 = vmatpush2.msra.mxu0 0.0
    %2540 = vmatprep.subr.mxu0 0.0
    %2541 = vmatpush2.msra.mxu0 0.0
    %2542 = vmatprep.subr.mxu0 0.0
    %2543 = vmatpush2.msra.mxu0 0.0
    %2544 = vmatprep.subr.mxu0 0.0
    %2545 = vmatpush2.msra.mxu0 0.0
    %2546 = vmatprep.subr.mxu0 0.0
    %2547 = vmatpush2.msra.mxu0 0.0
    %2548 = vmatprep.subr.mxu0 0.0
    %2549 = vmatpush2.msra.mxu0 0.0
    %2550 = vmatprep.subr.mxu0 0.0
    %2551 = vmatpush2.msra.mxu0 0.0
    %2552 = vmatprep.subr.mxu0 0.0
    %2553 = vmatpush2.msra.mxu0 0.0
    %2554 = vmatprep.subr.mxu0 0.0
    %2555 = vmatpush2.msra.mxu0 0.0
    %2556 = vmatprep.subr.mxu0 0.0
    %2557 = vmatpush2.msra.mxu0 0.0
    %2558 = vmatprep.subr.mxu0 0.0
    %2559 = vmatpush2.msra.mxu0 0.0
    %2560 = vmatprep.subr.mxu0 0.0
    %2561 = vmatpush2.msra.mxu0 0.0
    %2562 = vmatprep.mubr.f32.mxu0 0.0
    %2563 = vmatmul.mubr.f32.gmra.mxu0 %v2496
    %v2564 = vpop.f32.mrf.mxu0
    %v2565 = vadd.f32 0.0, %v2564
    %v2566 = vpop.f32.mrf.mxu0
    %2567 = vdwg.mxu0
    %v2568 = vadd.f32 %v2482, %v2565
    %v2569 = vmax.f32 %v2568, 0.0
    %v2570 = vmul.f32 %v2082, %v2123
    %v2571 = vmul.f32 %v2083, %v2123
    %v2572 = vmax.f32 %v2570, -8.0
    %v2573 = vmax.f32 %v2571, -8.0
    %v2574 = vmin.f32 %v2572, 7.0
    %v2575 = vmin.f32 %v2573, 7.0
    %v2576 = vround.ne.pseudo %v2574
    %v2577 = vround.ne.pseudo %v2575
    %v2578 = vmul.f32 %v2576, %v2132
    %v2579 = vmul.f32 %v2577, %v2132
    %v2581 = vsel %vm2084, %v2578, 0
    %2583 = vmatprep.subr.mxu0 0.0
    %2584 = vmatpush1.msra.mxu0 0.0
    %2585 = vmatprep.subr.mxu0 0.0
    %2586 = vmatpush1.msra.mxu0 0.0
    %2587 = vmatprep.subr.mxu0 0.0
    %2588 = vmatpush1.msra.mxu0 0.0
    %2589 = vmatprep.subr.mxu0 0.0
    %2590 = vmatpush1.msra.mxu0 0.0
    %2591 = vmatprep.subr.mxu0 0.0
    %2592 = vmatpush1.msra.mxu0 0.0
    %2593 = vmatprep.subr.mxu0 0.0
    %2594 = vmatpush1.msra.mxu0 0.0
    %2595 = vmatprep.subr.mxu0 0.0
    %2596 = vmatpush1.msra.mxu0 0.0
    %2597 = vmatprep.subr.mxu0 0.0
    %2598 = vmatpush1.msra.mxu0 %v2143
    %2599 = vmatprep.subr.mxu0 0.0
    %2600 = vmatpush1.msra.mxu0 %v2142
    %2601 = vmatprep.subr.mxu0 0.0
    %2602 = vmatpush1.msra.mxu0 %v2141
    %2603 = vmatprep.subr.mxu0 0.0
    %2604 = vmatpush1.msra.mxu0 %v2140
    %2605 = vmatprep.subr.mxu0 0.0
    %2606 = vmatpush1.msra.mxu0 %v2139
    %2607 = vmatprep.subr.mxu0 0.0
    %2608 = vmatpush1.msra.mxu0 %v2138
    %2609 = vmatprep.subr.mxu0 0.0
    %2610 = vmatpush1.msra.mxu0 %v2137
    %2611 = vmatprep.subr.mxu0 0.0
    %2612 = vmatpush1.msra.mxu0 %v2136
    %2613 = vmatprep.subr.mxu0 0.0
    %2614 = vmatpush1.msra.mxu0 %v2135
    %2615 = vmatprep.subr.mxu0 0.0
    %2616 = vmatpush2.msra.mxu0 0.0
    %2617 = vmatprep.subr.mxu0 0.0
    %2618 = vmatpush2.msra.mxu0 0.0
    %2619 = vmatprep.subr.mxu0 0.0
    %2620 = vmatpush2.msra.mxu0 0.0
    %2621 = vmatprep.subr.mxu0 0.0
    %2622 = vmatpush2.msra.mxu0 0.0
    %2623 = vmatprep.subr.mxu0 0.0
    %2624 = vmatpush2.msra.mxu0 0.0
    %2625 = vmatprep.subr.mxu0 0.0
    %2626 = vmatpush2.msra.mxu0 0.0
    %2627 = vmatprep.subr.mxu0 0.0
    %2628 = vmatpush2.msra.mxu0 0.0
    %2629 = vmatprep.subr.mxu0 0.0
    %2630 = vmatpush2.msra.mxu0 0.0
    %2631 = vmatprep.subr.mxu0 0.0
    %2632 = vmatpush2.msra.mxu0 0.0
    %2633 = vmatprep.subr.mxu0 0.0
    %2634 = vmatpush2.msra.mxu0 0.0
    %2635 = vmatprep.subr.mxu0 0.0
    %2636 = vmatpush2.msra.mxu0 0.0
    %2637 = vmatprep.subr.mxu0 0.0
    %2638 = vmatpush2.msra.mxu0 0.0
    %2639 = vmatprep.subr.mxu0 0.0
    %2640 = vmatpush2.msra.mxu0 0.0
    %2641 = vmatprep.subr.mxu0 0.0
    %2642 = vmatpush2.msra.mxu0 0.0
    %2643 = vmatprep.subr.mxu0 0.0
    %2644 = vmatpush2.msra.mxu0 0.0
    %2645 = vmatprep.subr.mxu0 0.0
    %2646 = vmatpush2.msra.mxu0 0.0
    %2647 = vmatprep.mubr.f32.mxu0 0.0
    %2648 = vmatmul.mubr.f32.gmra.mxu0 %v2581
    %v2649 = vpop.f32.mrf.mxu0
    %v2650 = vadd.f32 0.0, %v2649
    %v2651 = vpop.f32.mrf.mxu0
    %2652 = vdwg.mxu0
    %v2653 = vadd.f32 %v2221, %v2650
    %v2655 = vrot.slane %v2578, 1
    %v2656 = vrot.slane %v2579, 1
    %v2657 = vsel %vm397, %v2655, %v2656
    %v2658 = vsel %vm2084, %v2657, 0
    %2660 = vmatprep.subr.mxu0 0.0
    %2661 = vmatpush1.msra.mxu0 0.0
    %2662 = vmatprep.subr.mxu0 0.0
    %2663 = vmatpush1.msra.mxu0 0.0
    %2664 = vmatprep.subr.mxu0 0.0
    %2665 = vmatpush1.msra.mxu0 0.0
    %2666 = vmatprep.subr.mxu0 0.0
    %2667 = vmatpush1.msra.mxu0 0.0
    %2668 = vmatprep.subr.mxu0 0.0
    %2669 = vmatpush1.msra.mxu0 0.0
    %2670 = vmatprep.subr.mxu0 0.0
    %2671 = vmatpush1.msra.mxu0 0.0
    %2672 = vmatprep.subr.mxu0 0.0
    %2673 = vmatpush1.msra.mxu0 0.0
    %2674 = vmatprep.subr.mxu0 0.0
    %2675 = vmatpush1.msra.mxu0 %v2233
    %2676 = vmatprep.subr.mxu0 0.0
    %2677 = vmatpush1.msra.mxu0 %v2232
    %2678 = vmatprep.subr.mxu0 0.0
    %2679 = vmatpush1.msra.mxu0 %v2231
    %2680 = vmatprep.subr.mxu0 0.0
    %2681 = vmatpush1.msra.mxu0 %v2230
    %2682 = vmatprep.subr.mxu0 0.0
    %2683 = vmatpush1.msra.mxu0 %v2229
    %2684 = vmatprep.subr.mxu0 0.0
    %2685 = vmatpush1.msra.mxu0 %v2228
    %2686 = vmatprep.subr.mxu0 0.0
    %2687 = vmatpush1.msra.mxu0 %v2227
    %2688 = vmatprep.subr.mxu0 0.0
    %2689 = vmatpush1.msra.mxu0 %v2226
    %2690 = vmatprep.subr.mxu0 0.0
    %2691 = vmatpush1.msra.mxu0 %v2225
    %2692 = vmatprep.subr.mxu0 0.0
    %2693 = vmatpush2.msra.mxu0 0.0
    %2694 = vmatprep.subr.mxu0 0.0
    %2695 = vmatpush2.msra.mxu0 0.0
    %2696 = vmatprep.subr.mxu0 0.0
    %2697 = vmatpush2.msra.mxu0 0.0
    %2698 = vmatprep.subr.mxu0 0.0
    %2699 = vmatpush2.msra.mxu0 0.0
    %2700 = vmatprep.subr.mxu0 0.0
    %2701 = vmatpush2.msra.mxu0 0.0
    %2702 = vmatprep.subr.mxu0 0.0
    %2703 = vmatpush2.msra.mxu0 0.0
    %2704 = vmatprep.subr.mxu0 0.0
    %2705 = vmatpush2.msra.mxu0 0.0
    %2706 = vmatprep.subr.mxu0 0.0
    %2707 = vmatpush2.msra.mxu0 0.0
    %2708 = vmatprep.subr.mxu0 0.0
    %2709 = vmatpush2.msra.mxu0 0.0
    %2710 = vmatprep.subr.mxu0 0.0
    %2711 = vmatpush2.msra.mxu0 0.0
    %2712 = vmatprep.subr.mxu0 0.0
    %2713 = vmatpush2.msra.mxu0 0.0
    %2714 = vmatprep.subr.mxu0 0.0
    %2715 = vmatpush2.msra.mxu0 0.0
    %2716 = vmatprep.subr.mxu0 0.0
    %2717 = vmatpush2.msra.mxu0 0.0
    %2718 = vmatprep.subr.mxu0 0.0
    %2719 = vmatpush2.msra.mxu0 0.0
    %2720 = vmatprep.subr.mxu0 0.0
    %2721 = vmatpush2.msra.mxu0 0.0
    %2722 = vmatprep.subr.mxu0 0.0
    %2723 = vmatpush2.msra.mxu0 0.0
    %2724 = vmatprep.mubr.f32.mxu0 0.0
    %2725 = vmatmul.mubr.f32.gmra.mxu0 %v2658
    %v2726 = vpop.f32.mrf.mxu0
    %v2727 = vadd.f32 0.0, %v2726
    %v2728 = vpop.f32.mrf.mxu0
    %2729 = vdwg.mxu0
    %v2730 = vadd.f32 %v2653, %v2727
    %v2731 = vrot.slane %v2578, 2
    %v2732 = vrot.slane %v2579, 2
    %v2733 = vsel %vm515, %v2731, %v2732
    %v2734 = vsel %vm2084, %v2733, 0
    %2736 = vmatprep.subr.mxu0 0.0
    %2737 = vmatpush1.msra.mxu0 0.0
    %2738 = vmatprep.subr.mxu0 0.0
    %2739 = vmatpush1.msra.mxu0 0.0
    %2740 = vmatprep.subr.mxu0 0.0
    %2741 = vmatpush1.msra.mxu0 0.0
    %2742 = vmatprep.subr.mxu0 0.0
    %2743 = vmatpush1.msra.mxu0 0.0
    %2744 = vmatprep.subr.mxu0 0.0
    %2745 = vmatpush1.msra.mxu0 0.0
    %2746 = vmatprep.subr.mxu0 0.0
    %2747 = vmatpush1.msra.mxu0 0.0
    %2748 = vmatprep.subr.mxu0 0.0
    %2749 = vmatpush1.msra.mxu0 0.0
    %2750 = vmatprep.subr.mxu0 0.0
    %2751 = vmatpush1.msra.mxu0 %v2320
    %2752 = vmatprep.subr.mxu0 0.0
    %2753 = vmatpush1.msra.mxu0 %v2319
    %2754 = vmatprep.subr.mxu0 0.0
    %2755 = vmatpush1.msra.mxu0 %v2318
    %2756 = vmatprep.subr.mxu0 0.0
    %2757 = vmatpush1.msra.mxu0 %v2317
    %2758 = vmatprep.subr.mxu0 0.0
    %2759 = vmatpush1.msra.mxu0 %v2316
    %2760 = vmatprep.subr.mxu0 0.0
    %2761 = vmatpush1.msra.mxu0 %v2315
    %2762 = vmatprep.subr.mxu0 0.0
    %2763 = vmatpush1.msra.mxu0 %v2314
    %2764 = vmatprep.subr.mxu0 0.0
    %2765 = vmatpush1.msra.mxu0 %v2313
    %2766 = vmatprep.subr.mxu0 0.0
    %2767 = vmatpush1.msra.mxu0 %v2312
    %2768 = vmatprep.subr.mxu0 0.0
    %2769 = vmatpush2.msra.mxu0 0.0
    %2770 = vmatprep.subr.mxu0 0.0
    %2771 = vmatpush2.msra.mxu0 0.0
    %2772 = vmatprep.subr.mxu0 0.0
    %2773 = vmatpush2.msra.mxu0 0.0
    %2774 = vmatprep.subr.mxu0 0.0
    %2775 = vmatpush2.msra.mxu0 0.0
    %2776 = vmatprep.subr.mxu0 0.0
    %2777 = vmatpush2.msra.mxu0 0.0
    %2778 = vmatprep.subr.mxu0 0.0
    %2779 = vmatpush2.msra.mxu0 0.0
    %2780 = vmatprep.subr.mxu0 0.0
    %2781 = vmatpush2.msra.mxu0 0.0
    %2782 = vmatprep.subr.mxu0 0.0
    %2783 = vmatpush2.msra.mxu0 0.0
    %2784 = vmatprep.subr.mxu0 0.0
    %2785 = vmatpush2.msra.mxu0 0.0
    %2786 = vmatprep.subr.mxu0 0.0
    %2787 = vmatpush2.msra.mxu0 0.0
    %2788 = vmatprep.subr.mxu0 0.0
    %2789 = vmatpush2.msra.mxu0 0.0
    %2790 = vmatprep.subr.mxu0 0.0
    %2791 = vmatpush2.msra.mxu0 0.0
    %2792 = vmatprep.subr.mxu0 0.0
    %2793 = vmatpush2.msra.mxu0 0.0
    %2794 = vmatprep.subr.mxu0 0.0
    %2795 = vmatpush2.msra.mxu0 0.0
    %2796 = vmatprep.subr.mxu0 0.0
    %2797 = vmatpush2.msra.mxu0 0.0
    %2798 = vmatprep.subr.mxu0 0.0
    %2799 = vmatpush2.msra.mxu0 0.0
    %2800 = vmatprep.mubr.f32.mxu0 0.0
    %2801 = vmatmul.mubr.f32.gmra.mxu0 %v2734
    %v2802 = vpop.f32.mrf.mxu0
    %v2803 = vadd.f32 0.0, %v2802
    %v2804 = vpop.f32.mrf.mxu0
    %2805 = vdwg.mxu0
    %v2806 = vadd.f32 %v2730, %v2803
    %v2807 = vrot.slane %v2578, 3
    %v2808 = vrot.slane %v2579, 3
    %v2809 = vsel %vm633, %v2807, %v2808
    %v2810 = vsel %vm2084, %v2809, 0
    %2812 = vmatprep.subr.mxu0 0.0
    %2813 = vmatpush1.msra.mxu0 0.0
    %2814 = vmatprep.subr.mxu0 0.0
    %2815 = vmatpush1.msra.mxu0 0.0
    %2816 = vmatprep.subr.mxu0 0.0
    %2817 = vmatpush1.msra.mxu0 0.0
    %2818 = vmatprep.subr.mxu0 0.0
    %2819 = vmatpush1.msra.mxu0 0.0
    %2820 = vmatprep.subr.mxu0 0.0
    %2821 = vmatpush1.msra.mxu0 0.0
    %2822 = vmatprep.subr.mxu0 0.0
    %2823 = vmatpush1.msra.mxu0 0.0
    %2824 = vmatprep.subr.mxu0 0.0
    %2825 = vmatpush1.msra.mxu0 0.0
    %2826 = vmatprep.subr.mxu0 0.0
    %2827 = vmatpush1.msra.mxu0 %v2406
    %2828 = vmatprep.subr.mxu0 0.0
    %2829 = vmatpush1.msra.mxu0 %v2405
    %2830 = vmatprep.subr.mxu0 0.0
    %2831 = vmatpush1.msra.mxu0 %v2404
    %2832 = vmatprep.subr.mxu0 0.0
    %2833 = vmatpush1.msra.mxu0 %v2403
    %2834 = vmatprep.subr.mxu0 0.0
    %2835 = vmatpush1.msra.mxu0 %v2402
    %2836 = vmatprep.subr.mxu0 0.0
    %2837 = vmatpush1.msra.mxu0 %v2401
    %2838 = vmatprep.subr.mxu0 0.0
    %2839 = vmatpush1.msra.mxu0 %v2400
    %2840 = vmatprep.subr.mxu0 0.0
    %2841 = vmatpush1.msra.mxu0 %v2399
    %2842 = vmatprep.subr.mxu0 0.0
    %2843 = vmatpush1.msra.mxu0 %v2398
    %2844 = vmatprep.subr.mxu0 0.0
    %2845 = vmatpush2.msra.mxu0 0.0
    %2846 = vmatprep.subr.mxu0 0.0
    %2847 = vmatpush2.msra.mxu0 0.0
    %2848 = vmatprep.subr.mxu0 0.0
    %2849 = vmatpush2.msra.mxu0 0.0
    %2850 = vmatprep.subr.mxu0 0.0
    %2851 = vmatpush2.msra.mxu0 0.0
    %2852 = vmatprep.subr.mxu0 0.0
    %2853 = vmatpush2.msra.mxu0 0.0
    %2854 = vmatprep.subr.mxu0 0.0
    %2855 = vmatpush2.msra.mxu0 0.0
    %2856 = vmatprep.subr.mxu0 0.0
    %2857 = vmatpush2.msra.mxu0 0.0
    %2858 = vmatprep.subr.mxu0 0.0
    %2859 = vmatpush2.msra.mxu0 0.0
    %2860 = vmatprep.subr.mxu0 0.0
    %2861 = vmatpush2.msra.mxu0 0.0
    %2862 = vmatprep.subr.mxu0 0.0
    %2863 = vmatpush2.msra.mxu0 0.0
    %2864 = vmatprep.subr.mxu0 0.0
    %2865 = vmatpush2.msra.mxu0 0.0
    %2866 = vmatprep.subr.mxu0 0.0
    %2867 = vmatpush2.msra.mxu0 0.0
    %2868 = vmatprep.subr.mxu0 0.0
    %2869 = vmatpush2.msra.mxu0 0.0
    %2870 = vmatprep.subr.mxu0 0.0
    %2871 = vmatpush2.msra.mxu0 0.0
    %2872 = vmatprep.subr.mxu0 0.0
    %2873 = vmatpush2.msra.mxu0 0.0
    %2874 = vmatprep.subr.mxu0 0.0
    %2875 = vmatpush2.msra.mxu0 0.0
    %2876 = vmatprep.mubr.f32.mxu0 0.0
    %2877 = vmatmul.mubr.f32.gmra.mxu0 %v2810
    %v2878 = vpop.f32.mrf.mxu0
    %v2879 = vadd.f32 0.0, %v2878
    %v2880 = vpop.f32.mrf.mxu0
    %2881 = vdwg.mxu0
    %v2882 = vadd.f32 %v2806, %v2879
    %v2883 = vrot.slane %v2578, 4
    %v2884 = vrot.slane %v2579, 4
    %v2885 = vsel %vm280, %v2883, %v2884
    %v2886 = vsel %vm2084, %v2885, 0
    %2888 = vmatprep.subr.mxu0 0.0
    %2889 = vmatpush1.msra.mxu0 0.0
    %2890 = vmatprep.subr.mxu0 0.0
    %2891 = vmatpush1.msra.mxu0 0.0
    %2892 = vmatprep.subr.mxu0 0.0
    %2893 = vmatpush1.msra.mxu0 0.0
    %2894 = vmatprep.subr.mxu0 0.0
    %2895 = vmatpush1.msra.mxu0 0.0
    %2896 = vmatprep.subr.mxu0 0.0
    %2897 = vmatpush1.msra.mxu0 0.0
    %2898 = vmatprep.subr.mxu0 0.0
    %2899 = vmatpush1.msra.mxu0 0.0
    %2900 = vmatprep.subr.mxu0 0.0
    %2901 = vmatpush1.msra.mxu0 0.0
    %2902 = vmatprep.subr.mxu0 0.0
    %2903 = vmatpush1.msra.mxu0 %v2492
    %2904 = vmatprep.subr.mxu0 0.0
    %2905 = vmatpush1.msra.mxu0 %v2491
    %2906 = vmatprep.subr.mxu0 0.0
    %2907 = vmatpush1.msra.mxu0 %v2490
    %2908 = vmatprep.subr.mxu0 0.0
    %2909 = vmatpush1.msra.mxu0 %v2489
    %2910 = vmatprep.subr.mxu0 0.0
    %2911 = vmatpush1.msra.mxu0 %v2488
    %2912 = vmatprep.subr.mxu0 0.0
    %2913 = vmatpush1.msra.mxu0 %v2487
    %2914 = vmatprep.subr.mxu0 0.0
    %2915 = vmatpush1.msra.mxu0 %v2486
    %2916 = vmatprep.subr.mxu0 0.0
    %2917 = vmatpush1.msra.mxu0 %v2485
    %2918 = vmatprep.subr.mxu0 0.0
    %2919 = vmatpush1.msra.mxu0 %v2484
    %2920 = vmatprep.subr.mxu0 0.0
    %2921 = vmatpush2.msra.mxu0 0.0
    %2922 = vmatprep.subr.mxu0 0.0
    %2923 = vmatpush2.msra.mxu0 0.0
    %2924 = vmatprep.subr.mxu0 0.0
    %2925 = vmatpush2.msra.mxu0 0.0
    %2926 = vmatprep.subr.mxu0 0.0
    %2927 = vmatpush2.msra.mxu0 0.0
    %2928 = vmatprep.subr.mxu0 0.0
    %2929 = vmatpush2.msra.mxu0 0.0
    %2930 = vmatprep.subr.mxu0 0.0
    %2931 = vmatpush2.msra.mxu0 0.0
    %2932 = vmatprep.subr.mxu0 0.0
    %2933 = vmatpush2.msra.mxu0 0.0
    %2934 = vmatprep.subr.mxu0 0.0
    %2935 = vmatpush2.msra.mxu0 0.0
    %2936 = vmatprep.subr.mxu0 0.0
    %2937 = vmatpush2.msra.mxu0 0.0
    %2938 = vmatprep.subr.mxu0 0.0
    %2939 = vmatpush2.msra.mxu0 0.0
    %2940 = vmatprep.subr.mxu0 0.0
    %2941 = vmatpush2.msra.mxu0 0.0
    %2942 = vmatprep.subr.mxu0 0.0
    %2943 = vmatpush2.msra.mxu0 0.0
    %2944 = vmatprep.subr.mxu0 0.0
    %2945 = vmatpush2.msra.mxu0 0.0
    %2946 = vmatprep.subr.mxu0 0.0
    %2947 = vmatpush2.msra.mxu0 0.0
    %2948 = vmatprep.subr.mxu0 0.0
    %2949 = vmatpush2.msra.mxu0 0.0
    %2950 = vmatprep.subr.mxu0 0.0
    %2951 = vmatpush2.msra.mxu0 0.0
    %2952 = vmatprep.mubr.f32.mxu0 0.0
    %2953 = vmatmul.mubr.f32.gmra.mxu0 %v2886
    %v2954 = vpop.f32.mrf.mxu0
    %v2955 = vadd.f32 0.0, %v2954
    %v2956 = vpop.f32.mrf.mxu0
    %2957 = vdwg.mxu0
    %v2958 = vadd.f32 %v2882, %v2955
    %v2959 = vmax.f32 %v2958, 0.0
    %v2960 = vld [vmem:[%s9] sm:$0xff]
    %v2961 = vld [vmem:[%s9 + $0x8] sm:$0xff]
    %v2962 = vld [vmem:[%s9 + $0x10] sm:$0xff]
    %v2963 = vld [vmem:[%s9 + $0x18] sm:$0xff]
    %v2964 = vld [vmem:[%s9 + $0x20] sm:$0xff]
    %v2965 = vld [vmem:[%s9 + $0x28] sm:$0xff]
    %v2966 = vld [vmem:[%s9 + $0x30] sm:$0xff]
    %v2967 = vld [vmem:[%s9 + $0x38] sm:$0xff]
    %v2968 = vld [vmem:[%s9 + $0x40] sm:$0xff]
    %v2969 = vld [vmem:[%s9 + $0x48] sm:$0xff]
    %v2970 = vld [vmem:[%s9 + $0x50] sm:$0xff]
    %v2971 = vld [vmem:[%s9 + $0x58] sm:$0xff]
    %v2972 = vld [vmem:[%s9 + $0x60] sm:$0xff]
    %v2973 = vld [vmem:[%s9 + $0x68] sm:$0xff]
    %v2974 = vld [vmem:[%s9 + $0x70] sm:$0xff]
    %v2975 = vld [vmem:[%s9 + $0x78] sm:$0xff]
    %v2976 = vld [vmem:[%s10] sm:$0xff]
    %v2977 = vld [vmem:[%s10 + $0x8] sm:$0xff]
    %v2978 = vld [vmem:[%s10 + $0x10] sm:$0xff]
    %v2979 = vld [vmem:[%s10 + $0x18] sm:$0xff]
    %v2980 = vld [vmem:[%s10 + $0x20] sm:$0xff]
    %v2981 = vld [vmem:[%s10 + $0x28] sm:$0xff]
    %v2982 = vld [vmem:[%s10 + $0x30] sm:$0xff]
    %v2983 = vld [vmem:[%s10 + $0x38] sm:$0xff]
    %v2984 = vld [vmem:[%s10 + $0x40] sm:$0xff]
    %v2985 = vld [vmem:[%s10 + $0x48] sm:$0xff]
    %v2986 = vld [vmem:[%s10 + $0x50] sm:$0xff]
    %v2987 = vld [vmem:[%s10 + $0x58] sm:$0xff]
    %v2988 = vld [vmem:[%s10 + $0x60] sm:$0xff]
    %v2989 = vld [vmem:[%s10 + $0x68] sm:$0xff]
    %v2990 = vld [vmem:[%s10 + $0x70] sm:$0xff]
    %v2991 = vld [vmem:[%s10 + $0x78] sm:$0xff]
    %vm2992 = vcmask 64512
    %v2993 = vsel %vm2992, %v1398, 0
    %2995 = vmatprep.subr.mxu0 0.0
    %2996 = vmatpush1.msra.mxu0 0.0
    %2997 = vmatprep.subr.mxu0 0.0
    %2998 = vmatpush1.msra.mxu0 0.0
    %2999 = vmatprep.subr.mxu0 0.0
    %3000 = vmatpush1.msra.mxu0 0.0
    %3001 = vmatprep.subr.mxu0 0.0
    %3002 = vmatpush1.msra.mxu0 0.0
    %3003 = vmatprep.subr.mxu0 0.0
    %3004 = vmatpush1.msra.mxu0 0.0
    %3005 = vmatprep.subr.mxu0 0.0
    %3006 = vmatpush1.msra.mxu0 0.0
    %3007 = vmatprep.subr.mxu0 0.0
    %3008 = vmatpush1.msra.mxu0 0.0
    %3009 = vmatprep.subr.mxu0 0.0
    %3010 = vmatpush1.msra.mxu0 0.0
    %3011 = vmatprep.subr.mxu0 0.0
    %3012 = vmatpush1.msra.mxu0 0.0
    %3013 = vmatprep.subr.mxu0 0.0
    %3014 = vmatpush1.msra.mxu0 0.0
    %3015 = vmatprep.subr.mxu0 0.0
    %3016 = vmatpush1.msra.mxu0 0.0
    %3017 = vmatprep.subr.mxu0 0.0
    %3018 = vmatpush1.msra.mxu0 0.0
    %3019 = vmatprep.subr.mxu0 0.0
    %3020 = vmatpush1.msra.mxu0 0.0
    %3021 = vmatprep.subr.mxu0 0.0
    %3022 = vmatpush1.msra.mxu0 0.0
    %3023 = vmatprep.subr.mxu0 0.0
    %3024 = vmatpush1.msra.mxu0 0.0
    %3025 = vmatprep.subr.mxu0 0.0
    %3026 = vmatpush1.msra.mxu0 %v2569
    %3027 = vmatprep.subr.mxu0 0.0
    %3028 = vmatpush2.msra.mxu0 0.0
    %3029 = vmatprep.subr.mxu0 0.0
    %3030 = vmatpush2.msra.mxu0 0.0
    %3031 = vmatprep.subr.mxu0 0.0
    %3032 = vmatpush2.msra.mxu0 0.0
    %3033 = vmatprep.subr.mxu0 0.0
    %3034 = vmatpush2.msra.mxu0 0.0
    %3035 = vmatprep.subr.mxu0 0.0
    %3036 = vmatpush2.msra.mxu0 0.0
    %3037 = vmatprep.subr.mxu0 0.0
    %3038 = vmatpush2.msra.mxu0 0.0
    %3039 = vmatprep.subr.mxu0 0.0
    %3040 = vmatpush2.msra.mxu0 0.0
    %3041 = vmatprep.subr.mxu0 0.0
    %3042 = vmatpush2.msra.mxu0 0.0
    %3043 = vmatprep.subr.mxu0 0.0
    %3044 = vmatpush2.msra.mxu0 0.0
    %3045 = vmatprep.subr.mxu0 0.0
    %3046 = vmatpush2.msra.mxu0 0.0
    %3047 = vmatprep.subr.mxu0 0.0
    %3048 = vmatpush2.msra.mxu0 0.0
    %3049 = vmatprep.subr.mxu0 0.0
    %3050 = vmatpush2.msra.mxu0 0.0
    %3051 = vmatprep.subr.mxu0 0.0
    %3052 = vmatpush2.msra.mxu0 0.0
    %3053 = vmatprep.subr.mxu0 0.0
    %3054 = vmatpush2.msra.mxu0 0.0
    %3055 = vmatprep.subr.mxu0 0.0
    %3056 = vmatpush2.msra.mxu0 0.0
    %3057 = vmatprep.subr.mxu0 0.0
    %3058 = vmatpush2.msra.mxu0 0.0
    %3059 = vmatprep.mubr.f32.mxu0 0.0
    %3060 = vmatmul.mubr.f32.gmra.mxu0 %v2993
    %v3061 = vpop.f32.mrf.mxu0
    %v3062 = vadd.f32 0.0, %v3061
    %v3063 = vpop.f32.mrf.mxu0
    %3064 = vdwg.mxu0
    %v3065 = vsel %vm2992, %v1400, 0
    %3067 = vmatprep.subr.mxu0 0.0
    %3068 = vmatpush1.msra.mxu0 0.0
    %3069 = vmatprep.subr.mxu0 0.0
    %3070 = vmatpush1.msra.mxu0 0.0
    %3071 = vmatprep.subr.mxu0 0.0
    %3072 = vmatpush1.msra.mxu0 0.0
    %3073 = vmatprep.subr.mxu0 0.0
    %3074 = vmatpush1.msra.mxu0 0.0
    %3075 = vmatprep.subr.mxu0 0.0
    %3076 = vmatpush1.msra.mxu0 0.0
    %3077 = vmatprep.subr.mxu0 0.0
    %3078 = vmatpush1.msra.mxu0 0.0
    %3079 = vmatprep.subr.mxu0 0.0
    %3080 = vmatpush1.msra.mxu0 0.0
    %3081 = vmatprep.subr.mxu0 0.0
    %3082 = vmatpush1.msra.mxu0 0.0
    %3083 = vmatprep.subr.mxu0 0.0
    %3084 = vmatpush1.msra.mxu0 0.0
    %3085 = vmatprep.subr.mxu0 0.0
    %3086 = vmatpush1.msra.mxu0 0.0
    %3087 = vmatprep.subr.mxu0 0.0
    %3088 = vmatpush1.msra.mxu0 0.0
    %3089 = vmatprep.subr.mxu0 0.0
    %3090 = vmatpush1.msra.mxu0 0.0
    %3091 = vmatprep.subr.mxu0 0.0
    %3092 = vmatpush1.msra.mxu0 0.0
    %3093 = vmatprep.subr.mxu0 0.0
    %3094 = vmatpush1.msra.mxu0 0.0
    %3095 = vmatprep.subr.mxu0 0.0
    %3096 = vmatpush1.msra.mxu0 0.0
    %3097 = vmatprep.subr.mxu0 0.0
    %3098 = vmatpush1.msra.mxu0 %v2569
    %3099 = vmatprep.subr.mxu0 0.0
    %3100 = vmatpush2.msra.mxu0 0.0
    %3101 = vmatprep.subr.mxu0 0.0
    %3102 = vmatpush2.msra.mxu0 0.0
    %3103 = vmatprep.subr.mxu0 0.0
    %3104 = vmatpush2.msra.mxu0 0.0
    %3105 = vmatprep.subr.mxu0 0.0
    %3106 = vmatpush2.msra.mxu0 0.0
    %3107 = vmatprep.subr.mxu0 0.0
    %3108 = vmatpush2.msra.mxu0 0.0
    %3109 = vmatprep.subr.mxu0 0.0
    %3110 = vmatpush2.msra.mxu0 0.0
    %3111 = vmatprep.subr.mxu0 0.0
    %3112 = vmatpush2.msra.mxu0 0.0
    %3113 = vmatprep.subr.mxu0 0.0
    %3114 = vmatpush2.msra.mxu0 0.0
    %3115 = vmatprep.subr.mxu0 0.0
    %3116 = vmatpush2.msra.mxu0 0.0
    %3117 = vmatprep.subr.mxu0 0.0
    %3118 = vmatpush2.msra.mxu0 0.0
    %3119 = vmatprep.subr.mxu0 0.0
    %3120 = vmatpush2.msra.mxu0 0.0
    %3121 = vmatprep.subr.mxu0 0.0
    %3122 = vmatpush2.msra.mxu0 0.0
    %3123 = vmatprep.subr.mxu0 0.0
    %3124 = vmatpush2.msra.mxu0 0.0
    %3125 = vmatprep.subr.mxu0 0.0
    %3126 = vmatpush2.msra.mxu0 0.0
    %3127 = vmatprep.subr.mxu0 0.0
    %3128 = vmatpush2.msra.mxu0 0.0
    %3129 = vmatprep.subr.mxu0 0.0
    %3130 = vmatpush2.msra.mxu0 0.0
    %3131 = vmatprep.mubr.f32.mxu0 0.0
    %3132 = vmatmul.mubr.f32.gmra.mxu0 %v3065
    %v3133 = vpop.f32.mrf.mxu0
    %v3134 = vadd.f32 0.0, %v3133
    %v3135 = vpop.f32.mrf.mxu0
    %3136 = vdwg.mxu0
    %v3137 = vmax.f32 %v3062, %v3134
    %3138 = vmatprep.subr.mxu0 0.0
    %3139 = vmatpush1.msra.mxu0 %v2975
    %3140 = vmatprep.subr.mxu0 0.0
    %3141 = vmatpush1.msra.mxu0 %v2974
    %3142 = vmatprep.subr.mxu0 0.0
    %3143 = vmatpush1.msra.mxu0 %v2973
    %3144 = vmatprep.subr.mxu0 0.0
    %3145 = vmatpush1.msra.mxu0 %v2972
    %3146 = vmatprep.subr.mxu0 0.0
    %3147 = vmatpush1.msra.mxu0 %v2971
    %3148 = vmatprep.subr.mxu0 0.0
    %3149 = vmatpush1.msra.mxu0 %v2970
    %3150 = vmatprep.subr.mxu0 0.0
    %3151 = vmatpush1.msra.mxu0 %v2969
    %3152 = vmatprep.subr.mxu0 0.0
    %3153 = vmatpush1.msra.mxu0 %v2968
    %3154 = vmatprep.subr.mxu0 0.0
    %3155 = vmatpush1.msra.mxu0 %v2967
    %3156 = vmatprep.subr.mxu0 0.0
    %3157 = vmatpush1.msra.mxu0 %v2966
    %3158 = vmatprep.subr.mxu0 0.0
    %3159 = vmatpush1.msra.mxu0 %v2965
    %3160 = vmatprep.subr.mxu0 0.0
    %3161 = vmatpush1.msra.mxu0 %v2964
    %3162 = vmatprep.subr.mxu0 0.0
    %3163 = vmatpush1.msra.mxu0 %v2963
    %3164 = vmatprep.subr.mxu0 0.0
    %3165 = vmatpush1.msra.mxu0 %v2962
    %3166 = vmatprep.subr.mxu0 0.0
    %3167 = vmatpush1.msra.mxu0 %v2961
    %3168 = vmatprep.subr.mxu0 0.0
    %3169 = vmatpush1.msra.mxu0 %v2960
    %3170 = vmatprep.subr.mxu0 0.0
    %3171 = vmatpush2.msra.mxu0 0.0
    %3172 = vmatprep.subr.mxu0 0.0
    %3173 = vmatpush2.msra.mxu0 0.0
    %3174 = vmatprep.subr.mxu0 0.0
    %3175 = vmatpush2.msra.mxu0 0.0
    %3176 = vmatprep.subr.mxu0 0.0
    %3177 = vmatpush2.msra.mxu0 0.0
    %3178 = vmatprep.subr.mxu0 0.0
    %3179 = vmatpush2.msra.mxu0 0.0
    %3180 = vmatprep.subr.mxu0 0.0
    %3181 = vmatpush2.msra.mxu0 0.0
    %3182 = vmatprep.subr.mxu0 0.0
    %3183 = vmatpush2.msra.mxu0 0.0
    %3184 = vmatprep.subr.mxu0 0.0
    %3185 = vmatpush2.msra.mxu0 0.0
    %3186 = vmatprep.subr.mxu0 0.0
    %3187 = vmatpush2.msra.mxu0 0.0
    %3188 = vmatprep.subr.mxu0 0.0
    %3189 = vmatpush2.msra.mxu0 0.0
    %3190 = vmatprep.subr.mxu0 0.0
    %3191 = vmatpush2.msra.mxu0 0.0
    %3192 = vmatprep.subr.mxu0 0.0
    %3193 = vmatpush2.msra.mxu0 0.0
    %3194 = vmatprep.subr.mxu0 0.0
    %3195 = vmatpush2.msra.mxu0 0.0
    %3196 = vmatprep.subr.mxu0 0.0
    %3197 = vmatpush2.msra.mxu0 0.0
    %3198 = vmatprep.subr.mxu0 0.0
    %3199 = vmatpush2.msra.mxu0 0.0
    %3200 = vmatprep.subr.mxu0 0.0
    %3201 = vmatpush2.msra.mxu0 0.0
    %3202 = vmatprep.mubr.f32.mxu0 0.0
    %3203 = vmatmul.mubr.f32.gmra.mxu0 %v3137
    %v3204 = vpop.f32.mrf.mxu0
    %v3205 = vadd.f32 0.0, %v3204
    %v3206 = vpop.f32.mrf.mxu0
    %3207 = vdwg.mxu0
    %3208 = vmatprep.subr.mxu0 0.0
    %3209 = vmatpush1.msra.mxu0 %v2991
    %3210 = vmatprep.subr.mxu0 0.0
    %3211 = vmatpush1.msra.mxu0 %v2990
    %3212 = vmatprep.subr.mxu0 0.0
    %3213 = vmatpush1.msra.mxu0 %v2989
    %3214 = vmatprep.subr.mxu0 0.0
    %3215 = vmatpush1.msra.mxu0 %v2988
    %3216 = vmatprep.subr.mxu0 0.0
    %3217 = vmatpush1.msra.mxu0 %v2987
    %3218 = vmatprep.subr.mxu0 0.0
    %3219 = vmatpush1.msra.mxu0 %v2986
    %3220 = vmatprep.subr.mxu0 0.0
    %3221 = vmatpush1.msra.mxu0 %v2985
    %3222 = vmatprep.subr.mxu0 0.0
    %3223 = vmatpush1.msra.mxu0 %v2984
    %3224 = vmatprep.subr.mxu0 0.0
    %3225 = vmatpush1.msra.mxu0 %v2983
    %3226 = vmatprep.subr.mxu0 0.0
    %3227 = vmatpush1.msra.mxu0 %v2982
    %3228 = vmatprep.subr.mxu0 0.0
    %3229 = vmatpush1.msra.mxu0 %v2981
    %3230 = vmatprep.subr.mxu0 0.0
    %3231 = vmatpush1.msra.mxu0 %v2980
    %3232 = vmatprep.subr.mxu0 0.0
    %3233 = vmatpush1.msra.mxu0 %v2979
    %3234 = vmatprep.subr.mxu0 0.0
    %3235 = vmatpush1.msra.mxu0 %v2978
    %3236 = vmatprep.subr.mxu0 0.0
    %3237 = vmatpush1.msra.mxu0 %v2977
    %3238 = vmatprep.subr.mxu0 0.0
    %3239 = vmatpush1.msra.mxu0 %v2976
    %3240 = vmatprep.subr.mxu0 0.0
    %3241 = vmatpush2.msra.mxu0 0.0
    %3242 = vmatprep.subr.mxu0 0.0
    %3243 = vmatpush2.msra.mxu0 0.0
    %3244 = vmatprep.subr.mxu0 0.0
    %3245 = vmatpush2.msra.mxu0 0.0
    %3246 = vmatprep.subr.mxu0 0.0
    %3247 = vmatpush2.msra.mxu0 0.0
    %3248 = vmatprep.subr.mxu0 0.0
    %3249 = vmatpush2.msra.mxu0 0.0
    %3250 = vmatprep.subr.mxu0 0.0
    %3251 = vmatpush2.msra.mxu0 0.0
    %3252 = vmatprep.subr.mxu0 0.0
    %3253 = vmatpush2.msra.mxu0 0.0
    %3254 = vmatprep.subr.mxu0 0.0
    %3255 = vmatpush2.msra.mxu0 0.0
    %3256 = vmatprep.subr.mxu0 0.0
    %3257 = vmatpush2.msra.mxu0 0.0
    %3258 = vmatprep.subr.mxu0 0.0
    %3259 = vmatpush2.msra.mxu0 0.0
    %3260 = vmatprep.subr.mxu0 0.0
    %3261 = vmatpush2.msra.mxu0 0.0
    %3262 = vmatprep.subr.mxu0 0.0
    %3263 = vmatpush2.msra.mxu0 0.0
    %3264 = vmatprep.subr.mxu0 0.0
    %3265 = vmatpush2.msra.mxu0 0.0
    %3266 = vmatprep.subr.mxu0 0.0
    %3267 = vmatpush2.msra.mxu0 0.0
    %3268 = vmatprep.subr.mxu0 0.0
    %3269 = vmatpush2.msra.mxu0 0.0
    %3270 = vmatprep.subr.mxu0 0.0
    %3271 = vmatpush2.msra.mxu0 0.0
    %3272 = vmatprep.mubr.f32.mxu0 0.0
    %3273 = vmatmul.mubr.f32.gmra.mxu0 %v3137
    %v3274 = vpop.f32.mrf.mxu0
    %v3275 = vadd.f32 0.0, %v3274
    %v3276 = vpop.f32.mrf.mxu0
    %3277 = vdwg.mxu0
    %v3278 = vmax.f32 %v3205, %v3275
    %3279 = vmatprep.subr.mxu0 0.0
    %3280 = vmatpush1.msra.mxu0 0.0
    %3281 = vmatprep.subr.mxu0 0.0
    %3282 = vmatpush1.msra.mxu0 0.0
    %3283 = vmatprep.subr.mxu0 0.0
    %3284 = vmatpush1.msra.mxu0 0.0
    %3285 = vmatprep.subr.mxu0 0.0
    %3286 = vmatpush1.msra.mxu0 0.0
    %3287 = vmatprep.subr.mxu0 0.0
    %3288 = vmatpush1.msra.mxu0 0.0
    %3289 = vmatprep.subr.mxu0 0.0
    %3290 = vmatpush1.msra.mxu0 0.0
    %3291 = vmatprep.subr.mxu0 0.0
    %3292 = vmatpush1.msra.mxu0 0.0
    %3293 = vmatprep.subr.mxu0 0.0
    %3294 = vmatpush1.msra.mxu0 0.0
    %3295 = vmatprep.subr.mxu0 0.0
    %3296 = vmatpush1.msra.mxu0 0.0
    %3297 = vmatprep.subr.mxu0 0.0
    %3298 = vmatpush1.msra.mxu0 0.0
    %3299 = vmatprep.subr.mxu0 0.0
    %3300 = vmatpush1.msra.mxu0 0.0
    %3301 = vmatprep.subr.mxu0 0.0
    %3302 = vmatpush1.msra.mxu0 0.0
    %3303 = vmatprep.subr.mxu0 0.0
    %3304 = vmatpush1.msra.mxu0 0.0
    %3305 = vmatprep.subr.mxu0 0.0
    %3306 = vmatpush1.msra.mxu0 0.0
    %3307 = vmatprep.subr.mxu0 0.0
    %3308 = vmatpush1.msra.mxu0 0.0
    %3309 = vmatprep.subr.mxu0 0.0
    %3310 = vmatpush1.msra.mxu0 %v2959
    %3311 = vmatprep.subr.mxu0 0.0
    %3312 = vmatpush2.msra.mxu0 0.0
    %3313 = vmatprep.subr.mxu0 0.0
    %3314 = vmatpush2.msra.mxu0 0.0
    %3315 = vmatprep.subr.mxu0 0.0
    %3316 = vmatpush2.msra.mxu0 0.0
    %3317 = vmatprep.subr.mxu0 0.0
    %3318 = vmatpush2.msra.mxu0 0.0
    %3319 = vmatprep.subr.mxu0 0.0
    %3320 = vmatpush2.msra.mxu0 0.0
    %3321 = vmatprep.subr.mxu0 0.0
    %3322 = vmatpush2.msra.mxu0 0.0
    %3323 = vmatprep.subr.mxu0 0.0
    %3324 = vmatpush2.msra.mxu0 0.0
    %3325 = vmatprep.subr.mxu0 0.0
    %3326 = vmatpush2.msra.mxu0 0.0
    %3327 = vmatprep.subr.mxu0 0.0
    %3328 = vmatpush2.msra.mxu0 0.0
    %3329 = vmatprep.subr.mxu0 0.0
    %3330 = vmatpush2.msra.mxu0 0.0
    %3331 = vmatprep.subr.mxu0 0.0
    %3332 = vmatpush2.msra.mxu0 0.0
    %3333 = vmatprep.subr.mxu0 0.0
    %3334 = vmatpush2.msra.mxu0 0.0
    %3335 = vmatprep.subr.mxu0 0.0
    %3336 = vmatpush2.msra.mxu0 0.0
    %3337 = vmatprep.subr.mxu0 0.0
    %3338 = vmatpush2.msra.mxu0 0.0
    %3339 = vmatprep.subr.mxu0 0.0
    %3340 = vmatpush2.msra.mxu0 0.0
    %3341 = vmatprep.subr.mxu0 0.0
    %3342 = vmatpush2.msra.mxu0 0.0
    %3343 = vmatprep.mubr.f32.mxu0 0.0
    %3344 = vmatmul.mubr.f32.gmra.mxu0 %v2993
    %v3345 = vpop.f32.mrf.mxu0
    %v3346 = vadd.f32 0.0, %v3345
    %v3347 = vpop.f32.mrf.mxu0
    %3348 = vdwg.mxu0
    %3349 = vmatprep.subr.mxu0 0.0
    %3350 = vmatpush1.msra.mxu0 0.0
    %3351 = vmatprep.subr.mxu0 0.0
    %3352 = vmatpush1.msra.mxu0 0.0
    %3353 = vmatprep.subr.mxu0 0.0
    %3354 = vmatpush1.msra.mxu0 0.0
    %3355 = vmatprep.subr.mxu0 0.0
    %3356 = vmatpush1.msra.mxu0 0.0
    %3357 = vmatprep.subr.mxu0 0.0
    %3358 = vmatpush1.msra.mxu0 0.0
    %3359 = vmatprep.subr.mxu0 0.0
    %3360 = vmatpush1.msra.mxu0 0.0
    %3361 = vmatprep.subr.mxu0 0.0
    %3362 = vmatpush1.msra.mxu0 0.0
    %3363 = vmatprep.subr.mxu0 0.0
    %3364 = vmatpush1.msra.mxu0 0.0
    %3365 = vmatprep.subr.mxu0 0.0
    %3366 = vmatpush1.msra.mxu0 0.0
    %3367 = vmatprep.subr.mxu0 0.0
    %3368 = vmatpush1.msra.mxu0 0.0
    %3369 = vmatprep.subr.mxu0 0.0
    %3370 = vmatpush1.msra.mxu0 0.0
    %3371 = vmatprep.subr.mxu0 0.0
    %3372 = vmatpush1.msra.mxu0 0.0
    %3373 = vmatprep.subr.mxu0 0.0
    %3374 = vmatpush1.msra.mxu0 0.0
    %3375 = vmatprep.subr.mxu0 0.0
    %3376 = vmatpush1.msra.mxu0 0.0
    %3377 = vmatprep.subr.mxu0 0.0
    %3378 = vmatpush1.msra.mxu0 0.0
    %3379 = vmatprep.subr.mxu0 0.0
    %3380 = vmatpush1.msra.mxu0 %v2959
    %3381 = vmatprep.subr.mxu0 0.0
    %3382 = vmatpush2.msra.mxu0 0.0
    %3383 = vmatprep.subr.mxu0 0.0
    %3384 = vmatpush2.msra.mxu0 0.0
    %3385 = vmatprep.subr.mxu0 0.0
    %3386 = vmatpush2.msra.mxu0 0.0
    %3387 = vmatprep.subr.mxu0 0.0
    %3388 = vmatpush2.msra.mxu0 0.0
    %3389 = vmatprep.subr.mxu0 0.0
    %3390 = vmatpush2.msra.mxu0 0.0
    %3391 = vmatprep.subr.mxu0 0.0
    %3392 = vmatpush2.msra.mxu0 0.0
    %3393 = vmatprep.subr.mxu0 0.0
    %3394 = vmatpush2.msra.mxu0 0.0
    %3395 = vmatprep.subr.mxu0 0.0
    %3396 = vmatpush2.msra.mxu0 0.0
    %3397 = vmatprep.subr.mxu0 0.0
    %3398 = vmatpush2.msra.mxu0 0.0
    %3399 = vmatprep.subr.mxu0 0.0
    %3400 = vmatpush2.msra.mxu0 0.0
    %3401 = vmatprep.subr.mxu0 0.0
    %3402 = vmatpush2.msra.mxu0 0.0
    %3403 = vmatprep.subr.mxu0 0.0
    %3404 = vmatpush2.msra.mxu0 0.0
    %3405 = vmatprep.subr.mxu0 0.0
    %3406 = vmatpush2.msra.mxu0 0.0
    %3407 = vmatprep.subr.mxu0 0.0
    %3408 = vmatpush2.msra.mxu0 0.0
    %3409 = vmatprep.subr.mxu0 0.0
    %3410 = vmatpush2.msra.mxu0 0.0
    %3411 = vmatprep.subr.mxu0 0.0
    %3412 = vmatpush2.msra.mxu0 0.0
    %3413 = vmatprep.mubr.f32.mxu0 0.0
    %3414 = vmatmul.mubr.f32.gmra.mxu0 %v3065
    %v3415 = vpop.f32.mrf.mxu0
    %v3416 = vadd.f32 0.0, %v3415
    %v3417 = vpop.f32.mrf.mxu0
    %3418 = vdwg.mxu0
    %v3419 = vmax.f32 %v3346, %v3416
    %3420 = vmatprep.subr.mxu0 0.0
    %3421 = vmatpush1.msra.mxu0 %v2975
    %3422 = vmatprep.subr.mxu0 0.0
    %3423 = vmatpush1.msra.mxu0 %v2974
    %3424 = vmatprep.subr.mxu0 0.0
    %3425 = vmatpush1.msra.mxu0 %v2973
    %3426 = vmatprep.subr.mxu0 0.0
    %3427 = vmatpush1.msra.mxu0 %v2972
    %3428 = vmatprep.subr.mxu0 0.0
    %3429 = vmatpush1.msra.mxu0 %v2971
    %3430 = vmatprep.subr.mxu0 0.0
    %3431 = vmatpush1.msra.mxu0 %v2970
    %3432 = vmatprep.subr.mxu0 0.0
    %3433 = vmatpush1.msra.mxu0 %v2969
    %3434 = vmatprep.subr.mxu0 0.0
    %3435 = vmatpush1.msra.mxu0 %v2968
    %3436 = vmatprep.subr.mxu0 0.0
    %3437 = vmatpush1.msra.mxu0 %v2967
    %3438 = vmatprep.subr.mxu0 0.0
    %3439 = vmatpush1.msra.mxu0 %v2966
    %3440 = vmatprep.subr.mxu0 0.0
    %3441 = vmatpush1.msra.mxu0 %v2965
    %3442 = vmatprep.subr.mxu0 0.0
    %3443 = vmatpush1.msra.mxu0 %v2964
    %3444 = vmatprep.subr.mxu0 0.0
    %3445 = vmatpush1.msra.mxu0 %v2963
    %3446 = vmatprep.subr.mxu0 0.0
    %3447 = vmatpush1.msra.mxu0 %v2962
    %3448 = vmatprep.subr.mxu0 0.0
    %3449 = vmatpush1.msra.mxu0 %v2961
    %3450 = vmatprep.subr.mxu0 0.0
    %3451 = vmatpush1.msra.mxu0 %v2960
    %3452 = vmatprep.subr.mxu0 0.0
    %3453 = vmatpush2.msra.mxu0 0.0
    %3454 = vmatprep.subr.mxu0 0.0
    %3455 = vmatpush2.msra.mxu0 0.0
    %3456 = vmatprep.subr.mxu0 0.0
    %3457 = vmatpush2.msra.mxu0 0.0
    %3458 = vmatprep.subr.mxu0 0.0
    %3459 = vmatpush2.msra.mxu0 0.0
    %3460 = vmatprep.subr.mxu0 0.0
    %3461 = vmatpush2.msra.mxu0 0.0
    %3462 = vmatprep.subr.mxu0 0.0
    %3463 = vmatpush2.msra.mxu0 0.0
    %3464 = vmatprep.subr.mxu0 0.0
    %3465 = vmatpush2.msra.mxu0 0.0
    %3466 = vmatprep.subr.mxu0 0.0
    %3467 = vmatpush2.msra.mxu0 0.0
    %3468 = vmatprep.subr.mxu0 0.0
    %3469 = vmatpush2.msra.mxu0 0.0
    %3470 = vmatprep.subr.mxu0 0.0
    %3471 = vmatpush2.msra.mxu0 0.0
    %3472 = vmatprep.subr.mxu0 0.0
    %3473 = vmatpush2.msra.mxu0 0.0
    %3474 = vmatprep.subr.mxu0 0.0
    %3475 = vmatpush2.msra.mxu0 0.0
    %3476 = vmatprep.subr.mxu0 0.0
    %3477 = vmatpush2.msra.mxu0 0.0
    %3478 = vmatprep.subr.mxu0 0.0
    %3479 = vmatpush2.msra.mxu0 0.0
    %3480 = vmatprep.subr.mxu0 0.0
    %3481 = vmatpush2.msra.mxu0 0.0
    %3482 = vmatprep.subr.mxu0 0.0
    %3483 = vmatpush2.msra.mxu0 0.0
    %3484 = vmatprep.mubr.f32.mxu0 0.0
    %3485 = vmatmul.mubr.f32.gmra.mxu0 %v3419
    %v3486 = vpop.f32.mrf.mxu0
    %v3487 = vadd.f32 0.0, %v3486
    %v3488 = vpop.f32.mrf.mxu0
    %3489 = vdwg.mxu0
    %3490 = vmatprep.subr.mxu0 0.0
    %3491 = vmatpush1.msra.mxu0 %v2991
    %3492 = vmatprep.subr.mxu0 0.0
    %3493 = vmatpush1.msra.mxu0 %v2990
    %3494 = vmatprep.subr.mxu0 0.0
    %3495 = vmatpush1.msra.mxu0 %v2989
    %3496 = vmatprep.subr.mxu0 0.0
    %3497 = vmatpush1.msra.mxu0 %v2988
    %3498 = vmatprep.subr.mxu0 0.0
    %3499 = vmatpush1.msra.mxu0 %v2987
    %3500 = vmatprep.subr.mxu0 0.0
    %3501 = vmatpush1.msra.mxu0 %v2986
    %3502 = vmatprep.subr.mxu0 0.0
    %3503 = vmatpush1.msra.mxu0 %v2985
    %3504 = vmatprep.subr.mxu0 0.0
    %3505 = vmatpush1.msra.mxu0 %v2984
    %3506 = vmatprep.subr.mxu0 0.0
    %3507 = vmatpush1.msra.mxu0 %v2983
    %3508 = vmatprep.subr.mxu0 0.0
    %3509 = vmatpush1.msra.mxu0 %v2982
    %3510 = vmatprep.subr.mxu0 0.0
    %3511 = vmatpush1.msra.mxu0 %v2981
    %3512 = vmatprep.subr.mxu0 0.0
    %3513 = vmatpush1.msra.mxu0 %v2980
    %3514 = vmatprep.subr.mxu0 0.0
    %3515 = vmatpush1.msra.mxu0 %v2979
    %3516 = vmatprep.subr.mxu0 0.0
    %3517 = vmatpush1.msra.mxu0 %v2978
    %3518 = vmatprep.subr.mxu0 0.0
    %3519 = vmatpush1.msra.mxu0 %v2977
    %3520 = vmatprep.subr.mxu0 0.0
    %3521 = vmatpush1.msra.mxu0 %v2976
    %3522 = vmatprep.subr.mxu0 0.0
    %3523 = vmatpush2.msra.mxu0 0.0
    %3524 = vmatprep.subr.mxu0 0.0
    %3525 = vmatpush2.msra.mxu0 0.0
    %3526 = vmatprep.subr.mxu0 0.0
    %3527 = vmatpush2.msra.mxu0 0.0
    %3528 = vmatprep.subr.mxu0 0.0
    %3529 = vmatpush2.msra.mxu0 0.0
    %3530 = vmatprep.subr.mxu0 0.0
    %3531 = vmatpush2.msra.mxu0 0.0
    %3532 = vmatprep.subr.mxu0 0.0
    %3533 = vmatpush2.msra.mxu0 0.0
    %3534 = vmatprep.subr.mxu0 0.0
    %3535 = vmatpush2.msra.mxu0 0.0
    %3536 = vmatprep.subr.mxu0 0.0
    %3537 = vmatpush2.msra.mxu0 0.0
    %3538 = vmatprep.subr.mxu0 0.0
    %3539 = vmatpush2.msra.mxu0 0.0
    %3540 = vmatprep.subr.mxu0 0.0
    %3541 = vmatpush2.msra.mxu0 0.0
    %3542 = vmatprep.subr.mxu0 0.0
    %3543 = vmatpush2.msra.mxu0 0.0
    %3544 = vmatprep.subr.mxu0 0.0
    %3545 = vmatpush2.msra.mxu0 0.0
    %3546 = vmatprep.subr.mxu0 0.0
    %3547 = vmatpush2.msra.mxu0 0.0
    %3548 = vmatprep.subr.mxu0 0.0
    %3549 = vmatpush2.msra.mxu0 0.0
    %3550 = vmatprep.subr.mxu0 0.0
    %3551 = vmatpush2.msra.mxu0 0.0
    %3552 = vmatprep.subr.mxu0 0.0
    %3553 = vmatpush2.msra.mxu0 0.0
    %3554 = vmatprep.mubr.f32.mxu0 0.0
    %3555 = vmatmul.mubr.f32.gmra.mxu0 %v3419
    %v3556 = vpop.f32.mrf.mxu0
    %v3557 = vadd.f32 0.0, %v3556
    %v3558 = vpop.f32.mrf.mxu0
    %3559 = vdwg.mxu0
    %v3560 = vmax.f32 %v3487, %v3557
    %vm3561 = vcmask 519168
    %v3562 = vsel %vm3561, %v3278, 0.0
    %3563 = vadd.xlane.f32.xlu0 %v3562
    %v3564 = vpop.xlane.xlu0 %3563
    %v3565 = vrot.slane %v3564, 4
    %v3566 = vadd.f32 %v3564, %v3565
    %v3567 = vrot.slane %v3566, 2
    %v3568 = vadd.f32 %v3566, %v3567
    %v3569 = vrot.slane %v3568, 1
    %v3570 = vadd.f32 %v3568, %v3569
    %s3571 = vtos %v3570
    %s3572 = sadd.f32 %s3571, 0.0
    %v3573 = vsel %vm3561, %v3560, 0.0
    %3574 = vadd.xlane.f32.xlu0 %v3573
    %v3575 = vpop.xlane.xlu0 %3574
    %v3576 = vrot.slane %v3575, 4
    %v3577 = vadd.f32 %v3575, %v3576
    %v3578 = vrot.slane %v3577, 2
    %v3579 = vadd.f32 %v3577, %v3578
    %v3580 = vrot.slane %v3579, 1
    %v3581 = vadd.f32 %v3579, %v3580
    %s3582 = vtos %v3581
    %s3583 = sadd.f32 %s3572, %s3582
    %v3584 = vrcp.pop 512.0
    %s3585 = vtos %v3584
    %s3586 = smul.f32 %s3583, %s3585
    %s3587 = smul.f32 %s3586, 2.0
    %v3588 = vrcp.pop 2.6457512
    %s3589 = vtos %v3588
    %s3590 = smul.f32 %s3587, %s3589
    %v3591 = vstv %s3590
    %v3592 = vrcp.pop %v3591
    %s3593 = vtos %v3592
    %v3594 = vld [vmem:[#allocation11] sm:$0x1]
    %v3595 = vstv %s3593
    %v3596 = vmul.f32 %v3278, %v3595
    %v3597 = vmax.f32 %v3596, -8.0
    %v3598 = vmin.f32 %v3597, 7.0
    %v3599 = vround.ne.pseudo %v3598
    %v3600 = vstv %s3590
    %v3601 = vmul.f32 %v3599, %v3600
    %v3602 = vld [vmem:[%s11] sm:$0xff]
    %v3603 = vld [vmem:[%s11 + $0x8] sm:$0xff]
    %v3604 = vld [vmem:[%s11 + $0x10] sm:$0xff]
    %v3605 = vld [vmem:[%s11 + $0x18] sm:$0xff]
    %v3606 = vld [vmem:[%s11 + $0x20] sm:$0xff]
    %v3607 = vld [vmem:[%s11 + $0x28] sm:$0xff]
    %v3608 = vld [vmem:[%s11 + $0x30] sm:$0xff]
    %v3609 = vld [vmem:[%s11 + $0x38] sm:$0xff]
    %vm3610 = vcmask 523264
    %v3612 = vsel %vm3610, %v3601, 0
    %3614 = vmatprep.subr.mxu0 0.0
    %3615 = vmatpush1.msra.mxu0 0.0
    %3616 = vmatprep.subr.mxu0 0.0
    %3617 = vmatpush1.msra.mxu0 0.0
    %3618 = vmatprep.subr.mxu0 0.0
    %3619 = vmatpush1.msra.mxu0 0.0
    %3620 = vmatprep.subr.mxu0 0.0
    %3621 = vmatpush1.msra.mxu0 0.0
    %3622 = vmatprep.subr.mxu0 0.0
    %3623 = vmatpush1.msra.mxu0 0.0
    %3624 = vmatprep.subr.mxu0 0.0
    %3625 = vmatpush1.msra.mxu0 0.0
    %3626 = vmatprep.subr.mxu0 0.0
    %3627 = vmatpush1.msra.mxu0 0.0
    %3628 = vmatprep.subr.mxu0 0.0
    %3629 = vmatpush1.msra.mxu0 0.0
    %3630 = vmatprep.subr.mxu0 0.0
    %3631 = vmatpush1.msra.mxu0 %v3609
    %3632 = vmatprep.subr.mxu0 0.0
    %3633 = vmatpush1.msra.mxu0 %v3608
    %3634 = vmatprep.subr.mxu0 0.0
    %3635 = vmatpush1.msra.mxu0 %v3607
    %3636 = vmatprep.subr.mxu0 0.0
    %3637 = vmatpush1.msra.mxu0 %v3606
    %3638 = vmatprep.subr.mxu0 0.0
    %3639 = vmatpush1.msra.mxu0 %v3605
    %3640 = vmatprep.subr.mxu0 0.0
    %3641 = vmatpush1.msra.mxu0 %v3604
    %3642 = vmatprep.subr.mxu0 0.0
    %3643 = vmatpush1.msra.mxu0 %v3603
    %3644 = vmatprep.subr.mxu0 0.0
    %3645 = vmatpush1.msra.mxu0 %v3602
    %3646 = vmatprep.subr.mxu0 0.0
    %3647 = vmatpush2.msra.mxu0 0.0
    %3648 = vmatprep.subr.mxu0 0.0
    %3649 = vmatpush2.msra.mxu0 0.0
    %3650 = vmatprep.subr.mxu0 0.0
    %3651 = vmatpush2.msra.mxu0 0.0
    %3652 = vmatprep.subr.mxu0 0.0
    %3653 = vmatpush2.msra.mxu0 0.0
    %3654 = vmatprep.subr.mxu0 0.0
    %3655 = vmatpush2.msra.mxu0 0.0
    %3656 = vmatprep.subr.mxu0 0.0
    %3657 = vmatpush2.msra.mxu0 0.0
    %3658 = vmatprep.subr.mxu0 0.0
    %3659 = vmatpush2.msra.mxu0 0.0
    %3660 = vmatprep.subr.mxu0 0.0
    %3661 = vmatpush2.msra.mxu0 0.0
    %3662 = vmatprep.subr.mxu0 0.0
    %3663 = vmatpush2.msra.mxu0 0.0
    %3664 = vmatprep.subr.mxu0 0.0
    %3665 = vmatpush2.msra.mxu0 0.0
    %3666 = vmatprep.subr.mxu0 0.0
    %3667 = vmatpush2.msra.mxu0 0.0
    %3668 = vmatprep.subr.mxu0 0.0
    %3669 = vmatpush2.msra.mxu0 0.0
    %3670 = vmatprep.subr.mxu0 0.0
    %3671 = vmatpush2.msra.mxu0 0.0
    %3672 = vmatprep.subr.mxu0 0.0
    %3673 = vmatpush2.msra.mxu0 0.0
    %3674 = vmatprep.subr.mxu0 0.0
    %3675 = vmatpush2.msra.mxu0 0.0
    %3676 = vmatprep.subr.mxu0 0.0
    %3677 = vmatpush2.msra.mxu0 0.0
    %3678 = vmatprep.mubr.f32.mxu0 0.0
    %3679 = vmatmul.mubr.f32.gmra.mxu0 %v3612
    %v3680 = vpop.f32.mrf.mxu0
    %v3681 = vadd.f32 0.0, %v3680
    %v3682 = vpop.f32.mrf.mxu0
    %3683 = vdwg.mxu0
    %v3684 = vadd.f32 %v3594, %v3681
    %s3685 = scalar_lea.vmem %s11, 64
    %v3686 = vld [vmem:[%s3685] sm:$0xff]
    %v3687 = vld [vmem:[%s3685 + $0x8] sm:$0xff]
    %v3688 = vld [vmem:[%s3685 + $0x10] sm:$0xff]
    %v3689 = vld [vmem:[%s3685 + $0x18] sm:$0xff]
    %v3690 = vld [vmem:[%s3685 + $0x20] sm:$0xff]
    %v3691 = vld [vmem:[%s3685 + $0x28] sm:$0xff]
    %v3692 = vld [vmem:[%s3685 + $0x30] sm:$0xff]
    %v3693 = vld [vmem:[%s3685 + $0x38] sm:$0xff]
    %v3694 = vrot.slane %v3601, 1
    %v3695 = vsel %vm3610, %v3694, 0
    %3697 = vmatprep.subr.mxu0 0.0
    %3698 = vmatpush1.msra.mxu0 0.0
    %3699 = vmatprep.subr.mxu0 0.0
    %3700 = vmatpush1.msra.mxu0 0.0
    %3701 = vmatprep.subr.mxu0 0.0
    %3702 = vmatpush1.msra.mxu0 0.0
    %3703 = vmatprep.subr.mxu0 0.0
    %3704 = vmatpush1.msra.mxu0 0.0
    %3705 = vmatprep.subr.mxu0 0.0
    %3706 = vmatpush1.msra.mxu0 0.0
    %3707 = vmatprep.subr.mxu0 0.0
    %3708 = vmatpush1.msra.mxu0 0.0
    %3709 = vmatprep.subr.mxu0 0.0
    %3710 = vmatpush1.msra.mxu0 0.0
    %3711 = vmatprep.subr.mxu0 0.0
    %3712 = vmatpush1.msra.mxu0 0.0
    %3713 = vmatprep.subr.mxu0 0.0
    %3714 = vmatpush1.msra.mxu0 %v3693
    %3715 = vmatprep.subr.mxu0 0.0
    %3716 = vmatpush1.msra.mxu0 %v3692
    %3717 = vmatprep.subr.mxu0 0.0
    %3718 = vmatpush1.msra.mxu0 %v3691
    %3719 = vmatprep.subr.mxu0 0.0
    %3720 = vmatpush1.msra.mxu0 %v3690
    %3721 = vmatprep.subr.mxu0 0.0
    %3722 = vmatpush1.msra.mxu0 %v3689
    %3723 = vmatprep.subr.mxu0 0.0
    %3724 = vmatpush1.msra.mxu0 %v3688
    %3725 = vmatprep.subr.mxu0 0.0
    %3726 = vmatpush1.msra.mxu0 %v3687
    %3727 = vmatprep.subr.mxu0 0.0
    %3728 = vmatpush1.msra.mxu0 %v3686
    %3729 = vmatprep.subr.mxu0 0.0
    %3730 = vmatpush2.msra.mxu0 0.0
    %3731 = vmatprep.subr.mxu0 0.0
    %3732 = vmatpush2.msra.mxu0 0.0
    %3733 = vmatprep.subr.mxu0 0.0
    %3734 = vmatpush2.msra.mxu0 0.0
    %3735 = vmatprep.subr.mxu0 0.0
    %3736 = vmatpush2.msra.mxu0 0.0
    %3737 = vmatprep.subr.mxu0 0.0
    %3738 = vmatpush2.msra.mxu0 0.0
    %3739 = vmatprep.subr.mxu0 0.0
    %3740 = vmatpush2.msra.mxu0 0.0
    %3741 = vmatprep.subr.mxu0 0.0
    %3742 = vmatpush2.msra.mxu0 0.0
    %3743 = vmatprep.subr.mxu0 0.0
    %3744 = vmatpush2.msra.mxu0 0.0
    %3745 = vmatprep.subr.mxu0 0.0
    %3746 = vmatpush2.msra.mxu0 0.0
    %3747 = vmatprep.subr.mxu0 0.0
    %3748 = vmatpush2.msra.mxu0 0.0
    %3749 = vmatprep.subr.mxu0 0.0
    %3750 = vmatpush2.msra.mxu0 0.0
    %3751 = vmatprep.subr.mxu0 0.0
    %3752 = vmatpush2.msra.mxu0 0.0
    %3753 = vmatprep.subr.mxu0 0.0
    %3754 = vmatpush2.msra.mxu0 0.0
    %3755 = vmatprep.subr.mxu0 0.0
    %3756 = vmatpush2.msra.mxu0 0.0
    %3757 = vmatprep.subr.mxu0 0.0
    %3758 = vmatpush2.msra.mxu0 0.0
    %3759 = vmatprep.subr.mxu0 0.0
    %3760 = vmatpush2.msra.mxu0 0.0
    %3761 = vmatprep.mubr.f32.mxu0 0.0
    %3762 = vmatmul.mubr.f32.gmra.mxu0 %v3695
    %v3763 = vpop.f32.mrf.mxu0
    %v3764 = vadd.f32 0.0, %v3763
    %v3765 = vpop.f32.mrf.mxu0
    %3766 = vdwg.mxu0
    %v3767 = vadd.f32 %v3684, %v3764
    %s3768 = scalar_lea.vmem %s11, 128
    %v3769 = vld [vmem:[%s3768] sm:$0xff]
    %v3770 = vld [vmem:[%s3768 + $0x8] sm:$0xff]
    %v3771 = vld [vmem:[%s3768 + $0x10] sm:$0xff]
    %v3772 = vld [vmem:[%s3768 + $0x18] sm:$0xff]
    %v3773 = vld [vmem:[%s3768 + $0x20] sm:$0xff]
    %v3774 = vld [vmem:[%s3768 + $0x28] sm:$0xff]
    %v3775 = vld [vmem:[%s3768 + $0x30] sm:$0xff]
    %v3776 = vld [vmem:[%s3768 + $0x38] sm:$0xff]
    %v3777 = vrot.slane %v3601, 2
    %v3778 = vsel %vm3610, %v3777, 0
    %3780 = vmatprep.subr.mxu0 0.0
    %3781 = vmatpush1.msra.mxu0 0.0
    %3782 = vmatprep.subr.mxu0 0.0
    %3783 = vmatpush1.msra.mxu0 0.0
    %3784 = vmatprep.subr.mxu0 0.0
    %3785 = vmatpush1.msra.mxu0 0.0
    %3786 = vmatprep.subr.mxu0 0.0
    %3787 = vmatpush1.msra.mxu0 0.0
    %3788 = vmatprep.subr.mxu0 0.0
    %3789 = vmatpush1.msra.mxu0 0.0
    %3790 = vmatprep.subr.mxu0 0.0
    %3791 = vmatpush1.msra.mxu0 0.0
    %3792 = vmatprep.subr.mxu0 0.0
    %3793 = vmatpush1.msra.mxu0 0.0
    %3794 = vmatprep.subr.mxu0 0.0
    %3795 = vmatpush1.msra.mxu0 0.0
    %3796 = vmatprep.subr.mxu0 0.0
    %3797 = vmatpush1.msra.mxu0 %v3776
    %3798 = vmatprep.subr.mxu0 0.0
    %3799 = vmatpush1.msra.mxu0 %v3775
    %3800 = vmatprep.subr.mxu0 0.0
    %3801 = vmatpush1.msra.mxu0 %v3774
    %3802 = vmatprep.subr.mxu0 0.0
    %3803 = vmatpush1.msra.mxu0 %v3773
    %3804 = vmatprep.subr.mxu0 0.0
    %3805 = vmatpush1.msra.mxu0 %v3772
    %3806 = vmatprep.subr.mxu0 0.0
    %3807 = vmatpush1.msra.mxu0 %v3771
    %3808 = vmatprep.subr.mxu0 0.0
    %3809 = vmatpush1.msra.mxu0 %v3770
    %3810 = vmatprep.subr.mxu0 0.0
    %3811 = vmatpush1.msra.mxu0 %v3769
    %3812 = vmatprep.subr.mxu0 0.0
    %3813 = vmatpush2.msra.mxu0 0.0
    %3814 = vmatprep.subr.mxu0 0.0
    %3815 = vmatpush2.msra.mxu0 0.0
    %3816 = vmatprep.subr.mxu0 0.0
    %3817 = vmatpush2.msra.mxu0 0.0
    %3818 = vmatprep.subr.mxu0 0.0
    %3819 = vmatpush2.msra.mxu0 0.0
    %3820 = vmatprep.subr.mxu0 0.0
    %3821 = vmatpush2.msra.mxu0 0.0
    %3822 = vmatprep.subr.mxu0 0.0
    %3823 = vmatpush2.msra.mxu0 0.0
    %3824 = vmatprep.subr.mxu0 0.0
    %3825 = vmatpush2.msra.mxu0 0.0
    %3826 = vmatprep.subr.mxu0 0.0
    %3827 = vmatpush2.msra.mxu0 0.0
    %3828 = vmatprep.subr.mxu0 0.0
    %3829 = vmatpush2.msra.mxu0 0.0
    %3830 = vmatprep.subr.mxu0 0.0
    %3831 = vmatpush2.msra.mxu0 0.0
    %3832 = vmatprep.subr.mxu0 0.0
    %3833 = vmatpush2.msra.mxu0 0.0
    %3834 = vmatprep.subr.mxu0 0.0
    %3835 = vmatpush2.msra.mxu0 0.0
    %3836 = vmatprep.subr.mxu0 0.0
    %3837 = vmatpush2.msra.mxu0 0.0
    %3838 = vmatprep.subr.mxu0 0.0
    %3839 = vmatpush2.msra.mxu0 0.0
    %3840 = vmatprep.subr.mxu0 0.0
    %3841 = vmatpush2.msra.mxu0 0.0
    %3842 = vmatprep.subr.mxu0 0.0
    %3843 = vmatpush2.msra.mxu0 0.0
    %3844 = vmatprep.mubr.f32.mxu0 0.0
    %3845 = vmatmul.mubr.f32.gmra.mxu0 %v3778
    %v3846 = vpop.f32.mrf.mxu0
    %v3847 = vadd.f32 0.0, %v3846
    %v3848 = vpop.f32.mrf.mxu0
    %3849 = vdwg.mxu0
    %v3850 = vadd.f32 %v3767, %v3847
    %s3851 = scalar_lea.vmem %s11, 192
    %v3852 = vld [vmem:[%s3851] sm:$0xff]
    %v3853 = vld [vmem:[%s3851 + $0x8] sm:$0xff]
    %v3854 = vld [vmem:[%s3851 + $0x10] sm:$0xff]
    %v3855 = vld [vmem:[%s3851 + $0x18] sm:$0xff]
    %v3856 = vld [vmem:[%s3851 + $0x20] sm:$0xff]
    %v3857 = vld [vmem:[%s3851 + $0x28] sm:$0xff]
    %v3858 = vld [vmem:[%s3851 + $0x30] sm:$0xff]
    %v3859 = vld [vmem:[%s3851 + $0x38] sm:$0xff]
    %v3860 = vrot.slane %v3601, 3
    %v3861 = vsel %vm3610, %v3860, 0
    %3863 = vmatprep.subr.mxu0 0.0
    %3864 = vmatpush1.msra.mxu0 0.0
    %3865 = vmatprep.subr.mxu0 0.0
    %3866 = vmatpush1.msra.mxu0 0.0
    %3867 = vmatprep.subr.mxu0 0.0
    %3868 = vmatpush1.msra.mxu0 0.0
    %3869 = vmatprep.subr.mxu0 0.0
    %3870 = vmatpush1.msra.mxu0 0.0
    %3871 = vmatprep.subr.mxu0 0.0
    %3872 = vmatpush1.msra.mxu0 0.0
    %3873 = vmatprep.subr.mxu0 0.0
    %3874 = vmatpush1.msra.mxu0 0.0
    %3875 = vmatprep.subr.mxu0 0.0
    %3876 = vmatpush1.msra.mxu0 0.0
    %3877 = vmatprep.subr.mxu0 0.0
    %3878 = vmatpush1.msra.mxu0 0.0
    %3879 = vmatprep.subr.mxu0 0.0
    %3880 = vmatpush1.msra.mxu0 %v3859
    %3881 = vmatprep.subr.mxu0 0.0
    %3882 = vmatpush1.msra.mxu0 %v3858
    %3883 = vmatprep.subr.mxu0 0.0
    %3884 = vmatpush1.msra.mxu0 %v3857
    %3885 = vmatprep.subr.mxu0 0.0
    %3886 = vmatpush1.msra.mxu0 %v3856
    %3887 = vmatprep.subr.mxu0 0.0
    %3888 = vmatpush1.msra.mxu0 %v3855
    %3889 = vmatprep.subr.mxu0 0.0
    %3890 = vmatpush1.msra.mxu0 %v3854
    %3891 = vmatprep.subr.mxu0 0.0
    %3892 = vmatpush1.msra.mxu0 %v3853
    %3893 = vmatprep.subr.mxu0 0.0
    %3894 = vmatpush1.msra.mxu0 %v3852
    %3895 = vmatprep.subr.mxu0 0.0
    %3896 = vmatpush2.msra.mxu0 0.0
    %3897 = vmatprep.subr.mxu0 0.0
    %3898 = vmatpush2.msra.mxu0 0.0
    %3899 = vmatprep.subr.mxu0 0.0
    %3900 = vmatpush2.msra.mxu0 0.0
    %3901 = vmatprep.subr.mxu0 0.0
    %3902 = vmatpush2.msra.mxu0 0.0
    %3903 = vmatprep.subr.mxu0 0.0
    %3904 = vmatpush2.msra.mxu0 0.0
    %3905 = vmatprep.subr.mxu0 0.0
    %3906 = vmatpush2.msra.mxu0 0.0
    %3907 = vmatprep.subr.mxu0 0.0
    %3908 = vmatpush2.msra.mxu0 0.0
    %3909 = vmatprep.subr.mxu0 0.0
    %3910 = vmatpush2.msra.mxu0 0.0
    %3911 = vmatprep.subr.mxu0 0.0
    %3912 = vmatpush2.msra.mxu0 0.0
    %3913 = vmatprep.subr.mxu0 0.0
    %3914 = vmatpush2.msra.mxu0 0.0
    %3915 = vmatprep.subr.mxu0 0.0
    %3916 = vmatpush2.msra.mxu0 0.0
    %3917 = vmatprep.subr.mxu0 0.0
    %3918 = vmatpush2.msra.mxu0 0.0
    %3919 = vmatprep.subr.mxu0 0.0
    %3920 = vmatpush2.msra.mxu0 0.0
    %3921 = vmatprep.subr.mxu0 0.0
    %3922 = vmatpush2.msra.mxu0 0.0
    %3923 = vmatprep.subr.mxu0 0.0
    %3924 = vmatpush2.msra.mxu0 0.0
    %3925 = vmatprep.subr.mxu0 0.0
    %3926 = vmatpush2.msra.mxu0 0.0
    %3927 = vmatprep.mubr.f32.mxu0 0.0
    %3928 = vmatmul.mubr.f32.gmra.mxu0 %v3861
    %v3929 = vpop.f32.mrf.mxu0
    %v3930 = vadd.f32 0.0, %v3929
    %v3931 = vpop.f32.mrf.mxu0
    %3932 = vdwg.mxu0
    %v3933 = vadd.f32 %v3850, %v3930
    %v3934 = vmax.f32 %v3933, 0.0
    %v3935 = vmul.f32 %v3560, %v3595
    %v3936 = vmax.f32 %v3935, -8.0
    %v3937 = vmin.f32 %v3936, 7.0
    %v3938 = vround.ne.pseudo %v3937
    %v3939 = vmul.f32 %v3938, %v3600
    %v3941 = vsel %vm3610, %v3939, 0
    %3943 = vmatprep.subr.mxu0 0.0
    %3944 = vmatpush1.msra.mxu0 0.0
    %3945 = vmatprep.subr.mxu0 0.0
    %3946 = vmatpush1.msra.mxu0 0.0
    %3947 = vmatprep.subr.mxu0 0.0
    %3948 = vmatpush1.msra.mxu0 0.0
    %3949 = vmatprep.subr.mxu0 0.0
    %3950 = vmatpush1.msra.mxu0 0.0
    %3951 = vmatprep.subr.mxu0 0.0
    %3952 = vmatpush1.msra.mxu0 0.0
    %3953 = vmatprep.subr.mxu0 0.0
    %3954 = vmatpush1.msra.mxu0 0.0
    %3955 = vmatprep.subr.mxu0 0.0
    %3956 = vmatpush1.msra.mxu0 0.0
    %3957 = vmatprep.subr.mxu0 0.0
    %3958 = vmatpush1.msra.mxu0 0.0
    %3959 = vmatprep.subr.mxu0 0.0
    %3960 = vmatpush1.msra.mxu0 %v3609
    %3961 = vmatprep.subr.mxu0 0.0
    %3962 = vmatpush1.msra.mxu0 %v3608
    %3963 = vmatprep.subr.mxu0 0.0
    %3964 = vmatpush1.msra.mxu0 %v3607
    %3965 = vmatprep.subr.mxu0 0.0
    %3966 = vmatpush1.msra.mxu0 %v3606
    %3967 = vmatprep.subr.mxu0 0.0
    %3968 = vmatpush1.msra.mxu0 %v3605
    %3969 = vmatprep.subr.mxu0 0.0
    %3970 = vmatpush1.msra.mxu0 %v3604
    %3971 = vmatprep.subr.mxu0 0.0
    %3972 = vmatpush1.msra.mxu0 %v3603
    %3973 = vmatprep.subr.mxu0 0.0
    %3974 = vmatpush1.msra.mxu0 %v3602
    %3975 = vmatprep.subr.mxu0 0.0
    %3976 = vmatpush2.msra.mxu0 0.0
    %3977 = vmatprep.subr.mxu0 0.0
    %3978 = vmatpush2.msra.mxu0 0.0
    %3979 = vmatprep.subr.mxu0 0.0
    %3980 = vmatpush2.msra.mxu0 0.0
    %3981 = vmatprep.subr.mxu0 0.0
    %3982 = vmatpush2.msra.mxu0 0.0
    %3983 = vmatprep.subr.mxu0 0.0
    %3984 = vmatpush2.msra.mxu0 0.0
    %3985 = vmatprep.subr.mxu0 0.0
    %3986 = vmatpush2.msra.mxu0 0.0
    %3987 = vmatprep.subr.mxu0 0.0
    %3988 = vmatpush2.msra.mxu0 0.0
    %3989 = vmatprep.subr.mxu0 0.0
    %3990 = vmatpush2.msra.mxu0 0.0
    %3991 = vmatprep.subr.mxu0 0.0
    %3992 = vmatpush2.msra.mxu0 0.0
    %3993 = vmatprep.subr.mxu0 0.0
    %3994 = vmatpush2.msra.mxu0 0.0
    %3995 = vmatprep.subr.mxu0 0.0
    %3996 = vmatpush2.msra.mxu0 0.0
    %3997 = vmatprep.subr.mxu0 0.0
    %3998 = vmatpush2.msra.mxu0 0.0
    %3999 = vmatprep.subr.mxu0 0.0
    %4000 = vmatpush2.msra.mxu0 0.0
    %4001 = vmatprep.subr.mxu0 0.0
    %4002 = vmatpush2.msra.mxu0 0.0
    %4003 = vmatprep.subr.mxu0 0.0
    %4004 = vmatpush2.msra.mxu0 0.0
    %4005 = vmatprep.subr.mxu0 0.0
    %4006 = vmatpush2.msra.mxu0 0.0
    %4007 = vmatprep.mubr.f32.mxu0 0.0
    %4008 = vmatmul.mubr.f32.gmra.mxu0 %v3941
    %v4009 = vpop.f32.mrf.mxu0
    %v4010 = vadd.f32 0.0, %v4009
    %v4011 = vpop.f32.mrf.mxu0
    %4012 = vdwg.mxu0
    %v4013 = vadd.f32 %v3594, %v4010
    %v4014 = vrot.slane %v3939, 1
    %v4015 = vsel %vm3610, %v4014, 0
    %4017 = vmatprep.subr.mxu0 0.0
    %4018 = vmatpush1.msra.mxu0 0.0
    %4019 = vmatprep.subr.mxu0 0.0
    %4020 = vmatpush1.msra.mxu0 0.0
    %4021 = vmatprep.subr.mxu0 0.0
    %4022 = vmatpush1.msra.mxu0 0.0
    %4023 = vmatprep.subr.mxu0 0.0
    %4024 = vmatpush1.msra.mxu0 0.0
    %4025 = vmatprep.subr.mxu0 0.0
    %4026 = vmatpush1.msra.mxu0 0.0
    %4027 = vmatprep.subr.mxu0 0.0
    %4028 = vmatpush1.msra.mxu0 0.0
    %4029 = vmatprep.subr.mxu0 0.0
    %4030 = vmatpush1.msra.mxu0 0.0
    %4031 = vmatprep.subr.mxu0 0.0
    %4032 = vmatpush1.msra.mxu0 0.0
    %4033 = vmatprep.subr.mxu0 0.0
    %4034 = vmatpush1.msra.mxu0 %v3693
    %4035 = vmatprep.subr.mxu0 0.0
    %4036 = vmatpush1.msra.mxu0 %v3692
    %4037 = vmatprep.subr.mxu0 0.0
    %4038 = vmatpush1.msra.mxu0 %v3691
    %4039 = vmatprep.subr.mxu0 0.0
    %4040 = vmatpush1.msra.mxu0 %v3690
    %4041 = vmatprep.subr.mxu0 0.0
    %4042 = vmatpush1.msra.mxu0 %v3689
    %4043 = vmatprep.subr.mxu0 0.0
    %4044 = vmatpush1.msra.mxu0 %v3688
    %4045 = vmatprep.subr.mxu0 0.0
    %4046 = vmatpush1.msra.mxu0 %v3687
    %4047 = vmatprep.subr.mxu0 0.0
    %4048 = vmatpush1.msra.mxu0 %v3686
    %4049 = vmatprep.subr.mxu0 0.0
    %4050 = vmatpush2.msra.mxu0 0.0
    %4051 = vmatprep.subr.mxu0 0.0
    %4052 = vmatpush2.msra.mxu0 0.0
    %4053 = vmatprep.subr.mxu0 0.0
    %4054 = vmatpush2.msra.mxu0 0.0
    %4055 = vmatprep.subr.mxu0 0.0
    %4056 = vmatpush2.msra.mxu0 0.0
    %4057 = vmatprep.subr.mxu0 0.0
    %4058 = vmatpush2.msra.mxu0 0.0
    %4059 = vmatprep.subr.mxu0 0.0
    %4060 = vmatpush2.msra.mxu0 0.0
    %4061 = vmatprep.subr.mxu0 0.0
    %4062 = vmatpush2.msra.mxu0 0.0
    %4063 = vmatprep.subr.mxu0 0.0
    %4064 = vmatpush2.msra.mxu0 0.0
    %4065 = vmatprep.subr.mxu0 0.0
    %4066 = vmatpush2.msra.mxu0 0.0
    %4067 = vmatprep.subr.mxu0 0.0
    %4068 = vmatpush2.msra.mxu0 0.0
    %4069 = vmatprep.subr.mxu0 0.0
    %4070 = vmatpush2.msra.mxu0 0.0
    %4071 = vmatprep.subr.mxu0 0.0
    %4072 = vmatpush2.msra.mxu0 0.0
    %4073 = vmatprep.subr.mxu0 0.0
    %4074 = vmatpush2.msra.mxu0 0.0
    %4075 = vmatprep.subr.mxu0 0.0
    %4076 = vmatpush2.msra.mxu0 0.0
    %4077 = vmatprep.subr.mxu0 0.0
    %4078 = vmatpush2.msra.mxu0 0.0
    %4079 = vmatprep.subr.mxu0 0.0
    %4080 = vmatpush2.msra.mxu0 0.0
    %4081 = vmatprep.mubr.f32.mxu0 0.0
    %4082 = vmatmul.mubr.f32.gmra.mxu0 %v4015
    %v4083 = vpop.f32.mrf.mxu0
    %v4084 = vadd.f32 0.0, %v4083
    %v4085 = vpop.f32.mrf.mxu0
    %4086 = vdwg.mxu0
    %v4087 = vadd.f32 %v4013, %v4084
    %v4088 = vrot.slane %v3939, 2
    %v4089 = vsel %vm3610, %v4088, 0
    %4091 = vmatprep.subr.mxu0 0.0
    %4092 = vmatpush1.msra.mxu0 0.0
    %4093 = vmatprep.subr.mxu0 0.0
    %4094 = vmatpush1.msra.mxu0 0.0
    %4095 = vmatprep.subr.mxu0 0.0
    %4096 = vmatpush1.msra.mxu0 0.0
    %4097 = vmatprep.subr.mxu0 0.0
    %4098 = vmatpush1.msra.mxu0 0.0
    %4099 = vmatprep.subr.mxu0 0.0
    %4100 = vmatpush1.msra.mxu0 0.0
    %4101 = vmatprep.subr.mxu0 0.0
    %4102 = vmatpush1.msra.mxu0 0.0
    %4103 = vmatprep.subr.mxu0 0.0
    %4104 = vmatpush1.msra.mxu0 0.0
    %4105 = vmatprep.subr.mxu0 0.0
    %4106 = vmatpush1.msra.mxu0 0.0
    %4107 = vmatprep.subr.mxu0 0.0
    %4108 = vmatpush1.msra.mxu0 %v3776
    %4109 = vmatprep.subr.mxu0 0.0
    %4110 = vmatpush1.msra.mxu0 %v3775
    %4111 = vmatprep.subr.mxu0 0.0
    %4112 = vmatpush1.msra.mxu0 %v3774
    %4113 = vmatprep.subr.mxu0 0.0
    %4114 = vmatpush1.msra.mxu0 %v3773
    %4115 = vmatprep.subr.mxu0 0.0
    %4116 = vmatpush1.msra.mxu0 %v3772
    %4117 = vmatprep.subr.mxu0 0.0
    %4118 = vmatpush1.msra.mxu0 %v3771
    %4119 = vmatprep.subr.mxu0 0.0
    %4120 = vmatpush1.msra.mxu0 %v3770
    %4121 = vmatprep.subr.mxu0 0.0
    %4122 = vmatpush1.msra.mxu0 %v3769
    %4123 = vmatprep.subr.mxu0 0.0
    %4124 = vmatpush2.msra.mxu0 0.0
    %4125 = vmatprep.subr.mxu0 0.0
    %4126 = vmatpush2.msra.mxu0 0.0
    %4127 = vmatprep.subr.mxu0 0.0
    %4128 = vmatpush2.msra.mxu0 0.0
    %4129 = vmatprep.subr.mxu0 0.0
    %4130 = vmatpush2.msra.mxu0 0.0
    %4131 = vmatprep.subr.mxu0 0.0
    %4132 = vmatpush2.msra.mxu0 0.0
    %4133 = vmatprep.subr.mxu0 0.0
    %4134 = vmatpush2.msra.mxu0 0.0
    %4135 = vmatprep.subr.mxu0 0.0
    %4136 = vmatpush2.msra.mxu0 0.0
    %4137 = vmatprep.subr.mxu0 0.0
    %4138 = vmatpush2.msra.mxu0 0.0
    %4139 = vmatprep.subr.mxu0 0.0
    %4140 = vmatpush2.msra.mxu0 0.0
    %4141 = vmatprep.subr.mxu0 0.0
    %4142 = vmatpush2.msra.mxu0 0.0
    %4143 = vmatprep.subr.mxu0 0.0
    %4144 = vmatpush2.msra.mxu0 0.0
    %4145 = vmatprep.subr.mxu0 0.0
    %4146 = vmatpush2.msra.mxu0 0.0
    %4147 = vmatprep.subr.mxu0 0.0
    %4148 = vmatpush2.msra.mxu0 0.0
    %4149 = vmatprep.subr.mxu0 0.0
    %4150 = vmatpush2.msra.mxu0 0.0
    %4151 = vmatprep.subr.mxu0 0.0
    %4152 = vmatpush2.msra.mxu0 0.0
    %4153 = vmatprep.subr.mxu0 0.0
    %4154 = vmatpush2.msra.mxu0 0.0
    %4155 = vmatprep.mubr.f32.mxu0 0.0
    %4156 = vmatmul.mubr.f32.gmra.mxu0 %v4089
    %v4157 = vpop.f32.mrf.mxu0
    %v4158 = vadd.f32 0.0, %v4157
    %v4159 = vpop.f32.mrf.mxu0
    %4160 = vdwg.mxu0
    %v4161 = vadd.f32 %v4087, %v4158
    %v4162 = vrot.slane %v3939, 3
    %v4163 = vsel %vm3610, %v4162, 0
    %4165 = vmatprep.subr.mxu0 0.0
    %4166 = vmatpush1.msra.mxu0 0.0
    %4167 = vmatprep.subr.mxu0 0.0
    %4168 = vmatpush1.msra.mxu0 0.0
    %4169 = vmatprep.subr.mxu0 0.0
    %4170 = vmatpush1.msra.mxu0 0.0
    %4171 = vmatprep.subr.mxu0 0.0
    %4172 = vmatpush1.msra.mxu0 0.0
    %4173 = vmatprep.subr.mxu0 0.0
    %4174 = vmatpush1.msra.mxu0 0.0
    %4175 = vmatprep.subr.mxu0 0.0
    %4176 = vmatpush1.msra.mxu0 0.0
    %4177 = vmatprep.subr.mxu0 0.0
    %4178 = vmatpush1.msra.mxu0 0.0
    %4179 = vmatprep.subr.mxu0 0.0
    %4180 = vmatpush1.msra.mxu0 0.0
    %4181 = vmatprep.subr.mxu0 0.0
    %4182 = vmatpush1.msra.mxu0 %v3859
    %4183 = vmatprep.subr.mxu0 0.0
    %4184 = vmatpush1.msra.mxu0 %v3858
    %4185 = vmatprep.subr.mxu0 0.0
    %4186 = vmatpush1.msra.mxu0 %v3857
    %4187 = vmatprep.subr.mxu0 0.0
    %4188 = vmatpush1.msra.mxu0 %v3856
    %4189 = vmatprep.subr.mxu0 0.0
    %4190 = vmatpush1.msra.mxu0 %v3855
    %4191 = vmatprep.subr.mxu0 0.0
    %4192 = vmatpush1.msra.mxu0 %v3854
    %4193 = vmatprep.subr.mxu0 0.0
    %4194 = vmatpush1.msra.mxu0 %v3853
    %4195 = vmatprep.subr.mxu0 0.0
    %4196 = vmatpush1.msra.mxu0 %v3852
    %4197 = vmatprep.subr.mxu0 0.0
    %4198 = vmatpush2.msra.mxu0 0.0
    %4199 = vmatprep.subr.mxu0 0.0
    %4200 = vmatpush2.msra.mxu0 0.0
    %4201 = vmatprep.subr.mxu0 0.0
    %4202 = vmatpush2.msra.mxu0 0.0
    %4203 = vmatprep.subr.mxu0 0.0
    %4204 = vmatpush2.msra.mxu0 0.0
    %4205 = vmatprep.subr.mxu0 0.0
    %4206 = vmatpush2.msra.mxu0 0.0
    %4207 = vmatprep.subr.mxu0 0.0
    %4208 = vmatpush2.msra.mxu0 0.0
    %4209 = vmatprep.subr.mxu0 0.0
    %4210 = vmatpush2.msra.mxu0 0.0
    %4211 = vmatprep.subr.mxu0 0.0
    %4212 = vmatpush2.msra.mxu0 0.0
    %4213 = vmatprep.subr.mxu0 0.0
    %4214 = vmatpush2.msra.mxu0 0.0
    %4215 = vmatprep.subr.mxu0 0.0
    %4216 = vmatpush2.msra.mxu0 0.0
    %4217 = vmatprep.subr.mxu0 0.0
    %4218 = vmatpush2.msra.mxu0 0.0
    %4219 = vmatprep.subr.mxu0 0.0
    %4220 = vmatpush2.msra.mxu0 0.0
    %4221 = vmatprep.subr.mxu0 0.0
    %4222 = vmatpush2.msra.mxu0 0.0
    %4223 = vmatprep.subr.mxu0 0.0
    %4224 = vmatpush2.msra.mxu0 0.0
    %4225 = vmatprep.subr.mxu0 0.0
    %4226 = vmatpush2.msra.mxu0 0.0
    %4227 = vmatprep.subr.mxu0 0.0
    %4228 = vmatpush2.msra.mxu0 0.0
    %4229 = vmatprep.mubr.f32.mxu0 0.0
    %4230 = vmatmul.mubr.f32.gmra.mxu0 %v4163
    %v4231 = vpop.f32.mrf.mxu0
    %v4232 = vadd.f32 0.0, %v4231
    %v4233 = vpop.f32.mrf.mxu0
    %4234 = vdwg.mxu0
    %v4235 = vadd.f32 %v4161, %v4232
    %v4236 = vmax.f32 %v4235, 0.0
    %vm4237 = vcmask 1040384
    %v4238 = vsel %vm4237, %v3934, 0.0
    %4239 = vadd.xlane.f32.xlu0 %v4238
    %v4240 = vpop.xlane.xlu0 %4239
    %v4241 = vrot.slane %v4240, 4
    %v4242 = vadd.f32 %v4240, %v4241
    %v4243 = vrot.slane %v4242, 2
    %v4244 = vadd.f32 %v4242, %v4243
    %v4245 = vrot.slane %v4244, 1
    %v4246 = vadd.f32 %v4244, %v4245
    %s4247 = vtos %v4246
    %s4248 = sadd.f32 %s4247, 0.0
    %v4249 = vsel %vm4237, %v4236, 0.0
    %4250 = vadd.xlane.f32.xlu0 %v4249
    %v4251 = vpop.xlane.xlu0 %4250
    %v4252 = vrot.slane %v4251, 4
    %v4253 = vadd.f32 %v4251, %v4252
    %v4254 = vrot.slane %v4253, 2
    %v4255 = vadd.f32 %v4253, %v4254
    %v4256 = vrot.slane %v4255, 1
    %v4257 = vadd.f32 %v4255, %v4256
    %s4258 = vtos %v4257
    %s4259 = sadd.f32 %s4248, %s4258
    %v4260 = vrcp.pop 240.0
    %s4261 = vtos %v4260
    %s4262 = smul.f32 %s4259, %s4261
    %s4263 = smul.f32 %s4262, 2.0
    %v4264 = vrcp.pop 2.6457512
    %s4265 = vtos %v4264
    %s4266 = smul.f32 %s4263, %s4265
    %v4267 = vstv %s4266
    %v4268 = vrcp.pop %v4267
    %s4269 = vtos %v4268
    %v4270 = vld [vmem:[#allocation13] sm:$0xff]
    %v4271 = vld [vmem:[#allocation13 + $0x8] sm:$0xff]
    %v4272 = vld [vmem:[#allocation13 + $0x10] sm:$0xff]
    %v4273 = vld [vmem:[#allocation13 + $0x18] sm:$0xff]
    %v4274 = vld [vmem:[#allocation13 + $0x20] sm:$0xff]
    %v4275 = vld [vmem:[#allocation13 + $0x28] sm:$0xff]
    %v4276 = vld [vmem:[#allocation13 + $0x30] sm:$0xff]
    %v4277 = vld [vmem:[#allocation13 + $0x38] sm:$0xff]
    %v4278 = vld [vmem:[#allocation13 + $0x40] sm:$0xff]
    %v4279 = vld [vmem:[#allocation13 + $0x48] sm:$0xff]
    %v4280 = vld [vmem:[#allocation13 + $0x50] sm:$0xff]
    %v4281 = vld [vmem:[#allocation13 + $0x58] sm:$0xff]
    %v4282 = vld [vmem:[#allocation13 + $0x60] sm:$0xff]
    %v4283 = vld [vmem:[#allocation13 + $0x68] sm:$0xff]
    %v4284 = vld [vmem:[#allocation13 + $0x70] sm:$0xff]
    %v4285 = vld [vmem:[#allocation13 + $0x78] sm:$0xff]
    %v4286 = vld [vmem:[#allocation14] sm:$0x1]
    %v4287 = vstv %s4269
    %v4288 = vmul.f32 %v3934, %v4287
    %v4289 = vmax.f32 %v4288, -8.0
    %v4290 = vmin.f32 %v4289, 7.0
    %v4291 = vround.ne.pseudo %v4290
    %v4292 = vstv %s4266
    %v4293 = vmul.f32 %v4291, %v4292
    %4294 = vmatprep.subr.mxu0 0.0
    %4295 = vmatpush1.msra.mxu0 %v4285
    %4296 = vmatprep.subr.mxu0 0.0
    %4297 = vmatpush1.msra.mxu0 %v4284
    %4298 = vmatprep.subr.mxu0 0.0
    %4299 = vmatpush1.msra.mxu0 %v4283
    %4300 = vmatprep.subr.mxu0 0.0
    %4301 = vmatpush1.msra.mxu0 %v4282
    %4302 = vmatprep.subr.mxu0 0.0
    %4303 = vmatpush1.msra.mxu0 %v4281
    %4304 = vmatprep.subr.mxu0 0.0
    %4305 = vmatpush1.msra.mxu0 %v4280
    %4306 = vmatprep.subr.mxu0 0.0
    %4307 = vmatpush1.msra.mxu0 %v4279
    %4308 = vmatprep.subr.mxu0 0.0
    %4309 = vmatpush1.msra.mxu0 %v4278
    %4310 = vmatprep.subr.mxu0 0.0
    %4311 = vmatpush1.msra.mxu0 %v4277
    %4312 = vmatprep.subr.mxu0 0.0
    %4313 = vmatpush1.msra.mxu0 %v4276
    %4314 = vmatprep.subr.mxu0 0.0
    %4315 = vmatpush1.msra.mxu0 %v4275
    %4316 = vmatprep.subr.mxu0 0.0
    %4317 = vmatpush1.msra.mxu0 %v4274
    %4318 = vmatprep.subr.mxu0 0.0
    %4319 = vmatpush1.msra.mxu0 %v4273
    %4320 = vmatprep.subr.mxu0 0.0
    %4321 = vmatpush1.msra.mxu0 %v4272
    %4322 = vmatprep.subr.mxu0 0.0
    %4323 = vmatpush1.msra.mxu0 %v4271
    %4324 = vmatprep.subr.mxu0 0.0
    %4325 = vmatpush1.msra.mxu0 %v4270
    %4326 = vmatprep.subr.mxu0 0.0
    %4327 = vmatpush2.msra.mxu0 0.0
    %4328 = vmatprep.subr.mxu0 0.0
    %4329 = vmatpush2.msra.mxu0 0.0
    %4330 = vmatprep.subr.mxu0 0.0
    %4331 = vmatpush2.msra.mxu0 0.0
    %4332 = vmatprep.subr.mxu0 0.0
    %4333 = vmatpush2.msra.mxu0 0.0
    %4334 = vmatprep.subr.mxu0 0.0
    %4335 = vmatpush2.msra.mxu0 0.0
    %4336 = vmatprep.subr.mxu0 0.0
    %4337 = vmatpush2.msra.mxu0 0.0
    %4338 = vmatprep.subr.mxu0 0.0
    %4339 = vmatpush2.msra.mxu0 0.0
    %4340 = vmatprep.subr.mxu0 0.0
    %4341 = vmatpush2.msra.mxu0 0.0
    %4342 = vmatprep.subr.mxu0 0.0
    %4343 = vmatpush2.msra.mxu0 0.0
    %4344 = vmatprep.subr.mxu0 0.0
    %4345 = vmatpush2.msra.mxu0 0.0
    %4346 = vmatprep.subr.mxu0 0.0
    %4347 = vmatpush2.msra.mxu0 0.0
    %4348 = vmatprep.subr.mxu0 0.0
    %4349 = vmatpush2.msra.mxu0 0.0
    %4350 = vmatprep.subr.mxu0 0.0
    %4351 = vmatpush2.msra.mxu0 0.0
    %4352 = vmatprep.subr.mxu0 0.0
    %4353 = vmatpush2.msra.mxu0 0.0
    %4354 = vmatprep.subr.mxu0 0.0
    %4355 = vmatpush2.msra.mxu0 0.0
    %4356 = vmatprep.subr.mxu0 0.0
    %4357 = vmatpush2.msra.mxu0 0.0
    %4358 = vmatprep.mubr.f32.mxu0 0.0
    %4359 = vmatmul.mubr.f32.gmra.mxu0 %v4293
    %v4360 = vpop.f32.mrf.mxu0
    %v4361 = vadd.f32 %v4286, %v4360
    %v4362 = vpop.f32.mrf.mxu0
    %4363 = vdwg.mxu0
    %v4364 = vmax.f32 %v4361, 0.0
    %v4365 = vmul.f32 %v4236, %v4287
    %v4366 = vmax.f32 %v4365, -8.0
    %v4367 = vmin.f32 %v4366, 7.0
    %v4368 = vround.ne.pseudo %v4367
    %v4369 = vmul.f32 %v4368, %v4292
    %4370 = vmatprep.subr.mxu0 0.0
    %4371 = vmatpush1.msra.mxu0 %v4285
    %4372 = vmatprep.subr.mxu0 0.0
    %4373 = vmatpush1.msra.mxu0 %v4284
    %4374 = vmatprep.subr.mxu0 0.0
    %4375 = vmatpush1.msra.mxu0 %v4283
    %4376 = vmatprep.subr.mxu0 0.0
    %4377 = vmatpush1.msra.mxu0 %v4282
    %4378 = vmatprep.subr.mxu0 0.0
    %4379 = vmatpush1.msra.mxu0 %v4281
    %4380 = vmatprep.subr.mxu0 0.0
    %4381 = vmatpush1.msra.mxu0 %v4280
    %4382 = vmatprep.subr.mxu0 0.0
    %4383 = vmatpush1.msra.mxu0 %v4279
    %4384 = vmatprep.subr.mxu0 0.0
    %4385 = vmatpush1.msra.mxu0 %v4278
    %4386 = vmatprep.subr.mxu0 0.0
    %4387 = vmatpush1.msra.mxu0 %v4277
    %4388 = vmatprep.subr.mxu0 0.0
    %4389 = vmatpush1.msra.mxu0 %v4276
    %4390 = vmatprep.subr.mxu0 0.0
    %4391 = vmatpush1.msra.mxu0 %v4275
    %4392 = vmatprep.subr.mxu0 0.0
    %4393 = vmatpush1.msra.mxu0 %v4274
    %4394 = vmatprep.subr.mxu0 0.0
    %4395 = vmatpush1.msra.mxu0 %v4273
    %4396 = vmatprep.subr.mxu0 0.0
    %4397 = vmatpush1.msra.mxu0 %v4272
    %4398 = vmatprep.subr.mxu0 0.0
    %4399 = vmatpush1.msra.mxu0 %v4271
    %4400 = vmatprep.subr.mxu0 0.0
    %4401 = vmatpush1.msra.mxu0 %v4270
    %4402 = vmatprep.subr.mxu0 0.0
    %4403 = vmatpush2.msra.mxu0 0.0
    %4404 = vmatprep.subr.mxu0 0.0
    %4405 = vmatpush2.msra.mxu0 0.0
    %4406 = vmatprep.subr.mxu0 0.0
    %4407 = vmatpush2.msra.mxu0 0.0
    %4408 = vmatprep.subr.mxu0 0.0
    %4409 = vmatpush2.msra.mxu0 0.0
    %4410 = vmatprep.subr.mxu0 0.0
    %4411 = vmatpush2.msra.mxu0 0.0
    %4412 = vmatprep.subr.mxu0 0.0
    %4413 = vmatpush2.msra.mxu0 0.0
    %4414 = vmatprep.subr.mxu0 0.0
    %4415 = vmatpush2.msra.mxu0 0.0
    %4416 = vmatprep.subr.mxu0 0.0
    %4417 = vmatpush2.msra.mxu0 0.0
    %4418 = vmatprep.subr.mxu0 0.0
    %4419 = vmatpush2.msra.mxu0 0.0
    %4420 = vmatprep.subr.mxu0 0.0
    %4421 = vmatpush2.msra.mxu0 0.0
    %4422 = vmatprep.subr.mxu0 0.0
    %4423 = vmatpush2.msra.mxu0 0.0
    %4424 = vmatprep.subr.mxu0 0.0
    %4425 = vmatpush2.msra.mxu0 0.0
    %4426 = vmatprep.subr.mxu0 0.0
    %4427 = vmatpush2.msra.mxu0 0.0
    %4428 = vmatprep.subr.mxu0 0.0
    %4429 = vmatpush2.msra.mxu0 0.0
    %4430 = vmatprep.subr.mxu0 0.0
    %4431 = vmatpush2.msra.mxu0 0.0
    %4432 = vmatprep.subr.mxu0 0.0
    %4433 = vmatpush2.msra.mxu0 0.0
    %4434 = vmatprep.mubr.f32.mxu0 0.0
    %4435 = vmatmul.mubr.f32.gmra.mxu0 %v4369
    %v4436 = vpop.f32.mrf.mxu0
    %v4437 = vadd.f32 %v4286, %v4436
    %v4438 = vpop.f32.mrf.mxu0
    %4439 = vdwg.mxu0
    %v4440 = vmax.f32 %v4437, 0.0
    %v4441 = vsel %vm4237, %v4364, 0.0
    %4442 = vadd.xlane.f32.xlu0 %v4441
    %v4443 = vpop.xlane.xlu0 %4442
    %v4444 = vrot.slane %v4443, 4
    %v4445 = vadd.f32 %v4443, %v4444
    %v4446 = vrot.slane %v4445, 2
    %v4447 = vadd.f32 %v4445, %v4446
    %v4448 = vrot.slane %v4447, 1
    %v4449 = vadd.f32 %v4447, %v4448
    %s4450 = vtos %v4449
    %s4451 = sadd.f32 %s4450, 0.0
    %v4452 = vsel %vm4237, %v4440, 0.0
    %4453 = vadd.xlane.f32.xlu0 %v4452
    %v4454 = vpop.xlane.xlu0 %4453
    %v4455 = vrot.slane %v4454, 4
    %v4456 = vadd.f32 %v4454, %v4455
    %v4457 = vrot.slane %v4456, 2
    %v4458 = vadd.f32 %v4456, %v4457
    %v4459 = vrot.slane %v4458, 1
    %v4460 = vadd.f32 %v4458, %v4459
    %s4461 = vtos %v4460
    %s4462 = sadd.f32 %s4451, %s4461
    %v4463 = vrcp.pop 168.0
    %s4464 = vtos %v4463
    %s4465 = smul.f32 %s4462, %s4464
    %s4466 = smul.f32 %s4465, 2.0
    %v4467 = vrcp.pop 2.6457512
    %s4468 = vtos %v4467
    %s4469 = smul.f32 %s4466, %s4468
    %v4470 = vstv %s4469
    %v4471 = vrcp.pop %v4470
    %s4472 = vtos %v4471
    %v4473 = vld [vmem:[#allocation16] sm:$0xff]
    %v4474 = vld [vmem:[#allocation16 + $0x8] sm:$0xff]
    %v4475 = vld [vmem:[#allocation16 + $0x10] sm:$0xff]
    %v4476 = vld [vmem:[#allocation16 + $0x18] sm:$0xff]
    %v4477 = vld [vmem:[#allocation16 + $0x20] sm:$0xff]
    %v4478 = vld [vmem:[#allocation16 + $0x28] sm:$0xff]
    %v4479 = vld [vmem:[#allocation16 + $0x30] sm:$0xff]
    %v4480 = vld [vmem:[#allocation16 + $0x38] sm:$0xff]
    %v4481 = vld [vmem:[#allocation16 + $0x40] sm:$0xff]
    %v4482 = vld [vmem:[#allocation16 + $0x48] sm:$0xff]
    %v4483 = vld [vmem:[#allocation16 + $0x50] sm:$0xff]
    %v4484 = vld [vmem:[#allocation16 + $0x58] sm:$0xff]
    %v4485 = vld [vmem:[#allocation16 + $0x60] sm:$0xff]
    %v4486 = vld [vmem:[#allocation16 + $0x68] sm:$0xff]
    %v4487 = vld [vmem:[#allocation16 + $0x70] sm:$0xff]
    %v4488 = vld [vmem:[#allocation16 + $0x78] sm:$0xff]
    %v4489 = vld [vmem:[#allocation17] sm:$0x1]
    %v4490 = vstv %s4472
    %v4491 = vmul.f32 %v4364, %v4490
    %v4492 = vmax.f32 %v4491, -8.0
    %v4493 = vmin.f32 %v4492, 7.0
    %v4494 = vround.ne.pseudo %v4493
    %v4495 = vstv %s4469
    %v4496 = vmul.f32 %v4494, %v4495
    %4497 = vmatprep.subr.mxu0 0.0
    %4498 = vmatpush1.msra.mxu0 %v4488
    %4499 = vmatprep.subr.mxu0 0.0
    %4500 = vmatpush1.msra.mxu0 %v4487
    %4501 = vmatprep.subr.mxu0 0.0
    %4502 = vmatpush1.msra.mxu0 %v4486
    %4503 = vmatprep.subr.mxu0 0.0
    %4504 = vmatpush1.msra.mxu0 %v4485
    %4505 = vmatprep.subr.mxu0 0.0
    %4506 = vmatpush1.msra.mxu0 %v4484
    %4507 = vmatprep.subr.mxu0 0.0
    %4508 = vmatpush1.msra.mxu0 %v4483
    %4509 = vmatprep.subr.mxu0 0.0
    %4510 = vmatpush1.msra.mxu0 %v4482
    %4511 = vmatprep.subr.mxu0 0.0
    %4512 = vmatpush1.msra.mxu0 %v4481
    %4513 = vmatprep.subr.mxu0 0.0
    %4514 = vmatpush1.msra.mxu0 %v4480
    %4515 = vmatprep.subr.mxu0 0.0
    %4516 = vmatpush1.msra.mxu0 %v4479
    %4517 = vmatprep.subr.mxu0 0.0
    %4518 = vmatpush1.msra.mxu0 %v4478
    %4519 = vmatprep.subr.mxu0 0.0
    %4520 = vmatpush1.msra.mxu0 %v4477
    %4521 = vmatprep.subr.mxu0 0.0
    %4522 = vmatpush1.msra.mxu0 %v4476
    %4523 = vmatprep.subr.mxu0 0.0
    %4524 = vmatpush1.msra.mxu0 %v4475
    %4525 = vmatprep.subr.mxu0 0.0
    %4526 = vmatpush1.msra.mxu0 %v4474
    %4527 = vmatprep.subr.mxu0 0.0
    %4528 = vmatpush1.msra.mxu0 %v4473
    %4529 = vmatprep.subr.mxu0 0.0
    %4530 = vmatpush2.msra.mxu0 0.0
    %4531 = vmatprep.subr.mxu0 0.0
    %4532 = vmatpush2.msra.mxu0 0.0
    %4533 = vmatprep.subr.mxu0 0.0
    %4534 = vmatpush2.msra.mxu0 0.0
    %4535 = vmatprep.subr.mxu0 0.0
    %4536 = vmatpush2.msra.mxu0 0.0
    %4537 = vmatprep.subr.mxu0 0.0
    %4538 = vmatpush2.msra.mxu0 0.0
    %4539 = vmatprep.subr.mxu0 0.0
    %4540 = vmatpush2.msra.mxu0 0.0
    %4541 = vmatprep.subr.mxu0 0.0
    %4542 = vmatpush2.msra.mxu0 0.0
    %4543 = vmatprep.subr.mxu0 0.0
    %4544 = vmatpush2.msra.mxu0 0.0
    %4545 = vmatprep.subr.mxu0 0.0
    %4546 = vmatpush2.msra.mxu0 0.0
    %4547 = vmatprep.subr.mxu0 0.0
    %4548 = vmatpush2.msra.mxu0 0.0
    %4549 = vmatprep.subr.mxu0 0.0
    %4550 = vmatpush2.msra.mxu0 0.0
    %4551 = vmatprep.subr.mxu0 0.0
    %4552 = vmatpush2.msra.mxu0 0.0
    %4553 = vmatprep.subr.mxu0 0.0
    %4554 = vmatpush2.msra.mxu0 0.0
    %4555 = vmatprep.subr.mxu0 0.0
    %4556 = vmatpush2.msra.mxu0 0.0
    %4557 = vmatprep.subr.mxu0 0.0
    %4558 = vmatpush2.msra.mxu0 0.0
    %4559 = vmatprep.subr.mxu0 0.0
    %4560 = vmatpush2.msra.mxu0 0.0
    %4561 = vmatprep.mubr.f32.mxu0 0.0
    %4562 = vmatmul.mubr.f32.gmra.mxu0 %v4496
    %v4563 = vpop.f32.mrf.mxu0
    %v4564 = vadd.f32 %v4489, %v4563
    %v4565 = vpop.f32.mrf.mxu0
    %4566 = vdwg.mxu0
    %v4567 = vmax.f32 %v4564, 0.0
    %4568 = vst [vmem:[#allocation19] sm:$0x1] %v4567
    %v4569 = vmul.f32 %v4440, %v4490
    %v4570 = vmax.f32 %v4569, -8.0
    %v4571 = vmin.f32 %v4570, 7.0
    %v4572 = vround.ne.pseudo %v4571
    %v4573 = vmul.f32 %v4572, %v4495
    %4574 = vmatprep.subr.mxu0 0.0
    %4575 = vmatpush1.msra.mxu0 %v4488
    %4576 = vmatprep.subr.mxu0 0.0
    %4577 = vmatpush1.msra.mxu0 %v4487
    %4578 = vmatprep.subr.mxu0 0.0
    %4579 = vmatpush1.msra.mxu0 %v4486
    %4580 = vmatprep.subr.mxu0 0.0
    %4581 = vmatpush1.msra.mxu0 %v4485
    %4582 = vmatprep.subr.mxu0 0.0
    %4583 = vmatpush1.msra.mxu0 %v4484
    %4584 = vmatprep.subr.mxu0 0.0
    %4585 = vmatpush1.msra.mxu0 %v4483
    %4586 = vmatprep.subr.mxu0 0.0
    %4587 = vmatpush1.msra.mxu0 %v4482
    %4588 = vmatprep.subr.mxu0 0.0
    %4589 = vmatpush1.msra.mxu0 %v4481
    %4590 = vmatprep.subr.mxu0 0.0
    %4591 = vmatpush1.msra.mxu0 %v4480
    %4592 = vmatprep.subr.mxu0 0.0
    %4593 = vmatpush1.msra.mxu0 %v4479
    %4594 = vmatprep.subr.mxu0 0.0
    %4595 = vmatpush1.msra.mxu0 %v4478
    %4596 = vmatprep.subr.mxu0 0.0
    %4597 = vmatpush1.msra.mxu0 %v4477
    %4598 = vmatprep.subr.mxu0 0.0
    %4599 = vmatpush1.msra.mxu0 %v4476
    %4600 = vmatprep.subr.mxu0 0.0
    %4601 = vmatpush1.msra.mxu0 %v4475
    %4602 = vmatprep.subr.mxu0 0.0
    %4603 = vmatpush1.msra.mxu0 %v4474
    %4604 = vmatprep.subr.mxu0 0.0
    %4605 = vmatpush1.msra.mxu0 %v4473
    %4606 = vmatprep.subr.mxu0 0.0
    %4607 = vmatpush2.msra.mxu0 0.0
    %4608 = vmatprep.subr.mxu0 0.0
    %4609 = vmatpush2.msra.mxu0 0.0
    %4610 = vmatprep.subr.mxu0 0.0
    %4611 = vmatpush2.msra.mxu0 0.0
    %4612 = vmatprep.subr.mxu0 0.0
    %4613 = vmatpush2.msra.mxu0 0.0
    %4614 = vmatprep.subr.mxu0 0.0
    %4615 = vmatpush2.msra.mxu0 0.0
    %4616 = vmatprep.subr.mxu0 0.0
    %4617 = vmatpush2.msra.mxu0 0.0
    %4618 = vmatprep.subr.mxu0 0.0
    %4619 = vmatpush2.msra.mxu0 0.0
    %4620 = vmatprep.subr.mxu0 0.0
    %4621 = vmatpush2.msra.mxu0 0.0
    %4622 = vmatprep.subr.mxu0 0.0
    %4623 = vmatpush2.msra.mxu0 0.0
    %4624 = vmatprep.subr.mxu0 0.0
    %4625 = vmatpush2.msra.mxu0 0.0
    %4626 = vmatprep.subr.mxu0 0.0
    %4627 = vmatpush2.msra.mxu0 0.0
    %4628 = vmatprep.subr.mxu0 0.0
    %4629 = vmatpush2.msra.mxu0 0.0
    %4630 = vmatprep.subr.mxu0 0.0
    %4631 = vmatpush2.msra.mxu0 0.0
    %4632 = vmatprep.subr.mxu0 0.0
    %4633 = vmatpush2.msra.mxu0 0.0
    %4634 = vmatprep.subr.mxu0 0.0
    %4635 = vmatpush2.msra.mxu0 0.0
    %4636 = vmatprep.subr.mxu0 0.0
    %4637 = vmatpush2.msra.mxu0 0.0
    %4638 = vmatprep.mubr.f32.mxu0 0.0
    %4639 = vmatmul.mubr.f32.gmra.mxu0 %v4573
    %v4640 = vpop.f32.mrf.mxu0
    %v4641 = vadd.f32 %v4489, %v4640
    %v4642 = vpop.f32.mrf.mxu0
    %4643 = vdwg.mxu0
    %v4644 = vmax.f32 %v4641, 0.0
    %4645 = vst [vmem:[#allocation19 + $0x1] sm:$0x1] %v4644
    // Predicated region
    $region110: #{model_forward.1} parent=1 // pred_check
      _
    $region111: #{model_forward.1} parent=1 // pred_check_branch
      %4647 = sbr.rel (0) target = $region113
    $region112: #{model_forward.1} parent=1 // pred_region
      %s4649 = ssub.s32 32, 32
      %4650 = vsyncadd [#allocation4], %s4649
      %s4652 = sshll.u32 [#allocation19], 4
      %s4653 = int_to_ptr.vmem [resolvable:$true] %s4652
      %4655 = dma.vmem_to_hbm [thread:$0]  %s4653, 32, %s17, [#allocation4]
    $region113: #{model_forward.1} parent=1 // pred_fallthru
      _
    // Predicated region
    $region114: #{model_forward.1} parent=1 // pred_check
      _
    $region115: #{model_forward.1} parent=1 // pred_check_branch
      %4657 = sbr.rel (0) target = $region117
    $region116: #{model_forward.1} parent=1 // pred_region
      %4658 = dma.done [#allocation4], 32
    $region117: #{model_forward.1} parent=1 // pred_fallthru
      _
    %4659 = vsyncpa [#allocation3], 1
    %4660 = vsyncpa [#allocation6], 1
    %4661 = vsyncpa [#allocation9], 1
    %4662 = vsyncpa [#allocation12], 1
    %4663 = vsyncpa [#allocation15], 1
    %4664 = vsyncpa [#allocation18], 1
    %4665 = vsyncpa [#allocation4], 1

</llo_original>
